<compile_context>
chip_gen: v7x
topology: tpu7x:2x2x1
jax: 0.10.0
libtpu: 0.0.40
codegen_flags: <defaults>
</compile_context>

<pallas_src>
import numpy as np
import jax
import jax.numpy as jnp
from jax.experimental import pallas as pl
from jax.experimental.pallas import tpu as pltpu

INPUT_DIM = 8
HIDDEN_DIM = 16
OUTPUT_DIM = 2
NUM_LAYERS = 2
MAX_RECURSION = 10
TAU_THRESHOLD = 0.005

LANES = 128
_HIGHEST = jax.lax.Precision.HIGHEST


def _ru8(n):
    return ((n + 7) // 8) * 8


# ---- static row offsets inside the packed weight slab ----------------------
R_WIN = 0                                       # w_in^T                [D_in, H]
R_W1 = _ru8(INPUT_DIM)                          # per-layer fused block [2H, 4H]
R_W2 = R_W1 + NUM_LAYERS * 2 * HIDDEN_DIM       # [W_hh^T | w_tau^T]    [H, 3H+1]
R_WOUT = R_W2 + HIDDEN_DIM                      # w_out^T zero-padded   [H, 128]
R_BIAS = R_WOUT + HIDDEN_DIM                    # bias rows start here
W_ROWS = _ru8(R_BIAS + 3 + NUM_LAYERS)


def _dot(a, b):
    # f32 operands; HIGHEST precision so the pure-JAX reference (also HIGHEST)
    # agrees to ~1e-6 and tight tolerances can be used.
    return jnp.dot(a, b, preferred_element_type=jnp.float32, precision=_HIGHEST)


def pack_weights(params):
    """Pack all weights/biases into one [W_ROWS, 128] f32 slab."""
    H = HIDDEN_DIM
    W = np.zeros((W_ROWS, LANES), np.float32)

    # input projection
    W[R_WIN:R_WIN + INPUT_DIM, 0:H] = np.asarray(params['w_in']).T

    # per-layer fused [h | diff_agg] block:
    #   [[W_l_h, 0], [W_l_d, W_ih^T]]  -> lanes 0:H diff-layer, lanes H:4H GRU gi
    w_ih_t = np.asarray(params['w_ih']).T                     # [H, 3H]
    for l in range(NUM_LAYERS):
        w_l_t = np.asarray(params['w_diff'][l]).T             # [2H, H]
        r0 = R_W1 + l * 2 * H
        W[r0:r0 + H, 0:H] = w_l_t[0:H]
        W[r0 + H:r0 + 2 * H, 0:H] = w_l_t[H:2 * H]
        W[r0 + H:r0 + 2 * H, H:4 * H] = w_ih_t

    # fused [W_hh^T | w_tau^T]
    W[R_W2:R_W2 + H, 0:3 * H] = np.asarray(params['w_hh']).T
    W[R_W2:R_W2 + H, 3 * H:3 * H + 1] = np.asarray(params['w_tau']).T

    # output projection, zero-padded to full 128 lanes (lane-dense store later)
    W[R_WOUT:R_WOUT + H, 0:OUTPUT_DIM] = np.asarray(params['w_out']).T

    # biases
    W[R_BIAS, 0:H] = np.asarray(params['b_in'])
    for l in range(NUM_LAYERS):
        W[R_BIAS + 1 + l, 0:H] = np.asarray(params['b_diff'][l])
        W[R_BIAS + 1 + l, H:4 * H] = np.asarray(params['b_ih'])
    W[R_BIAS + 1 + NUM_LAYERS, 0:3 * H] = np.asarray(params['b_hh'])
    W[R_BIAS + 1 + NUM_LAYERS, 3 * H:3 * H + 1] = np.asarray(params['b_tau'])
    W[R_BIAS + 2 + NUM_LAYERS, 0:OUTPUT_DIM] = np.asarray(params['b_out'])
    return jnp.asarray(W)


def utd_graph_net_noise(x, edge_index, params):
    N, D_in = x.shape
    E = edge_index.shape[1]
    H = HIDDEN_DIM

    # ---- pack graph data into one [rows, 128] slab --------------------------
    row, col = edge_index[0], edge_index[1]
    a_row = jax.nn.one_hot(row, N, dtype=jnp.float32)          # [E, N]
    a_col = jax.nn.one_hot(col, N, dtype=jnp.float32)          # [E, N]
    r_x = 0
    r_a = _ru8(N)                                              # [A_row; A_col]
    r_at = r_a + _ru8(2 * E)                                   # A_row^T
    d_rows = _ru8(r_at + N)
    data = jnp.zeros((d_rows, LANES), jnp.float32)
    data = data.at[r_x:r_x + N, 0:D_in].set(x)
    data = data.at[r_a:r_a + E, 0:N].set(a_row)
    data = data.at[r_a + E:r_a + 2 * E, 0:N].set(a_col)
    data = data.at[r_at:r_at + N, 0:E].set(a_row.T)

    weights = pack_weights(params)

    def kernel(data_ref, w_ref, out_ref):
        # ---- carve the slabs with static slices (zero runtime cost) --------
        xk = data_ref[r_x:r_x + N, 0:D_in]                     # [N, D_in]
        a_stack = data_ref[r_a:r_a + 2 * E, 0:N]               # [2E, N]
        a_row_t = data_ref[r_at:r_at + N, 0:E]                 # [N, E]

        w_in = w_ref[R_WIN:R_WIN + D_in, 0:H]
        b_in = w_ref[R_BIAS:R_BIAS + 1, 0:H]
        w2 = w_ref[R_W2:R_W2 + H, 0:3 * H + 1]
        b2 = w_ref[R_BIAS + 1 + NUM_LAYERS:R_BIAS + 2 + NUM_LAYERS, 0:3 * H + 1]

        # h = relu(input_proj(x))
        h = jnp.maximum(_dot(xk, w_in) + b_in, 0.0)            # [N, H]

        tau = jnp.zeros((N, 1), jnp.float32)
        for l in range(NUM_LAYERS):
            # gather both edge endpoints in ONE matmul: [A_row; A_col] @ h
            hh = _dot(a_stack, h)                              # [2E, H]
            diff = jnp.abs(hh[0:E, :] - hh[E:2 * E, :])        # [E, H]
            # scatter-add over destination rows == A_row^T @ diff
            diff_agg = _dot(a_row_t, diff)                     # [N, H]

            # fused: [h | diff_agg] @ [[W_l_h, 0],[W_l_d, W_ih^T]] + [b_l | b_ih]
            r0 = R_W1 + l * 2 * H
            w1 = w_ref[r0:r0 + 2 * H, 0:4 * H]                 # [2H, 4H]
            b1 = w_ref[R_BIAS + 1 + l:R_BIAS + 2 + l, 0:4 * H]
            fused = _dot(jnp.concatenate([h, diff_agg], axis=1), w1) + b1
            h = jnp.maximum(fused[:, 0:H], 0.0)                # new h
            gi = fused[:, H:4 * H]                             # GRU input gates

            # fused: h @ [W_hh^T | w_tau^T] + [b_hh | b_tau]
            gt = _dot(h, w2) + b2                              # [N, 3H+1]
            gh = gt[:, 0:3 * H]
            tau = jax.nn.softplus(gt[:, 3 * H:3 * H + 1])      # [N, 1]

            # GRUCell (PyTorch gate order r, z, n)
            r = jax.nn.sigmoid(gi[:, 0:H] + gh[:, 0:H])
            z = jax.nn.sigmoid(gi[:, H:2 * H] + gh[:, H:2 * H])
            n = jnp.tanh(gi[:, 2 * H:3 * H] + r * gh[:, 2 * H:3 * H])
            h_gru = (1.0 - z) * n + z * h

            # softplus(.) > 0  =>  tau < 0.005 already implies floor(1/tau) > 0,
            # and each repeated gru(diff_agg[i], h[i]) in the reference reads the
            # unmodified h[i]  =>  one masked application is exact.
            h = jnp.where(tau < TAU_THRESHOLD, h_gru, h)

        # lane-dense [N, 128] output: lanes 0:OUTPUT_DIM = out, lane OUTPUT_DIM = tau
        w_out = w_ref[R_WOUT:R_WOUT + H, :]                    # [H, 128] (padded)
        b_out = w_ref[R_BIAS + 2 + NUM_LAYERS:R_BIAS + 3 + NUM_LAYERS, :]
        res = _dot(h, w_out) + b_out                           # [N, 128]
        lane = jax.lax.broadcasted_iota(jnp.int32, (1, LANES), 1)
        out_ref[...] = res + jnp.where(lane == OUTPUT_DIM, tau, 0.0)

    vmem = pl.BlockSpec(memory_space=pltpu.MemorySpace.VMEM)
    res = pl.pallas_call(
        kernel,
        out_shape=jax.ShapeDtypeStruct((N, LANES), jnp.float32),
        in_specs=[vmem, vmem],
        out_specs=vmem,
    )(data, weights)
    # out in lanes 0:OUTPUT_DIM, tau (already squeezed) in lane OUTPUT_DIM
    return res[:, 0:OUTPUT_DIM], res[:, OUTPUT_DIM]


def init_params(key):
    ks = jax.random.split(key, 12)

    def lin(k, fan_in, fan_out):
        kw, kb = jax.random.split(k)
        bound = 1.0 / float(np.sqrt(fan_in))
        w = jax.random.uniform(kw, (fan_out, fan_in), jnp.float32, -bound, bound)
        b = jax.random.uniform(kb, (fan_out,), jnp.float32, -bound, bound)
        return w, b

    p = {}
    p['w_in'], p['b_in'] = lin(ks[0], INPUT_DIM, HIDDEN_DIM)
    diff_w, diff_b = [], []
    for l in range(NUM_LAYERS):
        w, b = lin(ks[1 + l], 2 * HIDDEN_DIM, HIDDEN_DIM)
        diff_w.append(w)
        diff_b.append(b)
    p['w_diff'] = jnp.stack(diff_w)                 # [L, H, 2H]
    p['b_diff'] = jnp.stack(diff_b)                 # [L, H]
    p['w_tau'], p['b_tau'] = lin(ks[5], HIDDEN_DIM, 1)
    bound = 1.0 / float(np.sqrt(HIDDEN_DIM))
    p['w_ih'] = jax.random.uniform(ks[6], (3 * HIDDEN_DIM, HIDDEN_DIM), jnp.float32, -bound, bound)
    p['w_hh'] = jax.random.uniform(ks[7], (3 * HIDDEN_DIM, HIDDEN_DIM), jnp.float32, -bound, bound)
    p['b_ih'] = jax.random.uniform(ks[8], (3 * HIDDEN_DIM,), jnp.float32, -bound, bound)
    p['b_hh'] = jax.random.uniform(ks[9], (3 * HIDDEN_DIM,), jnp.float32, -bound, bound)
    p['w_out'], p['b_out'] = lin(ks[10], HIDDEN_DIM, OUTPUT_DIM)
    return p


def reference(x, edge_index, params):
    """Pure-JAX reference mirroring the PyTorch forward (HIGHEST matmul precision)."""
    row, col = edge_index[0], edge_index[1]
    H = HIDDEN_DIM
    rdot = lambda a, b: jnp.dot(a, b, precision=_HIGHEST)
    h = jax.nn.relu(rdot(x, params['w_in'].T) + params['b_in'])
    tau = None
    for l in range(NUM_LAYERS):
        diff = jnp.abs(h[row] - h[col])
        diff_agg = jnp.zeros_like(h).at[row].add(diff)
        hcat = jnp.concatenate([h, diff_agg], axis=-1)
        h = jax.nn.relu(rdot(hcat, params['w_diff'][l].T) + params['b_diff'][l])
        tau = jax.nn.softplus(rdot(h, params['w_tau'].T) + params['b_tau'])[:, 0]
        gi = rdot(diff_agg, params['w_ih'].T) + params['b_ih']
        gh = rdot(h, params['w_hh'].T) + params['b_hh']
        r = jax.nn.sigmoid(gi[:, :H] + gh[:, :H])
        z = jax.nn.sigmoid(gi[:, H:2 * H] + gh[:, H:2 * H])
        n = jnp.tanh(gi[:, 2 * H:] + r * gh[:, 2 * H:])
        h_gru = (1.0 - z) * n + z * h
        # full PyTorch condition (kept here to numerically validate that the
        # kernel's simplified mask + single masked GRU application is exact)
        n_up = jnp.minimum(jnp.floor(1.0 / tau), float(MAX_RECURSION))
        mask = ((n_up > 0.0) & (tau < TAU_THRESHOLD))[:, None]
        h = jnp.where(mask, h_gru, h)
    out = rdot(h, params['w_out'].T) + params['b_out']
    return out, tau


if __name__ == "__main__":
    key = jax.random.PRNGKey(0)
    k_param, k_x, k_row, k_col = jax.random.split(key, 4)

    N, E = 8, 16                                # nodes, edges
    params = init_params(k_param)
    # Bias the tau head negative so several nodes fall below TAU_THRESHOLD and
    # the masked GRU-update path is actually exercised by the check.
    params['b_tau'] = jnp.array([-6.0], jnp.float32)

    x = jax.random.normal(k_x, (N, INPUT_DIM), jnp.float32)
    row = jax.random.randint(k_row, (E,), 0, N)
    col = jax.random.randint(k_col, (E,), 0, N)
    edge_index = jnp.stack([row, col])          # [2, E]

    out, tau = utd_graph_net_noise(x, edge_index, params)
    jax.block_until_ready((out, tau))

    ref_out, ref_tau = reference(x, edge_index, params)
    assert out.shape == (N, OUTPUT_DIM) and tau.shape == (N,)
    # Tight f32 tolerance: kernel and reference both run HIGHEST-precision matmuls.
    assert np.allclose(np.asarray(out), np.asarray(ref_out), rtol=1e-4, atol=1e-5)
    assert np.allclose(np.asarray(tau), np.asarray(ref_tau), rtol=1e-4, atol=1e-5)
    print("KERNEL_OK")
</pallas_src>

<mosaic_0001>
module attributes {stable_mosaic.version = 11 : i64} {
  func.func @kernel(%arg0: memref<48x128xf32, #tpu.memory_space<vmem>>, %arg1: memref<112x128xf32, #tpu.memory_space<vmem>>, %arg2: memref<8x128xf32, #tpu.memory_space<vmem>>) attributes {dimension_semantics = [], scalar_prefetch = 0 : i64, scratch_operands = 0 : i64, tpu.core_type = #tpu.core_type<tc>} {
    %c0 = arith.constant 0 : index
    %c0_0 = arith.constant 0 : index
    %0 = vector.load %arg0[%c0, %c0_0] : memref<48x128xf32, #tpu.memory_space<vmem>>, vector<8x8xf32>
    %c8 = arith.constant 8 : index
    %c0_1 = arith.constant 0 : index
    %1 = vector.load %arg0[%c8, %c0_1] : memref<48x128xf32, #tpu.memory_space<vmem>>, vector<32x8xf32>
    %c40 = arith.constant 40 : index
    %c0_2 = arith.constant 0 : index
    %2 = vector.load %arg0[%c40, %c0_2] : memref<48x128xf32, #tpu.memory_space<vmem>>, vector<8x16xf32>
    %c0_3 = arith.constant 0 : index
    %c0_4 = arith.constant 0 : index
    %3 = vector.load %arg1[%c0_3, %c0_4] : memref<112x128xf32, #tpu.memory_space<vmem>>, vector<8x16xf32>
    %c104 = arith.constant 104 : index
    %c0_5 = arith.constant 0 : index
    %4 = vector.load %arg1[%c104, %c0_5] : memref<112x128xf32, #tpu.memory_space<vmem>>, vector<1x16xf32>
    %c72 = arith.constant 72 : index
    %c0_6 = arith.constant 0 : index
    %5 = vector.load %arg1[%c72, %c0_6] : memref<112x128xf32, #tpu.memory_space<vmem>>, vector<16x49xf32>
    %c107 = arith.constant 107 : index
    %c0_7 = arith.constant 0 : index
    %6 = vector.load %arg1[%c107, %c0_7] : memref<112x128xf32, #tpu.memory_space<vmem>>, vector<1x49xf32>
    %cst = arith.constant dense<0.000000e+00> : vector<8x16xf32>
    %7 = tpu.matmul %0, %3, %cst {dimension_numbers = #tpu.dot_dimension_numbers<[1], [0], [0], [1], [0, 0, 1, 1], [], []>, precision = #tpu.contract_precision<fp32>} : vector<8x8xf32>, vector<8x16xf32>, vector<8x16xf32> -> vector<8x16xf32>
    %8 = vector.broadcast %4 : vector<1x16xf32> to vector<8x16xf32>
    %9 = arith.addf %7, %8 : vector<8x16xf32>
    %cst_8 = arith.constant 0.000000e+00 : f32
    %10 = vector.broadcast %cst_8 : f32 to vector<8x16xf32>
    %11 = arith.maximumf %9, %10 : vector<8x16xf32>
    %cst_9 = arith.constant dense<0.000000e+00> : vector<32x16xf32>
    %12 = tpu.matmul %1, %11, %cst_9 {dimension_numbers = #tpu.dot_dimension_numbers<[1], [0], [0], [1], [0, 0, 1, 1], [], []>, precision = #tpu.contract_precision<fp32>} : vector<32x8xf32>, vector<8x16xf32>, vector<32x16xf32> -> vector<32x16xf32>
    %13 = vector.extract_strided_slice %12 {offsets = [0, 0], sizes = [16, 16], strides = [1, 1]} : vector<32x16xf32> to vector<16x16xf32>
    %14 = vector.extract_strided_slice %12 {offsets = [16, 0], sizes = [16, 16], strides = [1, 1]} : vector<32x16xf32> to vector<16x16xf32>
    %15 = arith.subf %13, %14 : vector<16x16xf32>
    %16 = math.absf %15 : vector<16x16xf32>
    %cst_10 = arith.constant dense<0.000000e+00> : vector<8x16xf32>
    %17 = tpu.matmul %2, %16, %cst_10 {dimension_numbers = #tpu.dot_dimension_numbers<[1], [0], [0], [1], [0, 0, 1, 1], [], []>, precision = #tpu.contract_precision<fp32>} : vector<8x16xf32>, vector<16x16xf32>, vector<8x16xf32> -> vector<8x16xf32>
    %c8_11 = arith.constant 8 : index
    %c0_12 = arith.constant 0 : index
    %18 = vector.load %arg1[%c8_11, %c0_12] : memref<112x128xf32, #tpu.memory_space<vmem>>, vector<32x64xf32>
    %c105 = arith.constant 105 : index
    %c0_13 = arith.constant 0 : index
    %19 = vector.load %arg1[%c105, %c0_13] : memref<112x128xf32, #tpu.memory_space<vmem>>, vector<1x64xf32>
    %20 = tpu.concatenate %11, %17 in 1 : vector<8x16xf32>, vector<8x16xf32> -> vector<8x32xf32>
    %cst_14 = arith.constant dense<0.000000e+00> : vector<8x64xf32>
    %21 = tpu.matmul %20, %18, %cst_14 {dimension_numbers = #tpu.dot_dimension_numbers<[1], [0], [0], [1], [0, 0, 1, 1], [], []>, precision = #tpu.contract_precision<fp32>} : vector<8x32xf32>, vector<32x64xf32>, vector<8x64xf32> -> vector<8x64xf32>
    %22 = vector.broadcast %19 : vector<1x64xf32> to vector<8x64xf32>
    %23 = arith.addf %21, %22 : vector<8x64xf32>
    %24 = vector.extract_strided_slice %23 {offsets = [0, 0], sizes = [8, 16], strides = [1, 1]} : vector<8x64xf32> to vector<8x16xf32>
    %cst_15 = arith.constant 0.000000e+00 : f32
    %25 = vector.broadcast %cst_15 : f32 to vector<8x16xf32>
    %26 = arith.maximumf %24, %25 : vector<8x16xf32>
    %27 = vector.extract_strided_slice %23 {offsets = [0, 16], sizes = [8, 48], strides = [1, 1]} : vector<8x64xf32> to vector<8x48xf32>
    %cst_16 = arith.constant dense<0.000000e+00> : vector<8x49xf32>
    %28 = tpu.matmul %26, %5, %cst_16 {dimension_numbers = #tpu.dot_dimension_numbers<[1], [0], [0], [1], [0, 0, 1, 1], [], []>, precision = #tpu.contract_precision<fp32>} : vector<8x16xf32>, vector<16x49xf32>, vector<8x49xf32> -> vector<8x49xf32>
    %29 = vector.broadcast %6 : vector<1x49xf32> to vector<8x49xf32>
    %30 = arith.addf %28, %29 : vector<8x49xf32>
    %31 = vector.extract_strided_slice %30 {offsets = [0, 0], sizes = [8, 48], strides = [1, 1]} : vector<8x49xf32> to vector<8x48xf32>
    %32 = vector.extract_strided_slice %30 {offsets = [0, 48], sizes = [8, 1], strides = [1, 1]} : vector<8x49xf32> to vector<8x1xf32>
    %cst_17 = arith.constant 0.000000e+00 : f32
    %33 = vector.broadcast %cst_17 : f32 to vector<8x1xf32>
    %34 = arith.maximumf %32, %33 : vector<8x1xf32>
    %35 = vector.broadcast %cst_17 : f32 to vector<8x1xf32>
    %36 = arith.subf %32, %35 : vector<8x1xf32>
    %37 = arith.cmpf one, %36, %36 : vector<8x1xf32>
    %38 = vector.broadcast %cst_17 : f32 to vector<8x1xf32>
    %39 = arith.addf %32, %38 : vector<8x1xf32>
    %40 = math.absf %36 : vector<8x1xf32>
    %cst_18 = arith.constant 0.000000e+00 : f32
    %41 = vector.broadcast %cst_18 : f32 to vector<8x1xf32>
    %42 = arith.subf %41, %40 : vector<8x1xf32>
    %43 = math.exp %42 : vector<8x1xf32>
    %44 = math.log1p %43 : vector<8x1xf32>
    %45 = arith.addf %34, %44 : vector<8x1xf32>
    %46 = arith.select %37, %39, %45 : vector<8x1xi1>, vector<8x1xf32>
    %47 = vector.extract_strided_slice %27 {offsets = [0, 0], sizes = [8, 16], strides = [1, 1]} : vector<8x48xf32> to vector<8x16xf32>
    %48 = vector.extract_strided_slice %31 {offsets = [0, 0], sizes = [8, 16], strides = [1, 1]} : vector<8x48xf32> to vector<8x16xf32>
    %49 = arith.addf %47, %48 : vector<8x16xf32>
    %50 = arith.negf %49 : vector<8x16xf32>
    %51 = math.exp %50 : vector<8x16xf32>
    %cst_19 = arith.constant 1.000000e+00 : f32
    %52 = vector.broadcast %cst_19 : f32 to vector<8x16xf32>
    %53 = arith.addf %52, %51 : vector<8x16xf32>
    %54 = arith.divf %52, %53 : vector<8x16xf32>
    %55 = vector.extract_strided_slice %27 {offsets = [0, 16], sizes = [8, 16], strides = [1, 1]} : vector<8x48xf32> to vector<8x16xf32>
    %56 = vector.extract_strided_slice %31 {offsets = [0, 16], sizes = [8, 16], strides = [1, 1]} : vector<8x48xf32> to vector<8x16xf32>
    %57 = arith.addf %55, %56 : vector<8x16xf32>
    %58 = arith.negf %57 : vector<8x16xf32>
    %59 = math.exp %58 : vector<8x16xf32>
    %cst_20 = arith.constant 1.000000e+00 : f32
    %60 = vector.broadcast %cst_20 : f32 to vector<8x16xf32>
    %61 = arith.addf %60, %59 : vector<8x16xf32>
    %62 = arith.divf %60, %61 : vector<8x16xf32>
    %63 = vector.extract_strided_slice %27 {offsets = [0, 32], sizes = [8, 16], strides = [1, 1]} : vector<8x48xf32> to vector<8x16xf32>
    %64 = vector.extract_strided_slice %31 {offsets = [0, 32], sizes = [8, 16], strides = [1, 1]} : vector<8x48xf32> to vector<8x16xf32>
    %65 = arith.mulf %54, %64 : vector<8x16xf32>
    %66 = arith.addf %63, %65 : vector<8x16xf32>
    %67 = math.tanh %66 : vector<8x16xf32>
    %cst_21 = arith.constant 1.000000e+00 : f32
    %68 = vector.broadcast %cst_21 : f32 to vector<8x16xf32>
    %69 = arith.subf %68, %62 : vector<8x16xf32>
    %70 = arith.mulf %69, %67 : vector<8x16xf32>
    %71 = arith.mulf %62, %26 : vector<8x16xf32>
    %72 = arith.addf %70, %71 : vector<8x16xf32>
    %cst_22 = arith.constant 5.000000e-03 : f32
    %73 = vector.broadcast %cst_22 : f32 to vector<8x1xf32>
    %74 = arith.cmpf olt, %46, %73 : vector<8x1xf32>
    %75 = vector.shape_cast %74 : vector<8x1xi1> to vector<8x1xi1>
    %76 = vector.broadcast %75 : vector<8x1xi1> to vector<8x16xi1>
    %77 = arith.select %76, %72, %26 : vector<8x16xi1>, vector<8x16xf32>
    %cst_23 = arith.constant dense<0.000000e+00> : vector<32x16xf32>
    %78 = tpu.matmul %1, %77, %cst_23 {dimension_numbers = #tpu.dot_dimension_numbers<[1], [0], [0], [1], [0, 0, 1, 1], [], []>, precision = #tpu.contract_precision<fp32>} : vector<32x8xf32>, vector<8x16xf32>, vector<32x16xf32> -> vector<32x16xf32>
    %79 = vector.extract_strided_slice %78 {offsets = [0, 0], sizes = [16, 16], strides = [1, 1]} : vector<32x16xf32> to vector<16x16xf32>
    %80 = vector.extract_strided_slice %78 {offsets = [16, 0], sizes = [16, 16], strides = [1, 1]} : vector<32x16xf32> to vector<16x16xf32>
    %81 = arith.subf %79, %80 : vector<16x16xf32>
    %82 = math.absf %81 : vector<16x16xf32>
    %cst_24 = arith.constant dense<0.000000e+00> : vector<8x16xf32>
    %83 = tpu.matmul %2, %82, %cst_24 {dimension_numbers = #tpu.dot_dimension_numbers<[1], [0], [0], [1], [0, 0, 1, 1], [], []>, precision = #tpu.contract_precision<fp32>} : vector<8x16xf32>, vector<16x16xf32>, vector<8x16xf32> -> vector<8x16xf32>
    %c40_25 = arith.constant 40 : index
    %c0_26 = arith.constant 0 : index
    %84 = vector.load %arg1[%c40_25, %c0_26] : memref<112x128xf32, #tpu.memory_space<vmem>>, vector<32x64xf32>
    %c106 = arith.constant 106 : index
    %c0_27 = arith.constant 0 : index
    %85 = vector.load %arg1[%c106, %c0_27] : memref<112x128xf32, #tpu.memory_space<vmem>>, vector<1x64xf32>
    %86 = tpu.concatenate %77, %83 in 1 : vector<8x16xf32>, vector<8x16xf32> -> vector<8x32xf32>
    %cst_28 = arith.constant dense<0.000000e+00> : vector<8x64xf32>
    %87 = tpu.matmul %86, %84, %cst_28 {dimension_numbers = #tpu.dot_dimension_numbers<[1], [0], [0], [1], [0, 0, 1, 1], [], []>, precision = #tpu.contract_precision<fp32>} : vector<8x32xf32>, vector<32x64xf32>, vector<8x64xf32> -> vector<8x64xf32>
    %88 = vector.broadcast %85 : vector<1x64xf32> to vector<8x64xf32>
    %89 = arith.addf %87, %88 : vector<8x64xf32>
    %90 = vector.extract_strided_slice %89 {offsets = [0, 0], sizes = [8, 16], strides = [1, 1]} : vector<8x64xf32> to vector<8x16xf32>
    %cst_29 = arith.constant 0.000000e+00 : f32
    %91 = vector.broadcast %cst_29 : f32 to vector<8x16xf32>
    %92 = arith.maximumf %90, %91 : vector<8x16xf32>
    %93 = vector.extract_strided_slice %89 {offsets = [0, 16], sizes = [8, 48], strides = [1, 1]} : vector<8x64xf32> to vector<8x48xf32>
    %cst_30 = arith.constant dense<0.000000e+00> : vector<8x49xf32>
    %94 = tpu.matmul %92, %5, %cst_30 {dimension_numbers = #tpu.dot_dimension_numbers<[1], [0], [0], [1], [0, 0, 1, 1], [], []>, precision = #tpu.contract_precision<fp32>} : vector<8x16xf32>, vector<16x49xf32>, vector<8x49xf32> -> vector<8x49xf32>
    %95 = vector.broadcast %6 : vector<1x49xf32> to vector<8x49xf32>
    %96 = arith.addf %94, %95 : vector<8x49xf32>
    %97 = vector.extract_strided_slice %96 {offsets = [0, 0], sizes = [8, 48], strides = [1, 1]} : vector<8x49xf32> to vector<8x48xf32>
    %98 = vector.extract_strided_slice %96 {offsets = [0, 48], sizes = [8, 1], strides = [1, 1]} : vector<8x49xf32> to vector<8x1xf32>
    %cst_31 = arith.constant 0.000000e+00 : f32
    %99 = vector.broadcast %cst_31 : f32 to vector<8x1xf32>
    %100 = arith.maximumf %98, %99 : vector<8x1xf32>
    %101 = vector.broadcast %cst_31 : f32 to vector<8x1xf32>
    %102 = arith.subf %98, %101 : vector<8x1xf32>
    %103 = arith.cmpf one, %102, %102 : vector<8x1xf32>
    %104 = vector.broadcast %cst_31 : f32 to vector<8x1xf32>
    %105 = arith.addf %98, %104 : vector<8x1xf32>
    %106 = math.absf %102 : vector<8x1xf32>
    %cst_32 = arith.constant 0.000000e+00 : f32
    %107 = vector.broadcast %cst_32 : f32 to vector<8x1xf32>
    %108 = arith.subf %107, %106 : vector<8x1xf32>
    %109 = math.exp %108 : vector<8x1xf32>
    %110 = math.log1p %109 : vector<8x1xf32>
    %111 = arith.addf %100, %110 : vector<8x1xf32>
    %112 = arith.select %103, %105, %111 : vector<8x1xi1>, vector<8x1xf32>
    %113 = vector.extract_strided_slice %93 {offsets = [0, 0], sizes = [8, 16], strides = [1, 1]} : vector<8x48xf32> to vector<8x16xf32>
    %114 = vector.extract_strided_slice %97 {offsets = [0, 0], sizes = [8, 16], strides = [1, 1]} : vector<8x48xf32> to vector<8x16xf32>
    %115 = arith.addf %113, %114 : vector<8x16xf32>
    %116 = arith.negf %115 : vector<8x16xf32>
    %117 = math.exp %116 : vector<8x16xf32>
    %cst_33 = arith.constant 1.000000e+00 : f32
    %118 = vector.broadcast %cst_33 : f32 to vector<8x16xf32>
    %119 = arith.addf %118, %117 : vector<8x16xf32>
    %120 = arith.divf %118, %119 : vector<8x16xf32>
    %121 = vector.extract_strided_slice %93 {offsets = [0, 16], sizes = [8, 16], strides = [1, 1]} : vector<8x48xf32> to vector<8x16xf32>
    %122 = vector.extract_strided_slice %97 {offsets = [0, 16], sizes = [8, 16], strides = [1, 1]} : vector<8x48xf32> to vector<8x16xf32>
    %123 = arith.addf %121, %122 : vector<8x16xf32>
    %124 = arith.negf %123 : vector<8x16xf32>
    %125 = math.exp %124 : vector<8x16xf32>
    %cst_34 = arith.constant 1.000000e+00 : f32
    %126 = vector.broadcast %cst_34 : f32 to vector<8x16xf32>
    %127 = arith.addf %126, %125 : vector<8x16xf32>
    %128 = arith.divf %126, %127 : vector<8x16xf32>
    %129 = vector.extract_strided_slice %93 {offsets = [0, 32], sizes = [8, 16], strides = [1, 1]} : vector<8x48xf32> to vector<8x16xf32>
    %130 = vector.extract_strided_slice %97 {offsets = [0, 32], sizes = [8, 16], strides = [1, 1]} : vector<8x48xf32> to vector<8x16xf32>
    %131 = arith.mulf %120, %130 : vector<8x16xf32>
    %132 = arith.addf %129, %131 : vector<8x16xf32>
    %133 = math.tanh %132 : vector<8x16xf32>
    %cst_35 = arith.constant 1.000000e+00 : f32
    %134 = vector.broadcast %cst_35 : f32 to vector<8x16xf32>
    %135 = arith.subf %134, %128 : vector<8x16xf32>
    %136 = arith.mulf %135, %133 : vector<8x16xf32>
    %137 = arith.mulf %128, %92 : vector<8x16xf32>
    %138 = arith.addf %136, %137 : vector<8x16xf32>
    %cst_36 = arith.constant 5.000000e-03 : f32
    %139 = vector.broadcast %cst_36 : f32 to vector<8x1xf32>
    %140 = arith.cmpf olt, %112, %139 : vector<8x1xf32>
    %141 = vector.shape_cast %140 : vector<8x1xi1> to vector<8x1xi1>
    %142 = vector.broadcast %141 : vector<8x1xi1> to vector<8x16xi1>
    %143 = arith.select %142, %138, %92 : vector<8x16xi1>, vector<8x16xf32>
    %c88 = arith.constant 88 : index
    %c0_37 = arith.constant 0 : index
    %144 = vector.load %arg1[%c88, %c0_37] : memref<112x128xf32, #tpu.memory_space<vmem>>, vector<16x128xf32>
    %c108 = arith.constant 108 : index
    %c0_38 = arith.constant 0 : index
    %145 = vector.load %arg1[%c108, %c0_38] : memref<112x128xf32, #tpu.memory_space<vmem>>, vector<1x128xf32>
    %cst_39 = arith.constant dense<0.000000e+00> : vector<8x128xf32>
    %146 = tpu.matmul %143, %144, %cst_39 {dimension_numbers = #tpu.dot_dimension_numbers<[1], [0], [0], [1], [0, 0, 1, 1], [], []>, precision = #tpu.contract_precision<fp32>} : vector<8x16xf32>, vector<16x128xf32>, vector<8x128xf32> -> vector<8x128xf32>
    %147 = vector.broadcast %145 : vector<1x128xf32> to vector<8x128xf32>
    %148 = arith.addf %146, %147 : vector<8x128xf32>
    %149 = tpu.iota {dimensions = array<i32: 1>} : vector<1x128xi32>
    %c2_i32 = arith.constant 2 : i32
    %150 = vector.broadcast %c2_i32 : i32 to vector<1x128xi32>
    %151 = arith.cmpi eq, %149, %150 : vector<1x128xi32>
    %cst_40 = arith.constant 0.000000e+00 : f32
    %152 = vector.shape_cast %151 : vector<1x128xi1> to vector<1x128xi1>
    %153 = vector.broadcast %152 : vector<1x128xi1> to vector<8x128xi1>
    %154 = vector.shape_cast %112 : vector<8x1xf32> to vector<8x1xf32>
    %155 = vector.broadcast %154 : vector<8x1xf32> to vector<8x128xf32>
    %156 = vector.broadcast %cst_40 : f32 to vector<8x128xf32>
    %157 = arith.select %153, %155, %156 : vector<8x128xi1>, vector<8x128xf32>
    %158 = arith.addf %148, %157 : vector<8x128xf32>
    %c0_41 = arith.constant 0 : index
    %c0_42 = arith.constant 0 : index
    %159 = vector.load %arg2[%c0_41, %c0_42] : memref<8x128xf32, #tpu.memory_space<vmem>>, vector<8x128xf32>
    tpu.vector_store %arg2[%c0_41, %c0_42], %158 {strides = array<i32>} : memref<8x128xf32, #tpu.memory_space<vmem>>, vector<8x128xf32>,
    return
  }
}

</mosaic_0001>

<llo_original>
// kernel: tpu_custom_call.1
$region0: #{tpu_custom_call.1}
  #allocation0 [shape = 'u32[]', space=smem, size = 0x4, offset = 0x4, fixed_abs, tag = 'smem constant byte address 0x4 - core index']
  #allocation1 [shape = 'u32[144,128]{1,0:T(1,128)}', space=vmem, size = 0x12000, scoped, tag = 'internal scratch']
  %s0 = inlined_call_operand.hbm [shape: f32[48,128], index: 0, kind: input, shape index: {}]
  %s1 = inlined_call_operand.hbm [shape: f32[112,128], index: 1, kind: input, shape index: {}]
  %s2 = inlined_call_operand.hbm [shape: f32[8,128], index: 2, kind: output, shape index: {}]
  %s3 = sld [smem:[#allocation0]]
  $region26: #{tpu_custom_call.1} parent=0
    _
  %s5 = ssub.s32 1, %s3
  %s6 = scalar_select 0, %s5, %s3
  $region1: #{tpu_custom_call.1} parent=0
    #allocation2 [shape = 'u8[24576]{0}', space=vmem, size = 0x6000, scoped, tag = 'input window, operand 0, single buffered']
    #allocation3 [shape = 's32[1]{0}', space=sflag, size = 0x4, scoped, tag = 'scoped memory for tpu_custom_call.1']
    #allocation4 [shape = 's32[1]{0}', space=sflag, size = 0x4, scoped, tag = 'scoped memory for tpu_custom_call.1']
    #allocation5 [shape = 'u8[57344]{0}', space=vmem, size = 0xe000, scoped, tag = 'input window, operand 1, single buffered']
    #allocation6 [shape = 's32[1]{0}', space=sflag, size = 0x4, scoped, tag = 'scoped memory for tpu_custom_call.1']
    #allocation7 [shape = 'u8[4096]{0}', space=vmem, size = 0x1000, scoped, tag = 'output window, operand 0, single buffered']
    %7 = vsyncpa [#allocation3], 0
    %8 = vsyncpa [#allocation6], 0
    %9 = vsyncpa [#allocation4], 0
    // Predicated region
    $region2: #{tpu_custom_call.1} parent=1 // pred_check
      _
    $region3: #{tpu_custom_call.1} parent=1 // pred_check_branch
      %11 = sbr.rel (0) target = $region5
    $region4: #{tpu_custom_call.1} parent=1 // pred_region
      %s13 = ssub.s32 768, 768
      %14 = vsyncadd [#allocation3], %s13
      %s15 = sshll.u32 [#allocation2], 4
      %s16 = int_to_ptr.vmem [resolvable:$true] %s15
      %21 = dma.hbm_to_vmem [thread:$0]  %s0, 768, %s16, [#allocation3], 128, 128, 8
    $region5: #{tpu_custom_call.1} parent=1 // pred_fallthru
      _
    // Predicated region
    $region6: #{tpu_custom_call.1} parent=1 // pred_check
      _
    $region7: #{tpu_custom_call.1} parent=1 // pred_check_branch
      %23 = sbr.rel (0) target = $region9
    $region8: #{tpu_custom_call.1} parent=1 // pred_region
      %s25 = ssub.s32 1792, 1792
      %26 = vsyncadd [#allocation6], %s25
      %s27 = sshll.u32 [#allocation5], 4
      %s28 = int_to_ptr.vmem [resolvable:$true] %s27
      %33 = dma.hbm_to_vmem [thread:$0]  %s1, 1792, %s28, [#allocation6], 128, 128, 8
    $region9: #{tpu_custom_call.1} parent=1 // pred_fallthru
      _
    // Predicated region
    $region10: #{tpu_custom_call.1} parent=1 // pred_check
      _
    $region11: #{tpu_custom_call.1} parent=1 // pred_check_branch
      %35 = sbr.rel (0) target = $region13
    $region12: #{tpu_custom_call.1} parent=1 // pred_region
      %36 = dma.done [#allocation3], 768
    $region13: #{tpu_custom_call.1} parent=1 // pred_fallthru
      _
    // Predicated region
    $region14: #{tpu_custom_call.1} parent=1 // pred_check
      _
    $region15: #{tpu_custom_call.1} parent=1 // pred_check_branch
      %38 = sbr.rel (0) target = $region17
    $region16: #{tpu_custom_call.1} parent=1 // pred_region
      %39 = dma.done [#allocation6], 1792
    $region17: #{tpu_custom_call.1} parent=1 // pred_fallthru
      _
    %v40 = vld [vmem:[#allocation2] sm:$0xff]
    %v41 = vld [vmem:[#allocation2 + $0x8] sm:$0xff]
    %v42 = vld [vmem:[#allocation2 + $0x10] sm:$0xff]
    %v43 = vld [vmem:[#allocation2 + $0x18] sm:$0xff]
    %v44 = vld [vmem:[#allocation2 + $0x20] sm:$0xff]
    %v45 = vld [vmem:[#allocation2 + $0x28] sm:$0xff]
    %v46 = vld [vmem:[#allocation5] sm:$0xff]
    %v47 = vld [vmem:[#allocation5 + $0x68] sm:$0x1]
    %v48 = vld [vmem:[#allocation5 + $0x48] sm:$0xff]
    %v49 = vld [vmem:[#allocation5 + $0x50] sm:$0xff]
    %v50 = vld [vmem:[#allocation5 + $0x6b] sm:$0x1]
    %v51 = vlaneseq
    %v52 = vshrl.u32 %v51, 7
    %v53 = vsub.s32 0, %v52
    %v54 = vrot.slane %v47, %v53
    %vm55 = vcmask 64512
    %v57 = vsel %vm55, %v40, 0
    %59 = vmatprep.subr.mxu0 0.0
    %v60 = vand.u32 %v46, 4294901760
    %61 = vmatpush1.msra.mxu0 %v60
    %62 = vmatprep.subr.mxu0 0.0
    %63 = vmatpush1.msra.mxu0 0.0
    %64 = vmatprep.subr.mxu0 0.0
    %65 = vmatpush1.msra.mxu0 0.0
    %66 = vmatprep.subr.mxu0 0.0
    %67 = vmatpush1.msra.mxu0 0.0
    %68 = vmatprep.subr.mxu0 0.0
    %69 = vmatpush1.msra.mxu0 0.0
    %70 = vmatprep.subr.mxu0 0.0
    %71 = vmatpush1.msra.mxu0 0.0
    %72 = vmatprep.subr.mxu0 0.0
    %73 = vmatpush1.msra.mxu0 0.0
    %74 = vmatprep.subr.mxu0 0.0
    %75 = vmatpush1.msra.mxu0 0.0
    %76 = vmatprep.subr.mxu0 0.0
    %77 = vmatpush1.msra.mxu0 0.0
    %78 = vmatprep.subr.mxu0 0.0
    %79 = vmatpush1.msra.mxu0 0.0
    %80 = vmatprep.subr.mxu0 0.0
    %81 = vmatpush1.msra.mxu0 0.0
    %82 = vmatprep.subr.mxu0 0.0
    %83 = vmatpush1.msra.mxu0 0.0
    %84 = vmatprep.subr.mxu0 0.0
    %85 = vmatpush1.msra.mxu0 0.0
    %86 = vmatprep.subr.mxu0 0.0
    %87 = vmatpush1.msra.mxu0 0.0
    %88 = vmatprep.subr.mxu0 0.0
    %89 = vmatpush1.msra.mxu0 0.0
    %90 = vmatprep.subr.mxu0 0.0
    %91 = vmatpush1.msra.mxu0 0.0
    %92 = vmatprep.subr.mxu0 0.0
    %93 = vmatpush1.msra.mxu0 0.0
    %94 = vmatprep.subr.mxu0 0.0
    %95 = vmatpush1.msra.mxu0 0.0
    %96 = vmatprep.subr.mxu0 0.0
    %97 = vmatpush1.msra.mxu0 0.0
    %98 = vmatprep.subr.mxu0 0.0
    %99 = vmatpush1.msra.mxu0 0.0
    %100 = vmatprep.subr.mxu0 0.0
    %101 = vmatpush1.msra.mxu0 0.0
    %102 = vmatprep.subr.mxu0 0.0
    %103 = vmatpush1.msra.mxu0 0.0
    %104 = vmatprep.subr.mxu0 0.0
    %105 = vmatpush1.msra.mxu0 0.0
    %106 = vmatprep.subr.mxu0 0.0
    %107 = vmatpush1.msra.mxu0 0.0
    %108 = vmatprep.subr.mxu0 0.0
    %109 = vmatpush1.msra.mxu0 0.0
    %110 = vmatprep.subr.mxu0 0.0
    %111 = vmatpush1.msra.mxu0 0.0
    %112 = vmatprep.subr.mxu0 0.0
    %113 = vmatpush1.msra.mxu0 0.0
    %114 = vmatprep.subr.mxu0 0.0
    %115 = vmatpush1.msra.mxu0 0.0
    %116 = vmatprep.subr.mxu0 0.0
    %117 = vmatpush1.msra.mxu0 0.0
    %118 = vmatprep.subr.mxu0 0.0
    %119 = vmatpush1.msra.mxu0 0.0
    %120 = vmatprep.subr.mxu0 0.0
    %121 = vmatpush1.msra.mxu0 0.0
    %122 = vmatprep.subr.mxu0 0.0
    %123 = vmatpush1.msra.mxu0 0.0
    %124 = vmatprep.mubr.f32.mxu0 0.0
    %v125 = vand.u32 %v57, 4294901760
    %v126 = vsub.f32 %v57, %v125
    %v127 = vand.u32 %v126, 4294901760
    %v128 = vsub.f32 %v126, %v127
    %v129 = vand.u32 %v128, 4294901760
    %130 = vmatmul.mubr.f32.gmra.mrb[0].mxu0 %v129
    %v131 = vpop.f32.mrb[0].mxu0
    %v132 = vadd.f32 %v54, %v131
    %v133 = vpop.f32.mrb[0].mxu0
    %134 = vdwg.mxu0
    %135 = vmatprep.subr.mxu0 0.0
    %v136 = vand.u32 %v46, 4294901760
    %v137 = vsub.f32 %v46, %v136
    %v138 = vand.u32 %v137, 4294901760
    %v139 = vsub.f32 %v137, %v138
    %v140 = vand.u32 %v139, 4294901760
    %141 = vmatpush1.msra.mxu0 %v140
    %142 = vmatprep.subr.mxu0 0.0
    %143 = vmatpush1.msra.mxu0 0.0
    %144 = vmatprep.subr.mxu0 0.0
    %145 = vmatpush1.msra.mxu0 0.0
    %146 = vmatprep.subr.mxu0 0.0
    %147 = vmatpush1.msra.mxu0 0.0
    %148 = vmatprep.subr.mxu0 0.0
    %149 = vmatpush1.msra.mxu0 0.0
    %150 = vmatprep.subr.mxu0 0.0
    %151 = vmatpush1.msra.mxu0 0.0
    %152 = vmatprep.subr.mxu0 0.0
    %153 = vmatpush1.msra.mxu0 0.0
    %154 = vmatprep.subr.mxu0 0.0
    %155 = vmatpush1.msra.mxu0 0.0
    %156 = vmatprep.subr.mxu0 0.0
    %157 = vmatpush1.msra.mxu0 0.0
    %158 = vmatprep.subr.mxu0 0.0
    %159 = vmatpush1.msra.mxu0 0.0
    %160 = vmatprep.subr.mxu0 0.0
    %161 = vmatpush1.msra.mxu0 0.0
    %162 = vmatprep.subr.mxu0 0.0
    %163 = vmatpush1.msra.mxu0 0.0
    %164 = vmatprep.subr.mxu0 0.0
    %165 = vmatpush1.msra.mxu0 0.0
    %166 = vmatprep.subr.mxu0 0.0
    %167 = vmatpush1.msra.mxu0 0.0
    %168 = vmatprep.subr.mxu0 0.0
    %169 = vmatpush1.msra.mxu0 0.0
    %170 = vmatprep.subr.mxu0 0.0
    %171 = vmatpush1.msra.mxu0 0.0
    %172 = vmatprep.subr.mxu0 0.0
    %173 = vmatpush1.msra.mxu0 0.0
    %174 = vmatprep.subr.mxu0 0.0
    %175 = vmatpush1.msra.mxu0 0.0
    %176 = vmatprep.subr.mxu0 0.0
    %177 = vmatpush1.msra.mxu0 0.0
    %178 = vmatprep.subr.mxu0 0.0
    %179 = vmatpush1.msra.mxu0 0.0
    %180 = vmatprep.subr.mxu0 0.0
    %181 = vmatpush1.msra.mxu0 0.0
    %182 = vmatprep.subr.mxu0 0.0
    %183 = vmatpush1.msra.mxu0 0.0
    %184 = vmatprep.subr.mxu0 0.0
    %185 = vmatpush1.msra.mxu0 0.0
    %186 = vmatprep.subr.mxu0 0.0
    %187 = vmatpush1.msra.mxu0 0.0
    %188 = vmatprep.subr.mxu0 0.0
    %189 = vmatpush1.msra.mxu0 0.0
    %190 = vmatprep.subr.mxu0 0.0
    %191 = vmatpush1.msra.mxu0 0.0
    %192 = vmatprep.subr.mxu0 0.0
    %193 = vmatpush1.msra.mxu0 0.0
    %194 = vmatprep.subr.mxu0 0.0
    %195 = vmatpush1.msra.mxu0 0.0
    %196 = vmatprep.subr.mxu0 0.0
    %197 = vmatpush1.msra.mxu0 0.0
    %198 = vmatprep.subr.mxu0 0.0
    %199 = vmatpush1.msra.mxu0 0.0
    %200 = vmatprep.subr.mxu0 0.0
    %201 = vmatpush1.msra.mxu0 0.0
    %202 = vmatprep.subr.mxu0 0.0
    %203 = vmatpush1.msra.mxu0 0.0
    %204 = vmatprep.mubr.f32.mxu0 0.0
    %v205 = vand.u32 %v57, 4294901760
    %206 = vmatmul.mubr.f32.gmra.mrb[0].mxu0 %v205
    %v207 = vpop.f32.mrb[0].mxu0
    %v208 = vadd.f32 %v132, %v207
    %v209 = vpop.f32.mrb[0].mxu0
    %210 = vdwg.mxu0
    %211 = vmatprep.subr.mxu0 0.0
    %v212 = vand.u32 %v46, 4294901760
    %v213 = vsub.f32 %v46, %v212
    %214 = vmatpush1.msra.mxu0 %v213
    %215 = vmatprep.subr.mxu0 0.0
    %216 = vmatpush1.msra.mxu0 0.0
    %217 = vmatprep.subr.mxu0 0.0
    %218 = vmatpush1.msra.mxu0 0.0
    %219 = vmatprep.subr.mxu0 0.0
    %220 = vmatpush1.msra.mxu0 0.0
    %221 = vmatprep.subr.mxu0 0.0
    %222 = vmatpush1.msra.mxu0 0.0
    %223 = vmatprep.subr.mxu0 0.0
    %224 = vmatpush1.msra.mxu0 0.0
    %225 = vmatprep.subr.mxu0 0.0
    %226 = vmatpush1.msra.mxu0 0.0
    %227 = vmatprep.subr.mxu0 0.0
    %228 = vmatpush1.msra.mxu0 0.0
    %229 = vmatprep.subr.mxu0 0.0
    %230 = vmatpush1.msra.mxu0 0.0
    %231 = vmatprep.subr.mxu0 0.0
    %232 = vmatpush1.msra.mxu0 0.0
    %233 = vmatprep.subr.mxu0 0.0
    %234 = vmatpush1.msra.mxu0 0.0
    %235 = vmatprep.subr.mxu0 0.0
    %236 = vmatpush1.msra.mxu0 0.0
    %237 = vmatprep.subr.mxu0 0.0
    %238 = vmatpush1.msra.mxu0 0.0
    %239 = vmatprep.subr.mxu0 0.0
    %240 = vmatpush1.msra.mxu0 0.0
    %241 = vmatprep.subr.mxu0 0.0
    %242 = vmatpush1.msra.mxu0 0.0
    %243 = vmatprep.subr.mxu0 0.0
    %244 = vmatpush1.msra.mxu0 0.0
    %245 = vmatprep.subr.mxu0 0.0
    %246 = vmatpush1.msra.mxu0 0.0
    %247 = vmatprep.subr.mxu0 0.0
    %248 = vmatpush1.msra.mxu0 0.0
    %249 = vmatprep.subr.mxu0 0.0
    %250 = vmatpush1.msra.mxu0 0.0
    %251 = vmatprep.subr.mxu0 0.0
    %252 = vmatpush1.msra.mxu0 0.0
    %253 = vmatprep.subr.mxu0 0.0
    %254 = vmatpush1.msra.mxu0 0.0
    %255 = vmatprep.subr.mxu0 0.0
    %256 = vmatpush1.msra.mxu0 0.0
    %257 = vmatprep.subr.mxu0 0.0
    %258 = vmatpush1.msra.mxu0 0.0
    %259 = vmatprep.subr.mxu0 0.0
    %260 = vmatpush1.msra.mxu0 0.0
    %261 = vmatprep.subr.mxu0 0.0
    %262 = vmatpush1.msra.mxu0 0.0
    %263 = vmatprep.subr.mxu0 0.0
    %264 = vmatpush1.msra.mxu0 0.0
    %265 = vmatprep.subr.mxu0 0.0
    %266 = vmatpush1.msra.mxu0 0.0
    %267 = vmatprep.subr.mxu0 0.0
    %268 = vmatpush1.msra.mxu0 0.0
    %269 = vmatprep.subr.mxu0 0.0
    %270 = vmatpush1.msra.mxu0 0.0
    %271 = vmatprep.subr.mxu0 0.0
    %272 = vmatpush1.msra.mxu0 0.0
    %273 = vmatprep.subr.mxu0 0.0
    %274 = vmatpush1.msra.mxu0 0.0
    %275 = vmatprep.subr.mxu0 0.0
    %276 = vmatpush1.msra.mxu0 0.0
    %277 = vmatprep.mubr.f32.mxu0 0.0
    %v278 = vand.u32 %v57, 4294901760
    %v279 = vsub.f32 %v57, %v278
    %280 = vmatmul.mubr.f32.gmra.mrb[0].mxu0 %v279
    %v281 = vpop.f32.mrb[0].mxu0
    %v282 = vadd.f32 %v208, %v281
    %v283 = vpop.f32.mrb[0].mxu0
    %284 = vdwg.mxu0
    %285 = vmatprep.subr.mxu0 0.0
    %v286 = vand.u32 %v46, 4294901760
    %287 = vmatpush1.msra.mxu0 %v286
    %288 = vmatprep.subr.mxu0 0.0
    %289 = vmatpush1.msra.mxu0 0.0
    %290 = vmatprep.subr.mxu0 0.0
    %291 = vmatpush1.msra.mxu0 0.0
    %292 = vmatprep.subr.mxu0 0.0
    %293 = vmatpush1.msra.mxu0 0.0
    %294 = vmatprep.subr.mxu0 0.0
    %295 = vmatpush1.msra.mxu0 0.0
    %296 = vmatprep.subr.mxu0 0.0
    %297 = vmatpush1.msra.mxu0 0.0
    %298 = vmatprep.subr.mxu0 0.0
    %299 = vmatpush1.msra.mxu0 0.0
    %300 = vmatprep.subr.mxu0 0.0
    %301 = vmatpush1.msra.mxu0 0.0
    %302 = vmatprep.subr.mxu0 0.0
    %303 = vmatpush1.msra.mxu0 0.0
    %304 = vmatprep.subr.mxu0 0.0
    %305 = vmatpush1.msra.mxu0 0.0
    %306 = vmatprep.subr.mxu0 0.0
    %307 = vmatpush1.msra.mxu0 0.0
    %308 = vmatprep.subr.mxu0 0.0
    %309 = vmatpush1.msra.mxu0 0.0
    %310 = vmatprep.subr.mxu0 0.0
    %311 = vmatpush1.msra.mxu0 0.0
    %312 = vmatprep.subr.mxu0 0.0
    %313 = vmatpush1.msra.mxu0 0.0
    %314 = vmatprep.subr.mxu0 0.0
    %315 = vmatpush1.msra.mxu0 0.0
    %316 = vmatprep.subr.mxu0 0.0
    %317 = vmatpush1.msra.mxu0 0.0
    %318 = vmatprep.subr.mxu0 0.0
    %319 = vmatpush1.msra.mxu0 0.0
    %320 = vmatprep.subr.mxu0 0.0
    %321 = vmatpush1.msra.mxu0 0.0
    %322 = vmatprep.subr.mxu0 0.0
    %323 = vmatpush1.msra.mxu0 0.0
    %324 = vmatprep.subr.mxu0 0.0
    %325 = vmatpush1.msra.mxu0 0.0
    %326 = vmatprep.subr.mxu0 0.0
    %327 = vmatpush1.msra.mxu0 0.0
    %328 = vmatprep.subr.mxu0 0.0
    %329 = vmatpush1.msra.mxu0 0.0
    %330 = vmatprep.subr.mxu0 0.0
    %331 = vmatpush1.msra.mxu0 0.0
    %332 = vmatprep.subr.mxu0 0.0
    %333 = vmatpush1.msra.mxu0 0.0
    %334 = vmatprep.subr.mxu0 0.0
    %335 = vmatpush1.msra.mxu0 0.0
    %336 = vmatprep.subr.mxu0 0.0
    %337 = vmatpush1.msra.mxu0 0.0
    %338 = vmatprep.subr.mxu0 0.0
    %339 = vmatpush1.msra.mxu0 0.0
    %340 = vmatprep.subr.mxu0 0.0
    %341 = vmatpush1.msra.mxu0 0.0
    %342 = vmatprep.subr.mxu0 0.0
    %343 = vmatpush1.msra.mxu0 0.0
    %344 = vmatprep.subr.mxu0 0.0
    %345 = vmatpush1.msra.mxu0 0.0
    %346 = vmatprep.subr.mxu0 0.0
    %347 = vmatpush1.msra.mxu0 0.0
    %348 = vmatprep.subr.mxu0 0.0
    %349 = vmatpush1.msra.mxu0 0.0
    %350 = vmatprep.mubr.f32.mxu0 0.0
    %v351 = vand.u32 %v57, 4294901760
    %v352 = vsub.f32 %v57, %v351
    %v353 = vand.u32 %v352, 4294901760
    %354 = vmatmul.mubr.f32.gmra.mrb[0].mxu0 %v353
    %v355 = vpop.f32.mrb[0].mxu0
    %v356 = vadd.f32 %v282, %v355
    %v357 = vpop.f32.mrb[0].mxu0
    %358 = vdwg.mxu0
    %359 = vmatprep.subr.mxu0 0.0
    %v360 = vand.u32 %v46, 4294901760
    %v361 = vsub.f32 %v46, %v360
    %v362 = vand.u32 %v361, 4294901760
    %363 = vmatpush1.msra.mxu0 %v362
    %364 = vmatprep.subr.mxu0 0.0
    %365 = vmatpush1.msra.mxu0 0.0
    %366 = vmatprep.subr.mxu0 0.0
    %367 = vmatpush1.msra.mxu0 0.0
    %368 = vmatprep.subr.mxu0 0.0
    %369 = vmatpush1.msra.mxu0 0.0
    %370 = vmatprep.subr.mxu0 0.0
    %371 = vmatpush1.msra.mxu0 0.0
    %372 = vmatprep.subr.mxu0 0.0
    %373 = vmatpush1.msra.mxu0 0.0
    %374 = vmatprep.subr.mxu0 0.0
    %375 = vmatpush1.msra.mxu0 0.0
    %376 = vmatprep.subr.mxu0 0.0
    %377 = vmatpush1.msra.mxu0 0.0
    %378 = vmatprep.subr.mxu0 0.0
    %379 = vmatpush1.msra.mxu0 0.0
    %380 = vmatprep.subr.mxu0 0.0
    %381 = vmatpush1.msra.mxu0 0.0
    %382 = vmatprep.subr.mxu0 0.0
    %383 = vmatpush1.msra.mxu0 0.0
    %384 = vmatprep.subr.mxu0 0.0
    %385 = vmatpush1.msra.mxu0 0.0
    %386 = vmatprep.subr.mxu0 0.0
    %387 = vmatpush1.msra.mxu0 0.0
    %388 = vmatprep.subr.mxu0 0.0
    %389 = vmatpush1.msra.mxu0 0.0
    %390 = vmatprep.subr.mxu0 0.0
    %391 = vmatpush1.msra.mxu0 0.0
    %392 = vmatprep.subr.mxu0 0.0
    %393 = vmatpush1.msra.mxu0 0.0
    %394 = vmatprep.subr.mxu0 0.0
    %395 = vmatpush1.msra.mxu0 0.0
    %396 = vmatprep.subr.mxu0 0.0
    %397 = vmatpush1.msra.mxu0 0.0
    %398 = vmatprep.subr.mxu0 0.0
    %399 = vmatpush1.msra.mxu0 0.0
    %400 = vmatprep.subr.mxu0 0.0
    %401 = vmatpush1.msra.mxu0 0.0
    %402 = vmatprep.subr.mxu0 0.0
    %403 = vmatpush1.msra.mxu0 0.0
    %404 = vmatprep.subr.mxu0 0.0
    %405 = vmatpush1.msra.mxu0 0.0
    %406 = vmatprep.subr.mxu0 0.0
    %407 = vmatpush1.msra.mxu0 0.0
    %408 = vmatprep.subr.mxu0 0.0
    %409 = vmatpush1.msra.mxu0 0.0
    %410 = vmatprep.subr.mxu0 0.0
    %411 = vmatpush1.msra.mxu0 0.0
    %412 = vmatprep.subr.mxu0 0.0
    %413 = vmatpush1.msra.mxu0 0.0
    %414 = vmatprep.subr.mxu0 0.0
    %415 = vmatpush1.msra.mxu0 0.0
    %416 = vmatprep.subr.mxu0 0.0
    %417 = vmatpush1.msra.mxu0 0.0
    %418 = vmatprep.subr.mxu0 0.0
    %419 = vmatpush1.msra.mxu0 0.0
    %420 = vmatprep.subr.mxu0 0.0
    %421 = vmatpush1.msra.mxu0 0.0
    %422 = vmatprep.subr.mxu0 0.0
    %423 = vmatpush1.msra.mxu0 0.0
    %424 = vmatprep.subr.mxu0 0.0
    %425 = vmatpush1.msra.mxu0 0.0
    %426 = vmatprep.mubr.f32.mxu0 0.0
    %v427 = vand.u32 %v57, 4294901760
    %428 = vmatmul.mubr.f32.gmra.mrb[0].mxu0 %v427
    %v429 = vpop.f32.mrb[0].mxu0
    %v430 = vadd.f32 %v356, %v429
    %v431 = vpop.f32.mrb[0].mxu0
    %432 = vdwg.mxu0
    %433 = vmatprep.subr.mxu0 0.0
    %v434 = vand.u32 %v46, 4294901760
    %435 = vmatpush1.msra.mxu0 %v434
    %436 = vmatprep.subr.mxu0 0.0
    %437 = vmatpush1.msra.mxu0 0.0
    %438 = vmatprep.subr.mxu0 0.0
    %439 = vmatpush1.msra.mxu0 0.0
    %440 = vmatprep.subr.mxu0 0.0
    %441 = vmatpush1.msra.mxu0 0.0
    %442 = vmatprep.subr.mxu0 0.0
    %443 = vmatpush1.msra.mxu0 0.0
    %444 = vmatprep.subr.mxu0 0.0
    %445 = vmatpush1.msra.mxu0 0.0
    %446 = vmatprep.subr.mxu0 0.0
    %447 = vmatpush1.msra.mxu0 0.0
    %448 = vmatprep.subr.mxu0 0.0
    %449 = vmatpush1.msra.mxu0 0.0
    %450 = vmatprep.subr.mxu0 0.0
    %451 = vmatpush1.msra.mxu0 0.0
    %452 = vmatprep.subr.mxu0 0.0
    %453 = vmatpush1.msra.mxu0 0.0
    %454 = vmatprep.subr.mxu0 0.0
    %455 = vmatpush1.msra.mxu0 0.0
    %456 = vmatprep.subr.mxu0 0.0
    %457 = vmatpush1.msra.mxu0 0.0
    %458 = vmatprep.subr.mxu0 0.0
    %459 = vmatpush1.msra.mxu0 0.0
    %460 = vmatprep.subr.mxu0 0.0
    %461 = vmatpush1.msra.mxu0 0.0
    %462 = vmatprep.subr.mxu0 0.0
    %463 = vmatpush1.msra.mxu0 0.0
    %464 = vmatprep.subr.mxu0 0.0
    %465 = vmatpush1.msra.mxu0 0.0
    %466 = vmatprep.subr.mxu0 0.0
    %467 = vmatpush1.msra.mxu0 0.0
    %468 = vmatprep.subr.mxu0 0.0
    %469 = vmatpush1.msra.mxu0 0.0
    %470 = vmatprep.subr.mxu0 0.0
    %471 = vmatpush1.msra.mxu0 0.0
    %472 = vmatprep.subr.mxu0 0.0
    %473 = vmatpush1.msra.mxu0 0.0
    %474 = vmatprep.subr.mxu0 0.0
    %475 = vmatpush1.msra.mxu0 0.0
    %476 = vmatprep.subr.mxu0 0.0
    %477 = vmatpush1.msra.mxu0 0.0
    %478 = vmatprep.subr.mxu0 0.0
    %479 = vmatpush1.msra.mxu0 0.0
    %480 = vmatprep.subr.mxu0 0.0
    %481 = vmatpush1.msra.mxu0 0.0
    %482 = vmatprep.subr.mxu0 0.0
    %483 = vmatpush1.msra.mxu0 0.0
    %484 = vmatprep.subr.mxu0 0.0
    %485 = vmatpush1.msra.mxu0 0.0
    %486 = vmatprep.subr.mxu0 0.0
    %487 = vmatpush1.msra.mxu0 0.0
    %488 = vmatprep.subr.mxu0 0.0
    %489 = vmatpush1.msra.mxu0 0.0
    %490 = vmatprep.subr.mxu0 0.0
    %491 = vmatpush1.msra.mxu0 0.0
    %492 = vmatprep.subr.mxu0 0.0
    %493 = vmatpush1.msra.mxu0 0.0
    %494 = vmatprep.subr.mxu0 0.0
    %495 = vmatpush1.msra.mxu0 0.0
    %496 = vmatprep.subr.mxu0 0.0
    %497 = vmatpush1.msra.mxu0 0.0
    %498 = vmatprep.mubr.f32.mxu0 0.0
    %v499 = vand.u32 %v57, 4294901760
    %500 = vmatmul.mubr.f32.gmra.mrb[0].mxu0 %v499
    %v501 = vpop.f32.mrb[0].mxu0
    %v502 = vadd.f32 %v430, %v501
    %v503 = vpop.f32.mrb[0].mxu0
    %504 = vdwg.mxu0
    %v505 = vmax.f32 %v502, 0.0
    %v507 = vsel %vm55, %v41, 0
    %v510 = vsel %vm55, %v42, 0
    %v513 = vsel %vm55, %v43, 0
    %v516 = vsel %vm55, %v44, 0
    %518 = vmatprep.subr.mxu0 0.0
    %v519 = vand.u32 %v505, 4294901760
    %520 = vmatpush1.msra.mxu0 %v519
    %521 = vmatprep.subr.mxu0 0.0
    %522 = vmatpush1.msra.mxu0 0.0
    %523 = vmatprep.subr.mxu0 0.0
    %524 = vmatpush1.msra.mxu0 0.0
    %525 = vmatprep.subr.mxu0 0.0
    %526 = vmatpush1.msra.mxu0 0.0
    %527 = vmatprep.subr.mxu0 0.0
    %528 = vmatpush1.msra.mxu0 0.0
    %529 = vmatprep.subr.mxu0 0.0
    %530 = vmatpush1.msra.mxu0 0.0
    %531 = vmatprep.subr.mxu0 0.0
    %532 = vmatpush1.msra.mxu0 0.0
    %533 = vmatprep.subr.mxu0 0.0
    %534 = vmatpush1.msra.mxu0 0.0
    %535 = vmatprep.subr.mxu0 0.0
    %536 = vmatpush1.msra.mxu0 0.0
    %537 = vmatprep.subr.mxu0 0.0
    %538 = vmatpush1.msra.mxu0 0.0
    %539 = vmatprep.subr.mxu0 0.0
    %540 = vmatpush1.msra.mxu0 0.0
    %541 = vmatprep.subr.mxu0 0.0
    %542 = vmatpush1.msra.mxu0 0.0
    %543 = vmatprep.subr.mxu0 0.0
    %544 = vmatpush1.msra.mxu0 0.0
    %545 = vmatprep.subr.mxu0 0.0
    %546 = vmatpush1.msra.mxu0 0.0
    %547 = vmatprep.subr.mxu0 0.0
    %548 = vmatpush1.msra.mxu0 0.0
    %549 = vmatprep.subr.mxu0 0.0
    %550 = vmatpush1.msra.mxu0 0.0
    %551 = vmatprep.subr.mxu0 0.0
    %552 = vmatpush1.msra.mxu0 0.0
    %553 = vmatprep.subr.mxu0 0.0
    %554 = vmatpush1.msra.mxu0 0.0
    %555 = vmatprep.subr.mxu0 0.0
    %556 = vmatpush1.msra.mxu0 0.0
    %557 = vmatprep.subr.mxu0 0.0
    %558 = vmatpush1.msra.mxu0 0.0
    %559 = vmatprep.subr.mxu0 0.0
    %560 = vmatpush1.msra.mxu0 0.0
    %561 = vmatprep.subr.mxu0 0.0
    %562 = vmatpush1.msra.mxu0 0.0
    %563 = vmatprep.subr.mxu0 0.0
    %564 = vmatpush1.msra.mxu0 0.0
    %565 = vmatprep.subr.mxu0 0.0
    %566 = vmatpush1.msra.mxu0 0.0
    %567 = vmatprep.subr.mxu0 0.0
    %568 = vmatpush1.msra.mxu0 0.0
    %569 = vmatprep.subr.mxu0 0.0
    %570 = vmatpush1.msra.mxu0 0.0
    %571 = vmatprep.subr.mxu0 0.0
    %572 = vmatpush1.msra.mxu0 0.0
    %573 = vmatprep.subr.mxu0 0.0
    %574 = vmatpush1.msra.mxu0 0.0
    %575 = vmatprep.subr.mxu0 0.0
    %576 = vmatpush1.msra.mxu0 0.0
    %577 = vmatprep.subr.mxu0 0.0
    %578 = vmatpush1.msra.mxu0 0.0
    %579 = vmatprep.subr.mxu0 0.0
    %580 = vmatpush1.msra.mxu0 0.0
    %581 = vmatprep.subr.mxu0 0.0
    %582 = vmatpush1.msra.mxu0 0.0
    %583 = vmatprep.mubr.f32.mxu0 0.0
    %v584 = vand.u32 %v507, 4294901760
    %v585 = vsub.f32 %v507, %v584
    %v586 = vand.u32 %v585, 4294901760
    %v587 = vsub.f32 %v585, %v586
    %v588 = vand.u32 %v587, 4294901760
    %589 = vmatmul.mubr.f32.gmra.mrb[0].mxu0 %v588
    %v590 = vpop.f32.mrb[0].mxu0
    %v591 = vadd.f32 0.0, %v590
    %v592 = vpop.f32.mrb[0].mxu0
    %593 = vmatprep.mubr.f32.mxu0 0.0
    %v594 = vand.u32 %v510, 4294901760
    %v595 = vsub.f32 %v510, %v594
    %v596 = vand.u32 %v595, 4294901760
    %v597 = vsub.f32 %v595, %v596
    %v598 = vand.u32 %v597, 4294901760
    %599 = vmatmul.mubr.f32.gmra.mrb[0].mxu0 %v598
    %v600 = vpop.f32.mrb[0].mxu0
    %v601 = vadd.f32 0.0, %v600
    %v602 = vpop.f32.mrb[0].mxu0
    %603 = vmatprep.mubr.f32.mxu0 0.0
    %v604 = vand.u32 %v513, 4294901760
    %v605 = vsub.f32 %v513, %v604
    %v606 = vand.u32 %v605, 4294901760
    %v607 = vsub.f32 %v605, %v606
    %v608 = vand.u32 %v607, 4294901760
    %609 = vmatmul.mubr.f32.gmra.mrb[0].mxu0 %v608
    %v610 = vpop.f32.mrb[0].mxu0
    %v611 = vadd.f32 0.0, %v610
    %v612 = vpop.f32.mrb[0].mxu0
    %613 = vmatprep.mubr.f32.mxu0 0.0
    %v614 = vand.u32 %v516, 4294901760
    %v615 = vsub.f32 %v516, %v614
    %v616 = vand.u32 %v615, 4294901760
    %v617 = vsub.f32 %v615, %v616
    %v618 = vand.u32 %v617, 4294901760
    %619 = vmatmul.mubr.f32.gmra.mrb[0].mxu0 %v618
    %v620 = vpop.f32.mrb[0].mxu0
    %v621 = vadd.f32 0.0, %v620
    %v622 = vpop.f32.mrb[0].mxu0
    %623 = vdwg.mxu0
    %624 = vmatprep.subr.mxu0 0.0
    %v625 = vand.u32 %v505, 4294901760
    %v626 = vsub.f32 %v505, %v625
    %v627 = vand.u32 %v626, 4294901760
    %v628 = vsub.f32 %v626, %v627
    %v629 = vand.u32 %v628, 4294901760
    %630 = vmatpush1.msra.mxu0 %v629
    %631 = vmatprep.subr.mxu0 0.0
    %632 = vmatpush1.msra.mxu0 0.0
    %633 = vmatprep.subr.mxu0 0.0
    %634 = vmatpush1.msra.mxu0 0.0
    %635 = vmatprep.subr.mxu0 0.0
    %636 = vmatpush1.msra.mxu0 0.0
    %637 = vmatprep.subr.mxu0 0.0
    %638 = vmatpush1.msra.mxu0 0.0
    %639 = vmatprep.subr.mxu0 0.0
    %640 = vmatpush1.msra.mxu0 0.0
    %641 = vmatprep.subr.mxu0 0.0
    %642 = vmatpush1.msra.mxu0 0.0
    %643 = vmatprep.subr.mxu0 0.0
    %644 = vmatpush1.msra.mxu0 0.0
    %645 = vmatprep.subr.mxu0 0.0
    %646 = vmatpush1.msra.mxu0 0.0
    %647 = vmatprep.subr.mxu0 0.0
    %648 = vmatpush1.msra.mxu0 0.0
    %649 = vmatprep.subr.mxu0 0.0
    %650 = vmatpush1.msra.mxu0 0.0
    %651 = vmatprep.subr.mxu0 0.0
    %652 = vmatpush1.msra.mxu0 0.0
    %653 = vmatprep.subr.mxu0 0.0
    %654 = vmatpush1.msra.mxu0 0.0
    %655 = vmatprep.subr.mxu0 0.0
    %656 = vmatpush1.msra.mxu0 0.0
    %657 = vmatprep.subr.mxu0 0.0
    %658 = vmatpush1.msra.mxu0 0.0
    %659 = vmatprep.subr.mxu0 0.0
    %660 = vmatpush1.msra.mxu0 0.0
    %661 = vmatprep.subr.mxu0 0.0
    %662 = vmatpush1.msra.mxu0 0.0
    %663 = vmatprep.subr.mxu0 0.0
    %664 = vmatpush1.msra.mxu0 0.0
    %665 = vmatprep.subr.mxu0 0.0
    %666 = vmatpush1.msra.mxu0 0.0
    %667 = vmatprep.subr.mxu0 0.0
    %668 = vmatpush1.msra.mxu0 0.0
    %669 = vmatprep.subr.mxu0 0.0
    %670 = vmatpush1.msra.mxu0 0.0
    %671 = vmatprep.subr.mxu0 0.0
    %672 = vmatpush1.msra.mxu0 0.0
    %673 = vmatprep.subr.mxu0 0.0
    %674 = vmatpush1.msra.mxu0 0.0
    %675 = vmatprep.subr.mxu0 0.0
    %676 = vmatpush1.msra.mxu0 0.0
    %677 = vmatprep.subr.mxu0 0.0
    %678 = vmatpush1.msra.mxu0 0.0
    %679 = vmatprep.subr.mxu0 0.0
    %680 = vmatpush1.msra.mxu0 0.0
    %681 = vmatprep.subr.mxu0 0.0
    %682 = vmatpush1.msra.mxu0 0.0
    %683 = vmatprep.subr.mxu0 0.0
    %684 = vmatpush1.msra.mxu0 0.0
    %685 = vmatprep.subr.mxu0 0.0
    %686 = vmatpush1.msra.mxu0 0.0
    %687 = vmatprep.subr.mxu0 0.0
    %688 = vmatpush1.msra.mxu0 0.0
    %689 = vmatprep.subr.mxu0 0.0
    %690 = vmatpush1.msra.mxu0 0.0
    %691 = vmatprep.subr.mxu0 0.0
    %692 = vmatpush1.msra.mxu0 0.0
    %693 = vmatprep.mubr.f32.mxu0 0.0
    %v694 = vand.u32 %v507, 4294901760
    %695 = vmatmul.mubr.f32.gmra.mrb[0].mxu0 %v694
    %v696 = vpop.f32.mrb[0].mxu0
    %v697 = vadd.f32 %v591, %v696
    %v698 = vpop.f32.mrb[0].mxu0
    %699 = vmatprep.mubr.f32.mxu0 0.0
    %v700 = vand.u32 %v510, 4294901760
    %701 = vmatmul.mubr.f32.gmra.mrb[0].mxu0 %v700
    %v702 = vpop.f32.mrb[0].mxu0
    %v703 = vadd.f32 %v601, %v702
    %v704 = vpop.f32.mrb[0].mxu0
    %705 = vmatprep.mubr.f32.mxu0 0.0
    %v706 = vand.u32 %v513, 4294901760
    %707 = vmatmul.mubr.f32.gmra.mrb[0].mxu0 %v706
    %v708 = vpop.f32.mrb[0].mxu0
    %v709 = vadd.f32 %v611, %v708
    %v710 = vpop.f32.mrb[0].mxu0
    %711 = vmatprep.mubr.f32.mxu0 0.0
    %v712 = vand.u32 %v516, 4294901760
    %713 = vmatmul.mubr.f32.gmra.mrb[0].mxu0 %v712
    %v714 = vpop.f32.mrb[0].mxu0
    %v715 = vadd.f32 %v621, %v714
    %v716 = vpop.f32.mrb[0].mxu0
    %717 = vdwg.mxu0
    %718 = vmatprep.subr.mxu0 0.0
    %v719 = vand.u32 %v505, 4294901760
    %v720 = vsub.f32 %v505, %v719
    %721 = vmatpush1.msra.mxu0 %v720
    %722 = vmatprep.subr.mxu0 0.0
    %723 = vmatpush1.msra.mxu0 0.0
    %724 = vmatprep.subr.mxu0 0.0
    %725 = vmatpush1.msra.mxu0 0.0
    %726 = vmatprep.subr.mxu0 0.0
    %727 = vmatpush1.msra.mxu0 0.0
    %728 = vmatprep.subr.mxu0 0.0
    %729 = vmatpush1.msra.mxu0 0.0
    %730 = vmatprep.subr.mxu0 0.0
    %731 = vmatpush1.msra.mxu0 0.0
    %732 = vmatprep.subr.mxu0 0.0
    %733 = vmatpush1.msra.mxu0 0.0
    %734 = vmatprep.subr.mxu0 0.0
    %735 = vmatpush1.msra.mxu0 0.0
    %736 = vmatprep.subr.mxu0 0.0
    %737 = vmatpush1.msra.mxu0 0.0
    %738 = vmatprep.subr.mxu0 0.0
    %739 = vmatpush1.msra.mxu0 0.0
    %740 = vmatprep.subr.mxu0 0.0
    %741 = vmatpush1.msra.mxu0 0.0
    %742 = vmatprep.subr.mxu0 0.0
    %743 = vmatpush1.msra.mxu0 0.0
    %744 = vmatprep.subr.mxu0 0.0
    %745 = vmatpush1.msra.mxu0 0.0
    %746 = vmatprep.subr.mxu0 0.0
    %747 = vmatpush1.msra.mxu0 0.0
    %748 = vmatprep.subr.mxu0 0.0
    %749 = vmatpush1.msra.mxu0 0.0
    %750 = vmatprep.subr.mxu0 0.0
    %751 = vmatpush1.msra.mxu0 0.0
    %752 = vmatprep.subr.mxu0 0.0
    %753 = vmatpush1.msra.mxu0 0.0
    %754 = vmatprep.subr.mxu0 0.0
    %755 = vmatpush1.msra.mxu0 0.0
    %756 = vmatprep.subr.mxu0 0.0
    %757 = vmatpush1.msra.mxu0 0.0
    %758 = vmatprep.subr.mxu0 0.0
    %759 = vmatpush1.msra.mxu0 0.0
    %760 = vmatprep.subr.mxu0 0.0
    %761 = vmatpush1.msra.mxu0 0.0
    %762 = vmatprep.subr.mxu0 0.0
    %763 = vmatpush1.msra.mxu0 0.0
    %764 = vmatprep.subr.mxu0 0.0
    %765 = vmatpush1.msra.mxu0 0.0
    %766 = vmatprep.subr.mxu0 0.0
    %767 = vmatpush1.msra.mxu0 0.0
    %768 = vmatprep.subr.mxu0 0.0
    %769 = vmatpush1.msra.mxu0 0.0
    %770 = vmatprep.subr.mxu0 0.0
    %771 = vmatpush1.msra.mxu0 0.0
    %772 = vmatprep.subr.mxu0 0.0
    %773 = vmatpush1.msra.mxu0 0.0
    %774 = vmatprep.subr.mxu0 0.0
    %775 = vmatpush1.msra.mxu0 0.0
    %776 = vmatprep.subr.mxu0 0.0
    %777 = vmatpush1.msra.mxu0 0.0
    %778 = vmatprep.subr.mxu0 0.0
    %779 = vmatpush1.msra.mxu0 0.0
    %780 = vmatprep.subr.mxu0 0.0
    %781 = vmatpush1.msra.mxu0 0.0
    %782 = vmatprep.subr.mxu0 0.0
    %783 = vmatpush1.msra.mxu0 0.0
    %784 = vmatprep.mubr.f32.mxu0 0.0
    %v785 = vand.u32 %v507, 4294901760
    %v786 = vsub.f32 %v507, %v785
    %787 = vmatmul.mubr.f32.gmra.mrb[0].mxu0 %v786
    %v788 = vpop.f32.mrb[0].mxu0
    %v789 = vadd.f32 %v697, %v788
    %v790 = vpop.f32.mrb[0].mxu0
    %791 = vmatprep.mubr.f32.mxu0 0.0
    %v792 = vand.u32 %v510, 4294901760
    %v793 = vsub.f32 %v510, %v792
    %794 = vmatmul.mubr.f32.gmra.mrb[0].mxu0 %v793
    %v795 = vpop.f32.mrb[0].mxu0
    %v796 = vadd.f32 %v703, %v795
    %v797 = vpop.f32.mrb[0].mxu0
    %798 = vmatprep.mubr.f32.mxu0 0.0
    %v799 = vand.u32 %v513, 4294901760
    %v800 = vsub.f32 %v513, %v799
    %801 = vmatmul.mubr.f32.gmra.mrb[0].mxu0 %v800
    %v802 = vpop.f32.mrb[0].mxu0
    %v803 = vadd.f32 %v709, %v802
    %v804 = vpop.f32.mrb[0].mxu0
    %805 = vmatprep.mubr.f32.mxu0 0.0
    %v806 = vand.u32 %v516, 4294901760
    %v807 = vsub.f32 %v516, %v806
    %808 = vmatmul.mubr.f32.gmra.mrb[0].mxu0 %v807
    %v809 = vpop.f32.mrb[0].mxu0
    %v810 = vadd.f32 %v715, %v809
    %v811 = vpop.f32.mrb[0].mxu0
    %812 = vdwg.mxu0
    %813 = vmatprep.subr.mxu0 0.0
    %v814 = vand.u32 %v505, 4294901760
    %815 = vmatpush1.msra.mxu0 %v814
    %816 = vmatprep.subr.mxu0 0.0
    %817 = vmatpush1.msra.mxu0 0.0
    %818 = vmatprep.subr.mxu0 0.0
    %819 = vmatpush1.msra.mxu0 0.0
    %820 = vmatprep.subr.mxu0 0.0
    %821 = vmatpush1.msra.mxu0 0.0
    %822 = vmatprep.subr.mxu0 0.0
    %823 = vmatpush1.msra.mxu0 0.0
    %824 = vmatprep.subr.mxu0 0.0
    %825 = vmatpush1.msra.mxu0 0.0
    %826 = vmatprep.subr.mxu0 0.0
    %827 = vmatpush1.msra.mxu0 0.0
    %828 = vmatprep.subr.mxu0 0.0
    %829 = vmatpush1.msra.mxu0 0.0
    %830 = vmatprep.subr.mxu0 0.0
    %831 = vmatpush1.msra.mxu0 0.0
    %832 = vmatprep.subr.mxu0 0.0
    %833 = vmatpush1.msra.mxu0 0.0
    %834 = vmatprep.subr.mxu0 0.0
    %835 = vmatpush1.msra.mxu0 0.0
    %836 = vmatprep.subr.mxu0 0.0
    %837 = vmatpush1.msra.mxu0 0.0
    %838 = vmatprep.subr.mxu0 0.0
    %839 = vmatpush1.msra.mxu0 0.0
    %840 = vmatprep.subr.mxu0 0.0
    %841 = vmatpush1.msra.mxu0 0.0
    %842 = vmatprep.subr.mxu0 0.0
    %843 = vmatpush1.msra.mxu0 0.0
    %844 = vmatprep.subr.mxu0 0.0
    %845 = vmatpush1.msra.mxu0 0.0
    %846 = vmatprep.subr.mxu0 0.0
    %847 = vmatpush1.msra.mxu0 0.0
    %848 = vmatprep.subr.mxu0 0.0
    %849 = vmatpush1.msra.mxu0 0.0
    %850 = vmatprep.subr.mxu0 0.0
    %851 = vmatpush1.msra.mxu0 0.0
    %852 = vmatprep.subr.mxu0 0.0
    %853 = vmatpush1.msra.mxu0 0.0
    %854 = vmatprep.subr.mxu0 0.0
    %855 = vmatpush1.msra.mxu0 0.0
    %856 = vmatprep.subr.mxu0 0.0
    %857 = vmatpush1.msra.mxu0 0.0
    %858 = vmatprep.subr.mxu0 0.0
    %859 = vmatpush1.msra.mxu0 0.0
    %860 = vmatprep.subr.mxu0 0.0
    %861 = vmatpush1.msra.mxu0 0.0
    %862 = vmatprep.subr.mxu0 0.0
    %863 = vmatpush1.msra.mxu0 0.0
    %864 = vmatprep.subr.mxu0 0.0
    %865 = vmatpush1.msra.mxu0 0.0
    %866 = vmatprep.subr.mxu0 0.0
    %867 = vmatpush1.msra.mxu0 0.0
    %868 = vmatprep.subr.mxu0 0.0
    %869 = vmatpush1.msra.mxu0 0.0
    %870 = vmatprep.subr.mxu0 0.0
    %871 = vmatpush1.msra.mxu0 0.0
    %872 = vmatprep.subr.mxu0 0.0
    %873 = vmatpush1.msra.mxu0 0.0
    %874 = vmatprep.subr.mxu0 0.0
    %875 = vmatpush1.msra.mxu0 0.0
    %876 = vmatprep.subr.mxu0 0.0
    %877 = vmatpush1.msra.mxu0 0.0
    %878 = vmatprep.mubr.f32.mxu0 0.0
    %v879 = vand.u32 %v507, 4294901760
    %v880 = vsub.f32 %v507, %v879
    %v881 = vand.u32 %v880, 4294901760
    %882 = vmatmul.mubr.f32.gmra.mrb[0].mxu0 %v881
    %v883 = vpop.f32.mrb[0].mxu0
    %v884 = vadd.f32 %v789, %v883
    %v885 = vpop.f32.mrb[0].mxu0
    %886 = vmatprep.mubr.f32.mxu0 0.0
    %v887 = vand.u32 %v510, 4294901760
    %v888 = vsub.f32 %v510, %v887
    %v889 = vand.u32 %v888, 4294901760
    %890 = vmatmul.mubr.f32.gmra.mrb[0].mxu0 %v889
    %v891 = vpop.f32.mrb[0].mxu0
    %v892 = vadd.f32 %v796, %v891
    %v893 = vpop.f32.mrb[0].mxu0
    %894 = vmatprep.mubr.f32.mxu0 0.0
    %v895 = vand.u32 %v513, 4294901760
    %v896 = vsub.f32 %v513, %v895
    %v897 = vand.u32 %v896, 4294901760
    %898 = vmatmul.mubr.f32.gmra.mrb[0].mxu0 %v897
    %v899 = vpop.f32.mrb[0].mxu0
    %v900 = vadd.f32 %v803, %v899
    %v901 = vpop.f32.mrb[0].mxu0
    %902 = vmatprep.mubr.f32.mxu0 0.0
    %v903 = vand.u32 %v516, 4294901760
    %v904 = vsub.f32 %v516, %v903
    %v905 = vand.u32 %v904, 4294901760
    %906 = vmatmul.mubr.f32.gmra.mrb[0].mxu0 %v905
    %v907 = vpop.f32.mrb[0].mxu0
    %v908 = vadd.f32 %v810, %v907
    %v909 = vpop.f32.mrb[0].mxu0
    %910 = vdwg.mxu0
    %911 = vmatprep.subr.mxu0 0.0
    %v912 = vand.u32 %v505, 4294901760
    %v913 = vsub.f32 %v505, %v912
    %v914 = vand.u32 %v913, 4294901760
    %915 = vmatpush1.msra.mxu0 %v914
    %916 = vmatprep.subr.mxu0 0.0
    %917 = vmatpush1.msra.mxu0 0.0
    %918 = vmatprep.subr.mxu0 0.0
    %919 = vmatpush1.msra.mxu0 0.0
    %920 = vmatprep.subr.mxu0 0.0
    %921 = vmatpush1.msra.mxu0 0.0
    %922 = vmatprep.subr.mxu0 0.0
    %923 = vmatpush1.msra.mxu0 0.0
    %924 = vmatprep.subr.mxu0 0.0
    %925 = vmatpush1.msra.mxu0 0.0
    %926 = vmatprep.subr.mxu0 0.0
    %927 = vmatpush1.msra.mxu0 0.0
    %928 = vmatprep.subr.mxu0 0.0
    %929 = vmatpush1.msra.mxu0 0.0
    %930 = vmatprep.subr.mxu0 0.0
    %931 = vmatpush1.msra.mxu0 0.0
    %932 = vmatprep.subr.mxu0 0.0
    %933 = vmatpush1.msra.mxu0 0.0
    %934 = vmatprep.subr.mxu0 0.0
    %935 = vmatpush1.msra.mxu0 0.0
    %936 = vmatprep.subr.mxu0 0.0
    %937 = vmatpush1.msra.mxu0 0.0
    %938 = vmatprep.subr.mxu0 0.0
    %939 = vmatpush1.msra.mxu0 0.0
    %940 = vmatprep.subr.mxu0 0.0
    %941 = vmatpush1.msra.mxu0 0.0
    %942 = vmatprep.subr.mxu0 0.0
    %943 = vmatpush1.msra.mxu0 0.0
    %944 = vmatprep.subr.mxu0 0.0
    %945 = vmatpush1.msra.mxu0 0.0
    %946 = vmatprep.subr.mxu0 0.0
    %947 = vmatpush1.msra.mxu0 0.0
    %948 = vmatprep.subr.mxu0 0.0
    %949 = vmatpush1.msra.mxu0 0.0
    %950 = vmatprep.subr.mxu0 0.0
    %951 = vmatpush1.msra.mxu0 0.0
    %952 = vmatprep.subr.mxu0 0.0
    %953 = vmatpush1.msra.mxu0 0.0
    %954 = vmatprep.subr.mxu0 0.0
    %955 = vmatpush1.msra.mxu0 0.0
    %956 = vmatprep.subr.mxu0 0.0
    %957 = vmatpush1.msra.mxu0 0.0
    %958 = vmatprep.subr.mxu0 0.0
    %959 = vmatpush1.msra.mxu0 0.0
    %960 = vmatprep.subr.mxu0 0.0
    %961 = vmatpush1.msra.mxu0 0.0
    %962 = vmatprep.subr.mxu0 0.0
    %963 = vmatpush1.msra.mxu0 0.0
    %964 = vmatprep.subr.mxu0 0.0
    %965 = vmatpush1.msra.mxu0 0.0
    %966 = vmatprep.subr.mxu0 0.0
    %967 = vmatpush1.msra.mxu0 0.0
    %968 = vmatprep.subr.mxu0 0.0
    %969 = vmatpush1.msra.mxu0 0.0
    %970 = vmatprep.subr.mxu0 0.0
    %971 = vmatpush1.msra.mxu0 0.0
    %972 = vmatprep.subr.mxu0 0.0
    %973 = vmatpush1.msra.mxu0 0.0
    %974 = vmatprep.subr.mxu0 0.0
    %975 = vmatpush1.msra.mxu0 0.0
    %976 = vmatprep.subr.mxu0 0.0
    %977 = vmatpush1.msra.mxu0 0.0
    %978 = vmatprep.mubr.f32.mxu0 0.0
    %v979 = vand.u32 %v507, 4294901760
    %980 = vmatmul.mubr.f32.gmra.mrb[0].mxu0 %v979
    %v981 = vpop.f32.mrb[0].mxu0
    %v982 = vadd.f32 %v884, %v981
    %v983 = vpop.f32.mrb[0].mxu0
    %984 = vmatprep.mubr.f32.mxu0 0.0
    %v985 = vand.u32 %v510, 4294901760
    %986 = vmatmul.mubr.f32.gmra.mrb[0].mxu0 %v985
    %v987 = vpop.f32.mrb[0].mxu0
    %v988 = vadd.f32 %v892, %v987
    %v989 = vpop.f32.mrb[0].mxu0
    %990 = vmatprep.mubr.f32.mxu0 0.0
    %v991 = vand.u32 %v513, 4294901760
    %992 = vmatmul.mubr.f32.gmra.mrb[0].mxu0 %v991
    %v993 = vpop.f32.mrb[0].mxu0
    %v994 = vadd.f32 %v900, %v993
    %v995 = vpop.f32.mrb[0].mxu0
    %996 = vmatprep.mubr.f32.mxu0 0.0
    %v997 = vand.u32 %v516, 4294901760
    %998 = vmatmul.mubr.f32.gmra.mrb[0].mxu0 %v997
    %v999 = vpop.f32.mrb[0].mxu0
    %v1000 = vadd.f32 %v908, %v999
    %v1001 = vpop.f32.mrb[0].mxu0
    %1002 = vdwg.mxu0
    %1003 = vmatprep.subr.mxu0 0.0
    %v1004 = vand.u32 %v505, 4294901760
    %1005 = vmatpush1.msra.mxu0 %v1004
    %1006 = vmatprep.subr.mxu0 0.0
    %1007 = vmatpush1.msra.mxu0 0.0
    %1008 = vmatprep.subr.mxu0 0.0
    %1009 = vmatpush1.msra.mxu0 0.0
    %1010 = vmatprep.subr.mxu0 0.0
    %1011 = vmatpush1.msra.mxu0 0.0
    %1012 = vmatprep.subr.mxu0 0.0
    %1013 = vmatpush1.msra.mxu0 0.0
    %1014 = vmatprep.subr.mxu0 0.0
    %1015 = vmatpush1.msra.mxu0 0.0
    %1016 = vmatprep.subr.mxu0 0.0
    %1017 = vmatpush1.msra.mxu0 0.0
    %1018 = vmatprep.subr.mxu0 0.0
    %1019 = vmatpush1.msra.mxu0 0.0
    %1020 = vmatprep.subr.mxu0 0.0
    %1021 = vmatpush1.msra.mxu0 0.0
    %1022 = vmatprep.subr.mxu0 0.0
    %1023 = vmatpush1.msra.mxu0 0.0
    %1024 = vmatprep.subr.mxu0 0.0
    %1025 = vmatpush1.msra.mxu0 0.0
    %1026 = vmatprep.subr.mxu0 0.0
    %1027 = vmatpush1.msra.mxu0 0.0
    %1028 = vmatprep.subr.mxu0 0.0
    %1029 = vmatpush1.msra.mxu0 0.0
    %1030 = vmatprep.subr.mxu0 0.0
    %1031 = vmatpush1.msra.mxu0 0.0
    %1032 = vmatprep.subr.mxu0 0.0
    %1033 = vmatpush1.msra.mxu0 0.0
    %1034 = vmatprep.subr.mxu0 0.0
    %1035 = vmatpush1.msra.mxu0 0.0
    %1036 = vmatprep.subr.mxu0 0.0
    %1037 = vmatpush1.msra.mxu0 0.0
    %1038 = vmatprep.subr.mxu0 0.0
    %1039 = vmatpush1.msra.mxu0 0.0
    %1040 = vmatprep.subr.mxu0 0.0
    %1041 = vmatpush1.msra.mxu0 0.0
    %1042 = vmatprep.subr.mxu0 0.0
    %1043 = vmatpush1.msra.mxu0 0.0
    %1044 = vmatprep.subr.mxu0 0.0
    %1045 = vmatpush1.msra.mxu0 0.0
    %1046 = vmatprep.subr.mxu0 0.0
    %1047 = vmatpush1.msra.mxu0 0.0
    %1048 = vmatprep.subr.mxu0 0.0
    %1049 = vmatpush1.msra.mxu0 0.0
    %1050 = vmatprep.subr.mxu0 0.0
    %1051 = vmatpush1.msra.mxu0 0.0
    %1052 = vmatprep.subr.mxu0 0.0
    %1053 = vmatpush1.msra.mxu0 0.0
    %1054 = vmatprep.subr.mxu0 0.0
    %1055 = vmatpush1.msra.mxu0 0.0
    %1056 = vmatprep.subr.mxu0 0.0
    %1057 = vmatpush1.msra.mxu0 0.0
    %1058 = vmatprep.subr.mxu0 0.0
    %1059 = vmatpush1.msra.mxu0 0.0
    %1060 = vmatprep.subr.mxu0 0.0
    %1061 = vmatpush1.msra.mxu0 0.0
    %1062 = vmatprep.subr.mxu0 0.0
    %1063 = vmatpush1.msra.mxu0 0.0
    %1064 = vmatprep.subr.mxu0 0.0
    %1065 = vmatpush1.msra.mxu0 0.0
    %1066 = vmatprep.subr.mxu0 0.0
    %1067 = vmatpush1.msra.mxu0 0.0
    %1068 = vmatprep.mubr.f32.mxu0 0.0
    %v1069 = vand.u32 %v507, 4294901760
    %1070 = vmatmul.mubr.f32.gmra.mrb[0].mxu0 %v1069
    %v1071 = vpop.f32.mrb[0].mxu0
    %v1072 = vadd.f32 %v982, %v1071
    %v1073 = vpop.f32.mrb[0].mxu0
    %1074 = vmatprep.mubr.f32.mxu0 0.0
    %v1075 = vand.u32 %v510, 4294901760
    %1076 = vmatmul.mubr.f32.gmra.mrb[0].mxu0 %v1075
    %v1077 = vpop.f32.mrb[0].mxu0
    %v1078 = vadd.f32 %v988, %v1077
    %v1079 = vpop.f32.mrb[0].mxu0
    %1080 = vmatprep.mubr.f32.mxu0 0.0
    %v1081 = vand.u32 %v513, 4294901760
    %1082 = vmatmul.mubr.f32.gmra.mrb[0].mxu0 %v1081
    %v1083 = vpop.f32.mrb[0].mxu0
    %v1084 = vadd.f32 %v994, %v1083
    %v1085 = vpop.f32.mrb[0].mxu0
    %1086 = vmatprep.mubr.f32.mxu0 0.0
    %v1087 = vand.u32 %v516, 4294901760
    %1088 = vmatmul.mubr.f32.gmra.mrb[0].mxu0 %v1087
    %v1089 = vpop.f32.mrb[0].mxu0
    %v1090 = vadd.f32 %v1000, %v1089
    %v1091 = vpop.f32.mrb[0].mxu0
    %1092 = vdwg.mxu0
    %v1093 = vsub.f32 %v1072, %v1084
    %v1094 = vsub.f32 %v1078, %v1090
    %v1095 = vand.u32 2147483647, %v1093
    %v1096 = vand.u32 2147483647, %v1094
    %vm1097 = vcmask 130048
    %v1099 = vsel %vm1097, %v45, 0
    %1101 = vmatprep.subr.mxu0 0.0
    %v1102 = vand.u32 %v1095, 4294901760
    %1103 = vmatpush1.msra.mxu0 %v1102
    %1104 = vmatprep.subr.mxu0 0.0
    %v1105 = vand.u32 %v1096, 4294901760
    %1106 = vmatpush1.msra.mxu0 %v1105
    %1107 = vmatprep.subr.mxu0 0.0
    %1108 = vmatpush1.msra.mxu0 0.0
    %1109 = vmatprep.subr.mxu0 0.0
    %1110 = vmatpush1.msra.mxu0 0.0
    %1111 = vmatprep.subr.mxu0 0.0
    %1112 = vmatpush1.msra.mxu0 0.0
    %1113 = vmatprep.subr.mxu0 0.0
    %1114 = vmatpush1.msra.mxu0 0.0
    %1115 = vmatprep.subr.mxu0 0.0
    %1116 = vmatpush1.msra.mxu0 0.0
    %1117 = vmatprep.subr.mxu0 0.0
    %1118 = vmatpush1.msra.mxu0 0.0
    %1119 = vmatprep.subr.mxu0 0.0
    %1120 = vmatpush1.msra.mxu0 0.0
    %1121 = vmatprep.subr.mxu0 0.0
    %1122 = vmatpush1.msra.mxu0 0.0
    %1123 = vmatprep.subr.mxu0 0.0
    %1124 = vmatpush1.msra.mxu0 0.0
    %1125 = vmatprep.subr.mxu0 0.0
    %1126 = vmatpush1.msra.mxu0 0.0
    %1127 = vmatprep.subr.mxu0 0.0
    %1128 = vmatpush1.msra.mxu0 0.0
    %1129 = vmatprep.subr.mxu0 0.0
    %1130 = vmatpush1.msra.mxu0 0.0
    %1131 = vmatprep.subr.mxu0 0.0
    %1132 = vmatpush1.msra.mxu0 0.0
    %1133 = vmatprep.subr.mxu0 0.0
    %1134 = vmatpush1.msra.mxu0 0.0
    %1135 = vmatprep.subr.mxu0 0.0
    %1136 = vmatpush1.msra.mxu0 0.0
    %1137 = vmatprep.subr.mxu0 0.0
    %1138 = vmatpush1.msra.mxu0 0.0
    %1139 = vmatprep.subr.mxu0 0.0
    %1140 = vmatpush1.msra.mxu0 0.0
    %1141 = vmatprep.subr.mxu0 0.0
    %1142 = vmatpush1.msra.mxu0 0.0
    %1143 = vmatprep.subr.mxu0 0.0
    %1144 = vmatpush1.msra.mxu0 0.0
    %1145 = vmatprep.subr.mxu0 0.0
    %1146 = vmatpush1.msra.mxu0 0.0
    %1147 = vmatprep.subr.mxu0 0.0
    %1148 = vmatpush1.msra.mxu0 0.0
    %1149 = vmatprep.subr.mxu0 0.0
    %1150 = vmatpush1.msra.mxu0 0.0
    %1151 = vmatprep.subr.mxu0 0.0
    %1152 = vmatpush1.msra.mxu0 0.0
    %1153 = vmatprep.subr.mxu0 0.0
    %1154 = vmatpush1.msra.mxu0 0.0
    %1155 = vmatprep.subr.mxu0 0.0
    %1156 = vmatpush1.msra.mxu0 0.0
    %1157 = vmatprep.subr.mxu0 0.0
    %1158 = vmatpush1.msra.mxu0 0.0
    %1159 = vmatprep.subr.mxu0 0.0
    %1160 = vmatpush1.msra.mxu0 0.0
    %1161 = vmatprep.subr.mxu0 0.0
    %1162 = vmatpush1.msra.mxu0 0.0
    %1163 = vmatprep.subr.mxu0 0.0
    %1164 = vmatpush1.msra.mxu0 0.0
    %1165 = vmatprep.subr.mxu0 0.0
    %1166 = vmatpush1.msra.mxu0 0.0
    %1167 = vmatprep.mubr.f32.mxu0 0.0
    %v1168 = vand.u32 %v1099, 4294901760
    %v1169 = vsub.f32 %v1099, %v1168
    %v1170 = vand.u32 %v1169, 4294901760
    %v1171 = vsub.f32 %v1169, %v1170
    %v1172 = vand.u32 %v1171, 4294901760
    %1173 = vmatmul.mubr.f32.gmra.mrb[0].mxu0 %v1172
    %v1174 = vpop.f32.mrb[0].mxu0
    %v1175 = vadd.f32 0.0, %v1174
    %v1176 = vpop.f32.mrb[0].mxu0
    %1177 = vdwg.mxu0
    %1178 = vmatprep.subr.mxu0 0.0
    %v1179 = vand.u32 %v1095, 4294901760
    %v1180 = vsub.f32 %v1095, %v1179
    %v1181 = vand.u32 %v1180, 4294901760
    %v1182 = vsub.f32 %v1180, %v1181
    %v1183 = vand.u32 %v1182, 4294901760
    %1184 = vmatpush1.msra.mxu0 %v1183
    %1185 = vmatprep.subr.mxu0 0.0
    %v1186 = vand.u32 %v1096, 4294901760
    %v1187 = vsub.f32 %v1096, %v1186
    %v1188 = vand.u32 %v1187, 4294901760
    %v1189 = vsub.f32 %v1187, %v1188
    %v1190 = vand.u32 %v1189, 4294901760
    %1191 = vmatpush1.msra.mxu0 %v1190
    %1192 = vmatprep.subr.mxu0 0.0
    %1193 = vmatpush1.msra.mxu0 0.0
    %1194 = vmatprep.subr.mxu0 0.0
    %1195 = vmatpush1.msra.mxu0 0.0
    %1196 = vmatprep.subr.mxu0 0.0
    %1197 = vmatpush1.msra.mxu0 0.0
    %1198 = vmatprep.subr.mxu0 0.0
    %1199 = vmatpush1.msra.mxu0 0.0
    %1200 = vmatprep.subr.mxu0 0.0
    %1201 = vmatpush1.msra.mxu0 0.0
    %1202 = vmatprep.subr.mxu0 0.0
    %1203 = vmatpush1.msra.mxu0 0.0
    %1204 = vmatprep.subr.mxu0 0.0
    %1205 = vmatpush1.msra.mxu0 0.0
    %1206 = vmatprep.subr.mxu0 0.0
    %1207 = vmatpush1.msra.mxu0 0.0
    %1208 = vmatprep.subr.mxu0 0.0
    %1209 = vmatpush1.msra.mxu0 0.0
    %1210 = vmatprep.subr.mxu0 0.0
    %1211 = vmatpush1.msra.mxu0 0.0
    %1212 = vmatprep.subr.mxu0 0.0
    %1213 = vmatpush1.msra.mxu0 0.0
    %1214 = vmatprep.subr.mxu0 0.0
    %1215 = vmatpush1.msra.mxu0 0.0
    %1216 = vmatprep.subr.mxu0 0.0
    %1217 = vmatpush1.msra.mxu0 0.0
    %1218 = vmatprep.subr.mxu0 0.0
    %1219 = vmatpush1.msra.mxu0 0.0
    %1220 = vmatprep.subr.mxu0 0.0
    %1221 = vmatpush1.msra.mxu0 0.0
    %1222 = vmatprep.subr.mxu0 0.0
    %1223 = vmatpush1.msra.mxu0 0.0
    %1224 = vmatprep.subr.mxu0 0.0
    %1225 = vmatpush1.msra.mxu0 0.0
    %1226 = vmatprep.subr.mxu0 0.0
    %1227 = vmatpush1.msra.mxu0 0.0
    %1228 = vmatprep.subr.mxu0 0.0
    %1229 = vmatpush1.msra.mxu0 0.0
    %1230 = vmatprep.subr.mxu0 0.0
    %1231 = vmatpush1.msra.mxu0 0.0
    %1232 = vmatprep.subr.mxu0 0.0
    %1233 = vmatpush1.msra.mxu0 0.0
    %1234 = vmatprep.subr.mxu0 0.0
    %1235 = vmatpush1.msra.mxu0 0.0
    %1236 = vmatprep.subr.mxu0 0.0
    %1237 = vmatpush1.msra.mxu0 0.0
    %1238 = vmatprep.subr.mxu0 0.0
    %1239 = vmatpush1.msra.mxu0 0.0
    %1240 = vmatprep.subr.mxu0 0.0
    %1241 = vmatpush1.msra.mxu0 0.0
    %1242 = vmatprep.subr.mxu0 0.0
    %1243 = vmatpush1.msra.mxu0 0.0
    %1244 = vmatprep.subr.mxu0 0.0
    %1245 = vmatpush1.msra.mxu0 0.0
    %1246 = vmatprep.subr.mxu0 0.0
    %1247 = vmatpush1.msra.mxu0 0.0
    %1248 = vmatprep.subr.mxu0 0.0
    %1249 = vmatpush1.msra.mxu0 0.0
    %1250 = vmatprep.subr.mxu0 0.0
    %1251 = vmatpush1.msra.mxu0 0.0
    %1252 = vmatprep.mubr.f32.mxu0 0.0
    %v1253 = vand.u32 %v1099, 4294901760
    %1254 = vmatmul.mubr.f32.gmra.mrb[0].mxu0 %v1253
    %v1255 = vpop.f32.mrb[0].mxu0
    %v1256 = vadd.f32 %v1175, %v1255
    %v1257 = vpop.f32.mrb[0].mxu0
    %1258 = vdwg.mxu0
    %1259 = vmatprep.subr.mxu0 0.0
    %v1260 = vand.u32 %v1095, 4294901760
    %v1261 = vsub.f32 %v1095, %v1260
    %1262 = vmatpush1.msra.mxu0 %v1261
    %1263 = vmatprep.subr.mxu0 0.0
    %v1264 = vand.u32 %v1096, 4294901760
    %v1265 = vsub.f32 %v1096, %v1264
    %1266 = vmatpush1.msra.mxu0 %v1265
    %1267 = vmatprep.subr.mxu0 0.0
    %1268 = vmatpush1.msra.mxu0 0.0
    %1269 = vmatprep.subr.mxu0 0.0
    %1270 = vmatpush1.msra.mxu0 0.0
    %1271 = vmatprep.subr.mxu0 0.0
    %1272 = vmatpush1.msra.mxu0 0.0
    %1273 = vmatprep.subr.mxu0 0.0
    %1274 = vmatpush1.msra.mxu0 0.0
    %1275 = vmatprep.subr.mxu0 0.0
    %1276 = vmatpush1.msra.mxu0 0.0
    %1277 = vmatprep.subr.mxu0 0.0
    %1278 = vmatpush1.msra.mxu0 0.0
    %1279 = vmatprep.subr.mxu0 0.0
    %1280 = vmatpush1.msra.mxu0 0.0
    %1281 = vmatprep.subr.mxu0 0.0
    %1282 = vmatpush1.msra.mxu0 0.0
    %1283 = vmatprep.subr.mxu0 0.0
    %1284 = vmatpush1.msra.mxu0 0.0
    %1285 = vmatprep.subr.mxu0 0.0
    %1286 = vmatpush1.msra.mxu0 0.0
    %1287 = vmatprep.subr.mxu0 0.0
    %1288 = vmatpush1.msra.mxu0 0.0
    %1289 = vmatprep.subr.mxu0 0.0
    %1290 = vmatpush1.msra.mxu0 0.0
    %1291 = vmatprep.subr.mxu0 0.0
    %1292 = vmatpush1.msra.mxu0 0.0
    %1293 = vmatprep.subr.mxu0 0.0
    %1294 = vmatpush1.msra.mxu0 0.0
    %1295 = vmatprep.subr.mxu0 0.0
    %1296 = vmatpush1.msra.mxu0 0.0
    %1297 = vmatprep.subr.mxu0 0.0
    %1298 = vmatpush1.msra.mxu0 0.0
    %1299 = vmatprep.subr.mxu0 0.0
    %1300 = vmatpush1.msra.mxu0 0.0
    %1301 = vmatprep.subr.mxu0 0.0
    %1302 = vmatpush1.msra.mxu0 0.0
    %1303 = vmatprep.subr.mxu0 0.0
    %1304 = vmatpush1.msra.mxu0 0.0
    %1305 = vmatprep.subr.mxu0 0.0
    %1306 = vmatpush1.msra.mxu0 0.0
    %1307 = vmatprep.subr.mxu0 0.0
    %1308 = vmatpush1.msra.mxu0 0.0
    %1309 = vmatprep.subr.mxu0 0.0
    %1310 = vmatpush1.msra.mxu0 0.0
    %1311 = vmatprep.subr.mxu0 0.0
    %1312 = vmatpush1.msra.mxu0 0.0
    %1313 = vmatprep.subr.mxu0 0.0
    %1314 = vmatpush1.msra.mxu0 0.0
    %1315 = vmatprep.subr.mxu0 0.0
    %1316 = vmatpush1.msra.mxu0 0.0
    %1317 = vmatprep.subr.mxu0 0.0
    %1318 = vmatpush1.msra.mxu0 0.0
    %1319 = vmatprep.subr.mxu0 0.0
    %1320 = vmatpush1.msra.mxu0 0.0
    %1321 = vmatprep.subr.mxu0 0.0
    %1322 = vmatpush1.msra.mxu0 0.0
    %1323 = vmatprep.subr.mxu0 0.0
    %1324 = vmatpush1.msra.mxu0 0.0
    %1325 = vmatprep.subr.mxu0 0.0
    %1326 = vmatpush1.msra.mxu0 0.0
    %1327 = vmatprep.mubr.f32.mxu0 0.0
    %v1328 = vand.u32 %v1099, 4294901760
    %v1329 = vsub.f32 %v1099, %v1328
    %1330 = vmatmul.mubr.f32.gmra.mrb[0].mxu0 %v1329
    %v1331 = vpop.f32.mrb[0].mxu0
    %v1332 = vadd.f32 %v1256, %v1331
    %v1333 = vpop.f32.mrb[0].mxu0
    %1334 = vdwg.mxu0
    %1335 = vmatprep.subr.mxu0 0.0
    %v1336 = vand.u32 %v1095, 4294901760
    %1337 = vmatpush1.msra.mxu0 %v1336
    %1338 = vmatprep.subr.mxu0 0.0
    %v1339 = vand.u32 %v1096, 4294901760
    %1340 = vmatpush1.msra.mxu0 %v1339
    %1341 = vmatprep.subr.mxu0 0.0
    %1342 = vmatpush1.msra.mxu0 0.0
    %1343 = vmatprep.subr.mxu0 0.0
    %1344 = vmatpush1.msra.mxu0 0.0
    %1345 = vmatprep.subr.mxu0 0.0
    %1346 = vmatpush1.msra.mxu0 0.0
    %1347 = vmatprep.subr.mxu0 0.0
    %1348 = vmatpush1.msra.mxu0 0.0
    %1349 = vmatprep.subr.mxu0 0.0
    %1350 = vmatpush1.msra.mxu0 0.0
    %1351 = vmatprep.subr.mxu0 0.0
    %1352 = vmatpush1.msra.mxu0 0.0
    %1353 = vmatprep.subr.mxu0 0.0
    %1354 = vmatpush1.msra.mxu0 0.0
    %1355 = vmatprep.subr.mxu0 0.0
    %1356 = vmatpush1.msra.mxu0 0.0
    %1357 = vmatprep.subr.mxu0 0.0
    %1358 = vmatpush1.msra.mxu0 0.0
    %1359 = vmatprep.subr.mxu0 0.0
    %1360 = vmatpush1.msra.mxu0 0.0
    %1361 = vmatprep.subr.mxu0 0.0
    %1362 = vmatpush1.msra.mxu0 0.0
    %1363 = vmatprep.subr.mxu0 0.0
    %1364 = vmatpush1.msra.mxu0 0.0
    %1365 = vmatprep.subr.mxu0 0.0
    %1366 = vmatpush1.msra.mxu0 0.0
    %1367 = vmatprep.subr.mxu0 0.0
    %1368 = vmatpush1.msra.mxu0 0.0
    %1369 = vmatprep.subr.mxu0 0.0
    %1370 = vmatpush1.msra.mxu0 0.0
    %1371 = vmatprep.subr.mxu0 0.0
    %1372 = vmatpush1.msra.mxu0 0.0
    %1373 = vmatprep.subr.mxu0 0.0
    %1374 = vmatpush1.msra.mxu0 0.0
    %1375 = vmatprep.subr.mxu0 0.0
    %1376 = vmatpush1.msra.mxu0 0.0
    %1377 = vmatprep.subr.mxu0 0.0
    %1378 = vmatpush1.msra.mxu0 0.0
    %1379 = vmatprep.subr.mxu0 0.0
    %1380 = vmatpush1.msra.mxu0 0.0
    %1381 = vmatprep.subr.mxu0 0.0
    %1382 = vmatpush1.msra.mxu0 0.0
    %1383 = vmatprep.subr.mxu0 0.0
    %1384 = vmatpush1.msra.mxu0 0.0
    %1385 = vmatprep.subr.mxu0 0.0
    %1386 = vmatpush1.msra.mxu0 0.0
    %1387 = vmatprep.subr.mxu0 0.0
    %1388 = vmatpush1.msra.mxu0 0.0
    %1389 = vmatprep.subr.mxu0 0.0
    %1390 = vmatpush1.msra.mxu0 0.0
    %1391 = vmatprep.subr.mxu0 0.0
    %1392 = vmatpush1.msra.mxu0 0.0
    %1393 = vmatprep.subr.mxu0 0.0
    %1394 = vmatpush1.msra.mxu0 0.0
    %1395 = vmatprep.subr.mxu0 0.0
    %1396 = vmatpush1.msra.mxu0 0.0
    %1397 = vmatprep.subr.mxu0 0.0
    %1398 = vmatpush1.msra.mxu0 0.0
    %1399 = vmatprep.subr.mxu0 0.0
    %1400 = vmatpush1.msra.mxu0 0.0
    %1401 = vmatprep.mubr.f32.mxu0 0.0
    %v1402 = vand.u32 %v1099, 4294901760
    %v1403 = vsub.f32 %v1099, %v1402
    %v1404 = vand.u32 %v1403, 4294901760
    %1405 = vmatmul.mubr.f32.gmra.mrb[0].mxu0 %v1404
    %v1406 = vpop.f32.mrb[0].mxu0
    %v1407 = vadd.f32 %v1332, %v1406
    %v1408 = vpop.f32.mrb[0].mxu0
    %1409 = vdwg.mxu0
    %1410 = vmatprep.subr.mxu0 0.0
    %v1411 = vand.u32 %v1095, 4294901760
    %v1412 = vsub.f32 %v1095, %v1411
    %v1413 = vand.u32 %v1412, 4294901760
    %1414 = vmatpush1.msra.mxu0 %v1413
    %1415 = vmatprep.subr.mxu0 0.0
    %v1416 = vand.u32 %v1096, 4294901760
    %v1417 = vsub.f32 %v1096, %v1416
    %v1418 = vand.u32 %v1417, 4294901760
    %1419 = vmatpush1.msra.mxu0 %v1418
    %1420 = vmatprep.subr.mxu0 0.0
    %1421 = vmatpush1.msra.mxu0 0.0
    %1422 = vmatprep.subr.mxu0 0.0
    %1423 = vmatpush1.msra.mxu0 0.0
    %1424 = vmatprep.subr.mxu0 0.0
    %1425 = vmatpush1.msra.mxu0 0.0
    %1426 = vmatprep.subr.mxu0 0.0
    %1427 = vmatpush1.msra.mxu0 0.0
    %1428 = vmatprep.subr.mxu0 0.0
    %1429 = vmatpush1.msra.mxu0 0.0
    %1430 = vmatprep.subr.mxu0 0.0
    %1431 = vmatpush1.msra.mxu0 0.0
    %1432 = vmatprep.subr.mxu0 0.0
    %1433 = vmatpush1.msra.mxu0 0.0
    %1434 = vmatprep.subr.mxu0 0.0
    %1435 = vmatpush1.msra.mxu0 0.0
    %1436 = vmatprep.subr.mxu0 0.0
    %1437 = vmatpush1.msra.mxu0 0.0
    %1438 = vmatprep.subr.mxu0 0.0
    %1439 = vmatpush1.msra.mxu0 0.0
    %1440 = vmatprep.subr.mxu0 0.0
    %1441 = vmatpush1.msra.mxu0 0.0
    %1442 = vmatprep.subr.mxu0 0.0
    %1443 = vmatpush1.msra.mxu0 0.0
    %1444 = vmatprep.subr.mxu0 0.0
    %1445 = vmatpush1.msra.mxu0 0.0
    %1446 = vmatprep.subr.mxu0 0.0
    %1447 = vmatpush1.msra.mxu0 0.0
    %1448 = vmatprep.subr.mxu0 0.0
    %1449 = vmatpush1.msra.mxu0 0.0
    %1450 = vmatprep.subr.mxu0 0.0
    %1451 = vmatpush1.msra.mxu0 0.0
    %1452 = vmatprep.subr.mxu0 0.0
    %1453 = vmatpush1.msra.mxu0 0.0
    %1454 = vmatprep.subr.mxu0 0.0
    %1455 = vmatpush1.msra.mxu0 0.0
    %1456 = vmatprep.subr.mxu0 0.0
    %1457 = vmatpush1.msra.mxu0 0.0
    %1458 = vmatprep.subr.mxu0 0.0
    %1459 = vmatpush1.msra.mxu0 0.0
    %1460 = vmatprep.subr.mxu0 0.0
    %1461 = vmatpush1.msra.mxu0 0.0
    %1462 = vmatprep.subr.mxu0 0.0
    %1463 = vmatpush1.msra.mxu0 0.0
    %1464 = vmatprep.subr.mxu0 0.0
    %1465 = vmatpush1.msra.mxu0 0.0
    %1466 = vmatprep.subr.mxu0 0.0
    %1467 = vmatpush1.msra.mxu0 0.0
    %1468 = vmatprep.subr.mxu0 0.0
    %1469 = vmatpush1.msra.mxu0 0.0
    %1470 = vmatprep.subr.mxu0 0.0
    %1471 = vmatpush1.msra.mxu0 0.0
    %1472 = vmatprep.subr.mxu0 0.0
    %1473 = vmatpush1.msra.mxu0 0.0
    %1474 = vmatprep.subr.mxu0 0.0
    %1475 = vmatpush1.msra.mxu0 0.0
    %1476 = vmatprep.subr.mxu0 0.0
    %1477 = vmatpush1.msra.mxu0 0.0
    %1478 = vmatprep.subr.mxu0 0.0
    %1479 = vmatpush1.msra.mxu0 0.0
    %1480 = vmatprep.mubr.f32.mxu0 0.0
    %v1481 = vand.u32 %v1099, 4294901760
    %1482 = vmatmul.mubr.f32.gmra.mrb[0].mxu0 %v1481
    %v1483 = vpop.f32.mrb[0].mxu0
    %v1484 = vadd.f32 %v1407, %v1483
    %v1485 = vpop.f32.mrb[0].mxu0
    %1486 = vdwg.mxu0
    %1487 = vmatprep.subr.mxu0 0.0
    %v1488 = vand.u32 %v1095, 4294901760
    %1489 = vmatpush1.msra.mxu0 %v1488
    %1490 = vmatprep.subr.mxu0 0.0
    %v1491 = vand.u32 %v1096, 4294901760
    %1492 = vmatpush1.msra.mxu0 %v1491
    %1493 = vmatprep.subr.mxu0 0.0
    %1494 = vmatpush1.msra.mxu0 0.0
    %1495 = vmatprep.subr.mxu0 0.0
    %1496 = vmatpush1.msra.mxu0 0.0
    %1497 = vmatprep.subr.mxu0 0.0
    %1498 = vmatpush1.msra.mxu0 0.0
    %1499 = vmatprep.subr.mxu0 0.0
    %1500 = vmatpush1.msra.mxu0 0.0
    %1501 = vmatprep.subr.mxu0 0.0
    %1502 = vmatpush1.msra.mxu0 0.0
    %1503 = vmatprep.subr.mxu0 0.0
    %1504 = vmatpush1.msra.mxu0 0.0
    %1505 = vmatprep.subr.mxu0 0.0
    %1506 = vmatpush1.msra.mxu0 0.0
    %1507 = vmatprep.subr.mxu0 0.0
    %1508 = vmatpush1.msra.mxu0 0.0
    %1509 = vmatprep.subr.mxu0 0.0
    %1510 = vmatpush1.msra.mxu0 0.0
    %1511 = vmatprep.subr.mxu0 0.0
    %1512 = vmatpush1.msra.mxu0 0.0
    %1513 = vmatprep.subr.mxu0 0.0
    %1514 = vmatpush1.msra.mxu0 0.0
    %1515 = vmatprep.subr.mxu0 0.0
    %1516 = vmatpush1.msra.mxu0 0.0
    %1517 = vmatprep.subr.mxu0 0.0
    %1518 = vmatpush1.msra.mxu0 0.0
    %1519 = vmatprep.subr.mxu0 0.0
    %1520 = vmatpush1.msra.mxu0 0.0
    %1521 = vmatprep.subr.mxu0 0.0
    %1522 = vmatpush1.msra.mxu0 0.0
    %1523 = vmatprep.subr.mxu0 0.0
    %1524 = vmatpush1.msra.mxu0 0.0
    %1525 = vmatprep.subr.mxu0 0.0
    %1526 = vmatpush1.msra.mxu0 0.0
    %1527 = vmatprep.subr.mxu0 0.0
    %1528 = vmatpush1.msra.mxu0 0.0
    %1529 = vmatprep.subr.mxu0 0.0
    %1530 = vmatpush1.msra.mxu0 0.0
    %1531 = vmatprep.subr.mxu0 0.0
    %1532 = vmatpush1.msra.mxu0 0.0
    %1533 = vmatprep.subr.mxu0 0.0
    %1534 = vmatpush1.msra.mxu0 0.0
    %1535 = vmatprep.subr.mxu0 0.0
    %1536 = vmatpush1.msra.mxu0 0.0
    %1537 = vmatprep.subr.mxu0 0.0
    %1538 = vmatpush1.msra.mxu0 0.0
    %1539 = vmatprep.subr.mxu0 0.0
    %1540 = vmatpush1.msra.mxu0 0.0
    %1541 = vmatprep.subr.mxu0 0.0
    %1542 = vmatpush1.msra.mxu0 0.0
    %1543 = vmatprep.subr.mxu0 0.0
    %1544 = vmatpush1.msra.mxu0 0.0
    %1545 = vmatprep.subr.mxu0 0.0
    %1546 = vmatpush1.msra.mxu0 0.0
    %1547 = vmatprep.subr.mxu0 0.0
    %1548 = vmatpush1.msra.mxu0 0.0
    %1549 = vmatprep.subr.mxu0 0.0
    %1550 = vmatpush1.msra.mxu0 0.0
    %1551 = vmatprep.subr.mxu0 0.0
    %1552 = vmatpush1.msra.mxu0 0.0
    %1553 = vmatprep.mubr.f32.mxu0 0.0
    %v1554 = vand.u32 %v1099, 4294901760
    %1555 = vmatmul.mubr.f32.gmra.mrb[0].mxu0 %v1554
    %v1556 = vpop.f32.mrb[0].mxu0
    %v1557 = vadd.f32 %v1484, %v1556
    %v1558 = vpop.f32.mrb[0].mxu0
    %1559 = vdwg.mxu0
    %v1560 = vld [vmem:[#allocation5 + $0x8] sm:$0xff]
    %v1561 = vld [vmem:[#allocation5 + $0x10] sm:$0xff]
    %v1562 = vld [vmem:[#allocation5 + $0x18] sm:$0xff]
    %v1563 = vld [vmem:[#allocation5 + $0x20] sm:$0xff]
    %v1564 = vld [vmem:[#allocation5 + $0x69] sm:$0x1]
    %1566 = vrot.lane.b32.xlu0 %v1557, 16
    %v1567 = vpop.permute.xlu0 %1566
    %v1569 = vsel %vm1097, %v505, %v1567
    %v1570 = vlaneseq
    %v1571 = vshrl.u32 %v1570, 7
    %v1572 = vsub.s32 0, %v1571
    %v1573 = vrot.slane %v1564, %v1572
    %vm1574 = vcmask 261120
    %v1576 = vsel %vm1574, %v1569, 0
    %1578 = vmatprep.subr.mxu0 0.0
    %v1579 = vand.u32 %v1560, 4294901760
    %1580 = vmatpush1.msra.mxu0 %v1579
    %1581 = vmatprep.subr.mxu0 0.0
    %v1582 = vand.u32 %v1561, 4294901760
    %1583 = vmatpush1.msra.mxu0 %v1582
    %1584 = vmatprep.subr.mxu0 0.0
    %v1585 = vand.u32 %v1562, 4294901760
    %1586 = vmatpush1.msra.mxu0 %v1585
    %1587 = vmatprep.subr.mxu0 0.0
    %v1588 = vand.u32 %v1563, 4294901760
    %1589 = vmatpush1.msra.mxu0 %v1588
    %1590 = vmatprep.subr.mxu0 0.0
    %1591 = vmatpush1.msra.mxu0 0.0
    %1592 = vmatprep.subr.mxu0 0.0
    %1593 = vmatpush1.msra.mxu0 0.0
    %1594 = vmatprep.subr.mxu0 0.0
    %1595 = vmatpush1.msra.mxu0 0.0
    %1596 = vmatprep.subr.mxu0 0.0
    %1597 = vmatpush1.msra.mxu0 0.0
    %1598 = vmatprep.subr.mxu0 0.0
    %1599 = vmatpush1.msra.mxu0 0.0
    %1600 = vmatprep.subr.mxu0 0.0
    %1601 = vmatpush1.msra.mxu0 0.0
    %1602 = vmatprep.subr.mxu0 0.0
    %1603 = vmatpush1.msra.mxu0 0.0
    %1604 = vmatprep.subr.mxu0 0.0
    %1605 = vmatpush1.msra.mxu0 0.0
    %1606 = vmatprep.subr.mxu0 0.0
    %1607 = vmatpush1.msra.mxu0 0.0
    %1608 = vmatprep.subr.mxu0 0.0
    %1609 = vmatpush1.msra.mxu0 0.0
    %1610 = vmatprep.subr.mxu0 0.0
    %1611 = vmatpush1.msra.mxu0 0.0
    %1612 = vmatprep.subr.mxu0 0.0
    %1613 = vmatpush1.msra.mxu0 0.0
    %1614 = vmatprep.subr.mxu0 0.0
    %1615 = vmatpush1.msra.mxu0 0.0
    %1616 = vmatprep.subr.mxu0 0.0
    %1617 = vmatpush1.msra.mxu0 0.0
    %1618 = vmatprep.subr.mxu0 0.0
    %1619 = vmatpush1.msra.mxu0 0.0
    %1620 = vmatprep.subr.mxu0 0.0
    %1621 = vmatpush1.msra.mxu0 0.0
    %1622 = vmatprep.subr.mxu0 0.0
    %1623 = vmatpush1.msra.mxu0 0.0
    %1624 = vmatprep.subr.mxu0 0.0
    %1625 = vmatpush1.msra.mxu0 0.0
    %1626 = vmatprep.subr.mxu0 0.0
    %1627 = vmatpush1.msra.mxu0 0.0
    %1628 = vmatprep.subr.mxu0 0.0
    %1629 = vmatpush1.msra.mxu0 0.0
    %1630 = vmatprep.subr.mxu0 0.0
    %1631 = vmatpush1.msra.mxu0 0.0
    %1632 = vmatprep.subr.mxu0 0.0
    %1633 = vmatpush1.msra.mxu0 0.0
    %1634 = vmatprep.subr.mxu0 0.0
    %1635 = vmatpush1.msra.mxu0 0.0
    %1636 = vmatprep.subr.mxu0 0.0
    %1637 = vmatpush1.msra.mxu0 0.0
    %1638 = vmatprep.subr.mxu0 0.0
    %1639 = vmatpush1.msra.mxu0 0.0
    %1640 = vmatprep.subr.mxu0 0.0
    %1641 = vmatpush1.msra.mxu0 0.0
    %1642 = vmatprep.subr.mxu0 0.0
    %1643 = vmatpush1.msra.mxu0 0.0
    %1644 = vmatprep.subr.mxu0 0.0
    %1645 = vmatpush1.msra.mxu0 0.0
    %1646 = vmatprep.mubr.f32.mxu0 0.0
    %v1647 = vand.u32 %v1576, 4294901760
    %v1648 = vsub.f32 %v1576, %v1647
    %v1649 = vand.u32 %v1648, 4294901760
    %v1650 = vsub.f32 %v1648, %v1649
    %v1651 = vand.u32 %v1650, 4294901760
    %1652 = vmatmul.mubr.f32.gmra.mrb[0].mxu0 %v1651
    %v1653 = vpop.f32.mrb[0].mxu0
    %v1654 = vadd.f32 %v1573, %v1653
    %v1655 = vpop.f32.mrb[0].mxu0
    %1656 = vdwg.mxu0
    %1657 = vmatprep.subr.mxu0 0.0
    %v1658 = vand.u32 %v1560, 4294901760
    %v1659 = vsub.f32 %v1560, %v1658
    %v1660 = vand.u32 %v1659, 4294901760
    %v1661 = vsub.f32 %v1659, %v1660
    %v1662 = vand.u32 %v1661, 4294901760
    %1663 = vmatpush1.msra.mxu0 %v1662
    %1664 = vmatprep.subr.mxu0 0.0
    %v1665 = vand.u32 %v1561, 4294901760
    %v1666 = vsub.f32 %v1561, %v1665
    %v1667 = vand.u32 %v1666, 4294901760
    %v1668 = vsub.f32 %v1666, %v1667
    %v1669 = vand.u32 %v1668, 4294901760
    %1670 = vmatpush1.msra.mxu0 %v1669
    %1671 = vmatprep.subr.mxu0 0.0
    %v1672 = vand.u32 %v1562, 4294901760
    %v1673 = vsub.f32 %v1562, %v1672
    %v1674 = vand.u32 %v1673, 4294901760
    %v1675 = vsub.f32 %v1673, %v1674
    %v1676 = vand.u32 %v1675, 4294901760
    %1677 = vmatpush1.msra.mxu0 %v1676
    %1678 = vmatprep.subr.mxu0 0.0
    %v1679 = vand.u32 %v1563, 4294901760
    %v1680 = vsub.f32 %v1563, %v1679
    %v1681 = vand.u32 %v1680, 4294901760
    %v1682 = vsub.f32 %v1680, %v1681
    %v1683 = vand.u32 %v1682, 4294901760
    %1684 = vmatpush1.msra.mxu0 %v1683
    %1685 = vmatprep.subr.mxu0 0.0
    %1686 = vmatpush1.msra.mxu0 0.0
    %1687 = vmatprep.subr.mxu0 0.0
    %1688 = vmatpush1.msra.mxu0 0.0
    %1689 = vmatprep.subr.mxu0 0.0
    %1690 = vmatpush1.msra.mxu0 0.0
    %1691 = vmatprep.subr.mxu0 0.0
    %1692 = vmatpush1.msra.mxu0 0.0
    %1693 = vmatprep.subr.mxu0 0.0
    %1694 = vmatpush1.msra.mxu0 0.0
    %1695 = vmatprep.subr.mxu0 0.0
    %1696 = vmatpush1.msra.mxu0 0.0
    %1697 = vmatprep.subr.mxu0 0.0
    %1698 = vmatpush1.msra.mxu0 0.0
    %1699 = vmatprep.subr.mxu0 0.0
    %1700 = vmatpush1.msra.mxu0 0.0
    %1701 = vmatprep.subr.mxu0 0.0
    %1702 = vmatpush1.msra.mxu0 0.0
    %1703 = vmatprep.subr.mxu0 0.0
    %1704 = vmatpush1.msra.mxu0 0.0
    %1705 = vmatprep.subr.mxu0 0.0
    %1706 = vmatpush1.msra.mxu0 0.0
    %1707 = vmatprep.subr.mxu0 0.0
    %1708 = vmatpush1.msra.mxu0 0.0
    %1709 = vmatprep.subr.mxu0 0.0
    %1710 = vmatpush1.msra.mxu0 0.0
    %1711 = vmatprep.subr.mxu0 0.0
    %1712 = vmatpush1.msra.mxu0 0.0
    %1713 = vmatprep.subr.mxu0 0.0
    %1714 = vmatpush1.msra.mxu0 0.0
    %1715 = vmatprep.subr.mxu0 0.0
    %1716 = vmatpush1.msra.mxu0 0.0
    %1717 = vmatprep.subr.mxu0 0.0
    %1718 = vmatpush1.msra.mxu0 0.0
    %1719 = vmatprep.subr.mxu0 0.0
    %1720 = vmatpush1.msra.mxu0 0.0
    %1721 = vmatprep.subr.mxu0 0.0
    %1722 = vmatpush1.msra.mxu0 0.0
    %1723 = vmatprep.subr.mxu0 0.0
    %1724 = vmatpush1.msra.mxu0 0.0
    %1725 = vmatprep.subr.mxu0 0.0
    %1726 = vmatpush1.msra.mxu0 0.0
    %1727 = vmatprep.subr.mxu0 0.0
    %1728 = vmatpush1.msra.mxu0 0.0
    %1729 = vmatprep.subr.mxu0 0.0
    %1730 = vmatpush1.msra.mxu0 0.0
    %1731 = vmatprep.subr.mxu0 0.0
    %1732 = vmatpush1.msra.mxu0 0.0
    %1733 = vmatprep.subr.mxu0 0.0
    %1734 = vmatpush1.msra.mxu0 0.0
    %1735 = vmatprep.subr.mxu0 0.0
    %1736 = vmatpush1.msra.mxu0 0.0
    %1737 = vmatprep.subr.mxu0 0.0
    %1738 = vmatpush1.msra.mxu0 0.0
    %1739 = vmatprep.subr.mxu0 0.0
    %1740 = vmatpush1.msra.mxu0 0.0
    %1741 = vmatprep.mubr.f32.mxu0 0.0
    %v1742 = vand.u32 %v1576, 4294901760
    %1743 = vmatmul.mubr.f32.gmra.mrb[0].mxu0 %v1742
    %v1744 = vpop.f32.mrb[0].mxu0
    %v1745 = vadd.f32 %v1654, %v1744
    %v1746 = vpop.f32.mrb[0].mxu0
    %1747 = vdwg.mxu0
    %1748 = vmatprep.subr.mxu0 0.0
    %v1749 = vand.u32 %v1560, 4294901760
    %v1750 = vsub.f32 %v1560, %v1749
    %1751 = vmatpush1.msra.mxu0 %v1750
    %1752 = vmatprep.subr.mxu0 0.0
    %v1753 = vand.u32 %v1561, 4294901760
    %v1754 = vsub.f32 %v1561, %v1753
    %1755 = vmatpush1.msra.mxu0 %v1754
    %1756 = vmatprep.subr.mxu0 0.0
    %v1757 = vand.u32 %v1562, 4294901760
    %v1758 = vsub.f32 %v1562, %v1757
    %1759 = vmatpush1.msra.mxu0 %v1758
    %1760 = vmatprep.subr.mxu0 0.0
    %v1761 = vand.u32 %v1563, 4294901760
    %v1762 = vsub.f32 %v1563, %v1761
    %1763 = vmatpush1.msra.mxu0 %v1762
    %1764 = vmatprep.subr.mxu0 0.0
    %1765 = vmatpush1.msra.mxu0 0.0
    %1766 = vmatprep.subr.mxu0 0.0
    %1767 = vmatpush1.msra.mxu0 0.0
    %1768 = vmatprep.subr.mxu0 0.0
    %1769 = vmatpush1.msra.mxu0 0.0
    %1770 = vmatprep.subr.mxu0 0.0
    %1771 = vmatpush1.msra.mxu0 0.0
    %1772 = vmatprep.subr.mxu0 0.0
    %1773 = vmatpush1.msra.mxu0 0.0
    %1774 = vmatprep.subr.mxu0 0.0
    %1775 = vmatpush1.msra.mxu0 0.0
    %1776 = vmatprep.subr.mxu0 0.0
    %1777 = vmatpush1.msra.mxu0 0.0
    %1778 = vmatprep.subr.mxu0 0.0
    %1779 = vmatpush1.msra.mxu0 0.0
    %1780 = vmatprep.subr.mxu0 0.0
    %1781 = vmatpush1.msra.mxu0 0.0
    %1782 = vmatprep.subr.mxu0 0.0
    %1783 = vmatpush1.msra.mxu0 0.0
    %1784 = vmatprep.subr.mxu0 0.0
    %1785 = vmatpush1.msra.mxu0 0.0
    %1786 = vmatprep.subr.mxu0 0.0
    %1787 = vmatpush1.msra.mxu0 0.0
    %1788 = vmatprep.subr.mxu0 0.0
    %1789 = vmatpush1.msra.mxu0 0.0
    %1790 = vmatprep.subr.mxu0 0.0
    %1791 = vmatpush1.msra.mxu0 0.0
    %1792 = vmatprep.subr.mxu0 0.0
    %1793 = vmatpush1.msra.mxu0 0.0
    %1794 = vmatprep.subr.mxu0 0.0
    %1795 = vmatpush1.msra.mxu0 0.0
    %1796 = vmatprep.subr.mxu0 0.0
    %1797 = vmatpush1.msra.mxu0 0.0
    %1798 = vmatprep.subr.mxu0 0.0
    %1799 = vmatpush1.msra.mxu0 0.0
    %1800 = vmatprep.subr.mxu0 0.0
    %1801 = vmatpush1.msra.mxu0 0.0
    %1802 = vmatprep.subr.mxu0 0.0
    %1803 = vmatpush1.msra.mxu0 0.0
    %1804 = vmatprep.subr.mxu0 0.0
    %1805 = vmatpush1.msra.mxu0 0.0
    %1806 = vmatprep.subr.mxu0 0.0
    %1807 = vmatpush1.msra.mxu0 0.0
    %1808 = vmatprep.subr.mxu0 0.0
    %1809 = vmatpush1.msra.mxu0 0.0
    %1810 = vmatprep.subr.mxu0 0.0
    %1811 = vmatpush1.msra.mxu0 0.0
    %1812 = vmatprep.subr.mxu0 0.0
    %1813 = vmatpush1.msra.mxu0 0.0
    %1814 = vmatprep.subr.mxu0 0.0
    %1815 = vmatpush1.msra.mxu0 0.0
    %1816 = vmatprep.subr.mxu0 0.0
    %1817 = vmatpush1.msra.mxu0 0.0
    %1818 = vmatprep.subr.mxu0 0.0
    %1819 = vmatpush1.msra.mxu0 0.0
    %1820 = vmatprep.mubr.f32.mxu0 0.0
    %v1821 = vand.u32 %v1576, 4294901760
    %v1822 = vsub.f32 %v1576, %v1821
    %1823 = vmatmul.mubr.f32.gmra.mrb[0].mxu0 %v1822
    %v1824 = vpop.f32.mrb[0].mxu0
    %v1825 = vadd.f32 %v1745, %v1824
    %v1826 = vpop.f32.mrb[0].mxu0
    %1827 = vdwg.mxu0
    %1828 = vmatprep.subr.mxu0 0.0
    %v1829 = vand.u32 %v1560, 4294901760
    %1830 = vmatpush1.msra.mxu0 %v1829
    %1831 = vmatprep.subr.mxu0 0.0
    %v1832 = vand.u32 %v1561, 4294901760
    %1833 = vmatpush1.msra.mxu0 %v1832
    %1834 = vmatprep.subr.mxu0 0.0
    %v1835 = vand.u32 %v1562, 4294901760
    %1836 = vmatpush1.msra.mxu0 %v1835
    %1837 = vmatprep.subr.mxu0 0.0
    %v1838 = vand.u32 %v1563, 4294901760
    %1839 = vmatpush1.msra.mxu0 %v1838
    %1840 = vmatprep.subr.mxu0 0.0
    %1841 = vmatpush1.msra.mxu0 0.0
    %1842 = vmatprep.subr.mxu0 0.0
    %1843 = vmatpush1.msra.mxu0 0.0
    %1844 = vmatprep.subr.mxu0 0.0
    %1845 = vmatpush1.msra.mxu0 0.0
    %1846 = vmatprep.subr.mxu0 0.0
    %1847 = vmatpush1.msra.mxu0 0.0
    %1848 = vmatprep.subr.mxu0 0.0
    %1849 = vmatpush1.msra.mxu0 0.0
    %1850 = vmatprep.subr.mxu0 0.0
    %1851 = vmatpush1.msra.mxu0 0.0
    %1852 = vmatprep.subr.mxu0 0.0
    %1853 = vmatpush1.msra.mxu0 0.0
    %1854 = vmatprep.subr.mxu0 0.0
    %1855 = vmatpush1.msra.mxu0 0.0
    %1856 = vmatprep.subr.mxu0 0.0
    %1857 = vmatpush1.msra.mxu0 0.0
    %1858 = vmatprep.subr.mxu0 0.0
    %1859 = vmatpush1.msra.mxu0 0.0
    %1860 = vmatprep.subr.mxu0 0.0
    %1861 = vmatpush1.msra.mxu0 0.0
    %1862 = vmatprep.subr.mxu0 0.0
    %1863 = vmatpush1.msra.mxu0 0.0
    %1864 = vmatprep.subr.mxu0 0.0
    %1865 = vmatpush1.msra.mxu0 0.0
    %1866 = vmatprep.subr.mxu0 0.0
    %1867 = vmatpush1.msra.mxu0 0.0
    %1868 = vmatprep.subr.mxu0 0.0
    %1869 = vmatpush1.msra.mxu0 0.0
    %1870 = vmatprep.subr.mxu0 0.0
    %1871 = vmatpush1.msra.mxu0 0.0
    %1872 = vmatprep.subr.mxu0 0.0
    %1873 = vmatpush1.msra.mxu0 0.0
    %1874 = vmatprep.subr.mxu0 0.0
    %1875 = vmatpush1.msra.mxu0 0.0
    %1876 = vmatprep.subr.mxu0 0.0
    %1877 = vmatpush1.msra.mxu0 0.0
    %1878 = vmatprep.subr.mxu0 0.0
    %1879 = vmatpush1.msra.mxu0 0.0
    %1880 = vmatprep.subr.mxu0 0.0
    %1881 = vmatpush1.msra.mxu0 0.0
    %1882 = vmatprep.subr.mxu0 0.0
    %1883 = vmatpush1.msra.mxu0 0.0
    %1884 = vmatprep.subr.mxu0 0.0
    %1885 = vmatpush1.msra.mxu0 0.0
    %1886 = vmatprep.subr.mxu0 0.0
    %1887 = vmatpush1.msra.mxu0 0.0
    %1888 = vmatprep.subr.mxu0 0.0
    %1889 = vmatpush1.msra.mxu0 0.0
    %1890 = vmatprep.subr.mxu0 0.0
    %1891 = vmatpush1.msra.mxu0 0.0
    %1892 = vmatprep.subr.mxu0 0.0
    %1893 = vmatpush1.msra.mxu0 0.0
    %1894 = vmatprep.subr.mxu0 0.0
    %1895 = vmatpush1.msra.mxu0 0.0
    %1896 = vmatprep.mubr.f32.mxu0 0.0
    %v1897 = vand.u32 %v1576, 4294901760
    %v1898 = vsub.f32 %v1576, %v1897
    %v1899 = vand.u32 %v1898, 4294901760
    %1900 = vmatmul.mubr.f32.gmra.mrb[0].mxu0 %v1899
    %v1901 = vpop.f32.mrb[0].mxu0
    %v1902 = vadd.f32 %v1825, %v1901
    %v1903 = vpop.f32.mrb[0].mxu0
    %1904 = vdwg.mxu0
    %1905 = vmatprep.subr.mxu0 0.0
    %v1906 = vand.u32 %v1560, 4294901760
    %v1907 = vsub.f32 %v1560, %v1906
    %v1908 = vand.u32 %v1907, 4294901760
    %1909 = vmatpush1.msra.mxu0 %v1908
    %1910 = vmatprep.subr.mxu0 0.0
    %v1911 = vand.u32 %v1561, 4294901760
    %v1912 = vsub.f32 %v1561, %v1911
    %v1913 = vand.u32 %v1912, 4294901760
    %1914 = vmatpush1.msra.mxu0 %v1913
    %1915 = vmatprep.subr.mxu0 0.0
    %v1916 = vand.u32 %v1562, 4294901760
    %v1917 = vsub.f32 %v1562, %v1916
    %v1918 = vand.u32 %v1917, 4294901760
    %1919 = vmatpush1.msra.mxu0 %v1918
    %1920 = vmatprep.subr.mxu0 0.0
    %v1921 = vand.u32 %v1563, 4294901760
    %v1922 = vsub.f32 %v1563, %v1921
    %v1923 = vand.u32 %v1922, 4294901760
    %1924 = vmatpush1.msra.mxu0 %v1923
    %1925 = vmatprep.subr.mxu0 0.0
    %1926 = vmatpush1.msra.mxu0 0.0
    %1927 = vmatprep.subr.mxu0 0.0
    %1928 = vmatpush1.msra.mxu0 0.0
    %1929 = vmatprep.subr.mxu0 0.0
    %1930 = vmatpush1.msra.mxu0 0.0
    %1931 = vmatprep.subr.mxu0 0.0
    %1932 = vmatpush1.msra.mxu0 0.0
    %1933 = vmatprep.subr.mxu0 0.0
    %1934 = vmatpush1.msra.mxu0 0.0
    %1935 = vmatprep.subr.mxu0 0.0
    %1936 = vmatpush1.msra.mxu0 0.0
    %1937 = vmatprep.subr.mxu0 0.0
    %1938 = vmatpush1.msra.mxu0 0.0
    %1939 = vmatprep.subr.mxu0 0.0
    %1940 = vmatpush1.msra.mxu0 0.0
    %1941 = vmatprep.subr.mxu0 0.0
    %1942 = vmatpush1.msra.mxu0 0.0
    %1943 = vmatprep.subr.mxu0 0.0
    %1944 = vmatpush1.msra.mxu0 0.0
    %1945 = vmatprep.subr.mxu0 0.0
    %1946 = vmatpush1.msra.mxu0 0.0
    %1947 = vmatprep.subr.mxu0 0.0
    %1948 = vmatpush1.msra.mxu0 0.0
    %1949 = vmatprep.subr.mxu0 0.0
    %1950 = vmatpush1.msra.mxu0 0.0
    %1951 = vmatprep.subr.mxu0 0.0
    %1952 = vmatpush1.msra.mxu0 0.0
    %1953 = vmatprep.subr.mxu0 0.0
    %1954 = vmatpush1.msra.mxu0 0.0
    %1955 = vmatprep.subr.mxu0 0.0
    %1956 = vmatpush1.msra.mxu0 0.0
    %1957 = vmatprep.subr.mxu0 0.0
    %1958 = vmatpush1.msra.mxu0 0.0
    %1959 = vmatprep.subr.mxu0 0.0
    %1960 = vmatpush1.msra.mxu0 0.0
    %1961 = vmatprep.subr.mxu0 0.0
    %1962 = vmatpush1.msra.mxu0 0.0
    %1963 = vmatprep.subr.mxu0 0.0
    %1964 = vmatpush1.msra.mxu0 0.0
    %1965 = vmatprep.subr.mxu0 0.0
    %1966 = vmatpush1.msra.mxu0 0.0
    %1967 = vmatprep.subr.mxu0 0.0
    %1968 = vmatpush1.msra.mxu0 0.0
    %1969 = vmatprep.subr.mxu0 0.0
    %1970 = vmatpush1.msra.mxu0 0.0
    %1971 = vmatprep.subr.mxu0 0.0
    %1972 = vmatpush1.msra.mxu0 0.0
    %1973 = vmatprep.subr.mxu0 0.0
    %1974 = vmatpush1.msra.mxu0 0.0
    %1975 = vmatprep.subr.mxu0 0.0
    %1976 = vmatpush1.msra.mxu0 0.0
    %1977 = vmatprep.subr.mxu0 0.0
    %1978 = vmatpush1.msra.mxu0 0.0
    %1979 = vmatprep.subr.mxu0 0.0
    %1980 = vmatpush1.msra.mxu0 0.0
    %1981 = vmatprep.mubr.f32.mxu0 0.0
    %v1982 = vand.u32 %v1576, 4294901760
    %1983 = vmatmul.mubr.f32.gmra.mrb[0].mxu0 %v1982
    %v1984 = vpop.f32.mrb[0].mxu0
    %v1985 = vadd.f32 %v1902, %v1984
    %v1986 = vpop.f32.mrb[0].mxu0
    %1987 = vdwg.mxu0
    %1988 = vmatprep.subr.mxu0 0.0
    %v1989 = vand.u32 %v1560, 4294901760
    %1990 = vmatpush1.msra.mxu0 %v1989
    %1991 = vmatprep.subr.mxu0 0.0
    %v1992 = vand.u32 %v1561, 4294901760
    %1993 = vmatpush1.msra.mxu0 %v1992
    %1994 = vmatprep.subr.mxu0 0.0
    %v1995 = vand.u32 %v1562, 4294901760
    %1996 = vmatpush1.msra.mxu0 %v1995
    %1997 = vmatprep.subr.mxu0 0.0
    %v1998 = vand.u32 %v1563, 4294901760
    %1999 = vmatpush1.msra.mxu0 %v1998
    %2000 = vmatprep.subr.mxu0 0.0
    %2001 = vmatpush1.msra.mxu0 0.0
    %2002 = vmatprep.subr.mxu0 0.0
    %2003 = vmatpush1.msra.mxu0 0.0
    %2004 = vmatprep.subr.mxu0 0.0
    %2005 = vmatpush1.msra.mxu0 0.0
    %2006 = vmatprep.subr.mxu0 0.0
    %2007 = vmatpush1.msra.mxu0 0.0
    %2008 = vmatprep.subr.mxu0 0.0
    %2009 = vmatpush1.msra.mxu0 0.0
    %2010 = vmatprep.subr.mxu0 0.0
    %2011 = vmatpush1.msra.mxu0 0.0
    %2012 = vmatprep.subr.mxu0 0.0
    %2013 = vmatpush1.msra.mxu0 0.0
    %2014 = vmatprep.subr.mxu0 0.0
    %2015 = vmatpush1.msra.mxu0 0.0
    %2016 = vmatprep.subr.mxu0 0.0
    %2017 = vmatpush1.msra.mxu0 0.0
    %2018 = vmatprep.subr.mxu0 0.0
    %2019 = vmatpush1.msra.mxu0 0.0
    %2020 = vmatprep.subr.mxu0 0.0
    %2021 = vmatpush1.msra.mxu0 0.0
    %2022 = vmatprep.subr.mxu0 0.0
    %2023 = vmatpush1.msra.mxu0 0.0
    %2024 = vmatprep.subr.mxu0 0.0
    %2025 = vmatpush1.msra.mxu0 0.0
    %2026 = vmatprep.subr.mxu0 0.0
    %2027 = vmatpush1.msra.mxu0 0.0
    %2028 = vmatprep.subr.mxu0 0.0
    %2029 = vmatpush1.msra.mxu0 0.0
    %2030 = vmatprep.subr.mxu0 0.0
    %2031 = vmatpush1.msra.mxu0 0.0
    %2032 = vmatprep.subr.mxu0 0.0
    %2033 = vmatpush1.msra.mxu0 0.0
    %2034 = vmatprep.subr.mxu0 0.0
    %2035 = vmatpush1.msra.mxu0 0.0
    %2036 = vmatprep.subr.mxu0 0.0
    %2037 = vmatpush1.msra.mxu0 0.0
    %2038 = vmatprep.subr.mxu0 0.0
    %2039 = vmatpush1.msra.mxu0 0.0
    %2040 = vmatprep.subr.mxu0 0.0
    %2041 = vmatpush1.msra.mxu0 0.0
    %2042 = vmatprep.subr.mxu0 0.0
    %2043 = vmatpush1.msra.mxu0 0.0
    %2044 = vmatprep.subr.mxu0 0.0
    %2045 = vmatpush1.msra.mxu0 0.0
    %2046 = vmatprep.subr.mxu0 0.0
    %2047 = vmatpush1.msra.mxu0 0.0
    %2048 = vmatprep.subr.mxu0 0.0
    %2049 = vmatpush1.msra.mxu0 0.0
    %2050 = vmatprep.subr.mxu0 0.0
    %2051 = vmatpush1.msra.mxu0 0.0
    %2052 = vmatprep.subr.mxu0 0.0
    %2053 = vmatpush1.msra.mxu0 0.0
    %2054 = vmatprep.subr.mxu0 0.0
    %2055 = vmatpush1.msra.mxu0 0.0
    %2056 = vmatprep.mubr.f32.mxu0 0.0
    %v2057 = vand.u32 %v1576, 4294901760
    %2058 = vmatmul.mubr.f32.gmra.mrb[0].mxu0 %v2057
    %v2059 = vpop.f32.mrb[0].mxu0
    %v2060 = vadd.f32 %v1985, %v2059
    %v2061 = vpop.f32.mrb[0].mxu0
    %2062 = vdwg.mxu0
    %v2063 = vmax.f32 %v2060, 0.0
    %v2064 = vlaneseq
    %v2065 = vshrl.u32 %v2064, 7
    %v2066 = vsub.s32 0, %v2065
    %v2067 = vrot.slane %v50, %v2066
    %v2069 = vsel %vm1097, %v2063, 0
    %2071 = vmatprep.subr.mxu0 0.0
    %v2072 = vand.u32 %v48, 4294901760
    %2073 = vmatpush1.msra.mxu0 %v2072
    %2074 = vmatprep.subr.mxu0 0.0
    %v2075 = vand.u32 %v49, 4294901760
    %2076 = vmatpush1.msra.mxu0 %v2075
    %2077 = vmatprep.subr.mxu0 0.0
    %2078 = vmatpush1.msra.mxu0 0.0
    %2079 = vmatprep.subr.mxu0 0.0
    %2080 = vmatpush1.msra.mxu0 0.0
    %2081 = vmatprep.subr.mxu0 0.0
    %2082 = vmatpush1.msra.mxu0 0.0
    %2083 = vmatprep.subr.mxu0 0.0
    %2084 = vmatpush1.msra.mxu0 0.0
    %2085 = vmatprep.subr.mxu0 0.0
    %2086 = vmatpush1.msra.mxu0 0.0
    %2087 = vmatprep.subr.mxu0 0.0
    %2088 = vmatpush1.msra.mxu0 0.0
    %2089 = vmatprep.subr.mxu0 0.0
    %2090 = vmatpush1.msra.mxu0 0.0
    %2091 = vmatprep.subr.mxu0 0.0
    %2092 = vmatpush1.msra.mxu0 0.0
    %2093 = vmatprep.subr.mxu0 0.0
    %2094 = vmatpush1.msra.mxu0 0.0
    %2095 = vmatprep.subr.mxu0 0.0
    %2096 = vmatpush1.msra.mxu0 0.0
    %2097 = vmatprep.subr.mxu0 0.0
    %2098 = vmatpush1.msra.mxu0 0.0
    %2099 = vmatprep.subr.mxu0 0.0
    %2100 = vmatpush1.msra.mxu0 0.0
    %2101 = vmatprep.subr.mxu0 0.0
    %2102 = vmatpush1.msra.mxu0 0.0
    %2103 = vmatprep.subr.mxu0 0.0
    %2104 = vmatpush1.msra.mxu0 0.0
    %2105 = vmatprep.subr.mxu0 0.0
    %2106 = vmatpush1.msra.mxu0 0.0
    %2107 = vmatprep.subr.mxu0 0.0
    %2108 = vmatpush1.msra.mxu0 0.0
    %2109 = vmatprep.subr.mxu0 0.0
    %2110 = vmatpush1.msra.mxu0 0.0
    %2111 = vmatprep.subr.mxu0 0.0
    %2112 = vmatpush1.msra.mxu0 0.0
    %2113 = vmatprep.subr.mxu0 0.0
    %2114 = vmatpush1.msra.mxu0 0.0
    %2115 = vmatprep.subr.mxu0 0.0
    %2116 = vmatpush1.msra.mxu0 0.0
    %2117 = vmatprep.subr.mxu0 0.0
    %2118 = vmatpush1.msra.mxu0 0.0
    %2119 = vmatprep.subr.mxu0 0.0
    %2120 = vmatpush1.msra.mxu0 0.0
    %2121 = vmatprep.subr.mxu0 0.0
    %2122 = vmatpush1.msra.mxu0 0.0
    %2123 = vmatprep.subr.mxu0 0.0
    %2124 = vmatpush1.msra.mxu0 0.0
    %2125 = vmatprep.subr.mxu0 0.0
    %2126 = vmatpush1.msra.mxu0 0.0
    %2127 = vmatprep.subr.mxu0 0.0
    %2128 = vmatpush1.msra.mxu0 0.0
    %2129 = vmatprep.subr.mxu0 0.0
    %2130 = vmatpush1.msra.mxu0 0.0
    %2131 = vmatprep.subr.mxu0 0.0
    %2132 = vmatpush1.msra.mxu0 0.0
    %2133 = vmatprep.subr.mxu0 0.0
    %2134 = vmatpush1.msra.mxu0 0.0
    %2135 = vmatprep.subr.mxu0 0.0
    %2136 = vmatpush1.msra.mxu0 0.0
    %2137 = vmatprep.mubr.f32.mxu0 0.0
    %v2138 = vand.u32 %v2069, 4294901760
    %v2139 = vsub.f32 %v2069, %v2138
    %v2140 = vand.u32 %v2139, 4294901760
    %v2141 = vsub.f32 %v2139, %v2140
    %v2142 = vand.u32 %v2141, 4294901760
    %2143 = vmatmul.mubr.f32.gmra.mrb[0].mxu0 %v2142
    %v2144 = vpop.f32.mrb[0].mxu0
    %v2145 = vadd.f32 %v2067, %v2144
    %v2146 = vpop.f32.mrb[0].mxu0
    %2147 = vdwg.mxu0
    %2148 = vmatprep.subr.mxu0 0.0
    %v2149 = vand.u32 %v48, 4294901760
    %v2150 = vsub.f32 %v48, %v2149
    %v2151 = vand.u32 %v2150, 4294901760
    %v2152 = vsub.f32 %v2150, %v2151
    %v2153 = vand.u32 %v2152, 4294901760
    %2154 = vmatpush1.msra.mxu0 %v2153
    %2155 = vmatprep.subr.mxu0 0.0
    %v2156 = vand.u32 %v49, 4294901760
    %v2157 = vsub.f32 %v49, %v2156
    %v2158 = vand.u32 %v2157, 4294901760
    %v2159 = vsub.f32 %v2157, %v2158
    %v2160 = vand.u32 %v2159, 4294901760
    %2161 = vmatpush1.msra.mxu0 %v2160
    %2162 = vmatprep.subr.mxu0 0.0
    %2163 = vmatpush1.msra.mxu0 0.0
    %2164 = vmatprep.subr.mxu0 0.0
    %2165 = vmatpush1.msra.mxu0 0.0
    %2166 = vmatprep.subr.mxu0 0.0
    %2167 = vmatpush1.msra.mxu0 0.0
    %2168 = vmatprep.subr.mxu0 0.0
    %2169 = vmatpush1.msra.mxu0 0.0
    %2170 = vmatprep.subr.mxu0 0.0
    %2171 = vmatpush1.msra.mxu0 0.0
    %2172 = vmatprep.subr.mxu0 0.0
    %2173 = vmatpush1.msra.mxu0 0.0
    %2174 = vmatprep.subr.mxu0 0.0
    %2175 = vmatpush1.msra.mxu0 0.0
    %2176 = vmatprep.subr.mxu0 0.0
    %2177 = vmatpush1.msra.mxu0 0.0
    %2178 = vmatprep.subr.mxu0 0.0
    %2179 = vmatpush1.msra.mxu0 0.0
    %2180 = vmatprep.subr.mxu0 0.0
    %2181 = vmatpush1.msra.mxu0 0.0
    %2182 = vmatprep.subr.mxu0 0.0
    %2183 = vmatpush1.msra.mxu0 0.0
    %2184 = vmatprep.subr.mxu0 0.0
    %2185 = vmatpush1.msra.mxu0 0.0
    %2186 = vmatprep.subr.mxu0 0.0
    %2187 = vmatpush1.msra.mxu0 0.0
    %2188 = vmatprep.subr.mxu0 0.0
    %2189 = vmatpush1.msra.mxu0 0.0
    %2190 = vmatprep.subr.mxu0 0.0
    %2191 = vmatpush1.msra.mxu0 0.0
    %2192 = vmatprep.subr.mxu0 0.0
    %2193 = vmatpush1.msra.mxu0 0.0
    %2194 = vmatprep.subr.mxu0 0.0
    %2195 = vmatpush1.msra.mxu0 0.0
    %2196 = vmatprep.subr.mxu0 0.0
    %2197 = vmatpush1.msra.mxu0 0.0
    %2198 = vmatprep.subr.mxu0 0.0
    %2199 = vmatpush1.msra.mxu0 0.0
    %2200 = vmatprep.subr.mxu0 0.0
    %2201 = vmatpush1.msra.mxu0 0.0
    %2202 = vmatprep.subr.mxu0 0.0
    %2203 = vmatpush1.msra.mxu0 0.0
    %2204 = vmatprep.subr.mxu0 0.0
    %2205 = vmatpush1.msra.mxu0 0.0
    %2206 = vmatprep.subr.mxu0 0.0
    %2207 = vmatpush1.msra.mxu0 0.0
    %2208 = vmatprep.subr.mxu0 0.0
    %2209 = vmatpush1.msra.mxu0 0.0
    %2210 = vmatprep.subr.mxu0 0.0
    %2211 = vmatpush1.msra.mxu0 0.0
    %2212 = vmatprep.subr.mxu0 0.0
    %2213 = vmatpush1.msra.mxu0 0.0
    %2214 = vmatprep.subr.mxu0 0.0
    %2215 = vmatpush1.msra.mxu0 0.0
    %2216 = vmatprep.subr.mxu0 0.0
    %2217 = vmatpush1.msra.mxu0 0.0
    %2218 = vmatprep.subr.mxu0 0.0
    %2219 = vmatpush1.msra.mxu0 0.0
    %2220 = vmatprep.subr.mxu0 0.0
    %2221 = vmatpush1.msra.mxu0 0.0
    %2222 = vmatprep.mubr.f32.mxu0 0.0
    %v2223 = vand.u32 %v2069, 4294901760
    %2224 = vmatmul.mubr.f32.gmra.mrb[0].mxu0 %v2223
    %v2225 = vpop.f32.mrb[0].mxu0
    %v2226 = vadd.f32 %v2145, %v2225
    %v2227 = vpop.f32.mrb[0].mxu0
    %2228 = vdwg.mxu0
    %2229 = vmatprep.subr.mxu0 0.0
    %v2230 = vand.u32 %v48, 4294901760
    %v2231 = vsub.f32 %v48, %v2230
    %2232 = vmatpush1.msra.mxu0 %v2231
    %2233 = vmatprep.subr.mxu0 0.0
    %v2234 = vand.u32 %v49, 4294901760
    %v2235 = vsub.f32 %v49, %v2234
    %2236 = vmatpush1.msra.mxu0 %v2235
    %2237 = vmatprep.subr.mxu0 0.0
    %2238 = vmatpush1.msra.mxu0 0.0
    %2239 = vmatprep.subr.mxu0 0.0
    %2240 = vmatpush1.msra.mxu0 0.0
    %2241 = vmatprep.subr.mxu0 0.0
    %2242 = vmatpush1.msra.mxu0 0.0
    %2243 = vmatprep.subr.mxu0 0.0
    %2244 = vmatpush1.msra.mxu0 0.0
    %2245 = vmatprep.subr.mxu0 0.0
    %2246 = vmatpush1.msra.mxu0 0.0
    %2247 = vmatprep.subr.mxu0 0.0
    %2248 = vmatpush1.msra.mxu0 0.0
    %2249 = vmatprep.subr.mxu0 0.0
    %2250 = vmatpush1.msra.mxu0 0.0
    %2251 = vmatprep.subr.mxu0 0.0
    %2252 = vmatpush1.msra.mxu0 0.0
    %2253 = vmatprep.subr.mxu0 0.0
    %2254 = vmatpush1.msra.mxu0 0.0
    %2255 = vmatprep.subr.mxu0 0.0
    %2256 = vmatpush1.msra.mxu0 0.0
    %2257 = vmatprep.subr.mxu0 0.0
    %2258 = vmatpush1.msra.mxu0 0.0
    %2259 = vmatprep.subr.mxu0 0.0
    %2260 = vmatpush1.msra.mxu0 0.0
    %2261 = vmatprep.subr.mxu0 0.0
    %2262 = vmatpush1.msra.mxu0 0.0
    %2263 = vmatprep.subr.mxu0 0.0
    %2264 = vmatpush1.msra.mxu0 0.0
    %2265 = vmatprep.subr.mxu0 0.0
    %2266 = vmatpush1.msra.mxu0 0.0
    %2267 = vmatprep.subr.mxu0 0.0
    %2268 = vmatpush1.msra.mxu0 0.0
    %2269 = vmatprep.subr.mxu0 0.0
    %2270 = vmatpush1.msra.mxu0 0.0
    %2271 = vmatprep.subr.mxu0 0.0
    %2272 = vmatpush1.msra.mxu0 0.0
    %2273 = vmatprep.subr.mxu0 0.0
    %2274 = vmatpush1.msra.mxu0 0.0
    %2275 = vmatprep.subr.mxu0 0.0
    %2276 = vmatpush1.msra.mxu0 0.0
    %2277 = vmatprep.subr.mxu0 0.0
    %2278 = vmatpush1.msra.mxu0 0.0
    %2279 = vmatprep.subr.mxu0 0.0
    %2280 = vmatpush1.msra.mxu0 0.0
    %2281 = vmatprep.subr.mxu0 0.0
    %2282 = vmatpush1.msra.mxu0 0.0
    %2283 = vmatprep.subr.mxu0 0.0
    %2284 = vmatpush1.msra.mxu0 0.0
    %2285 = vmatprep.subr.mxu0 0.0
    %2286 = vmatpush1.msra.mxu0 0.0
    %2287 = vmatprep.subr.mxu0 0.0
    %2288 = vmatpush1.msra.mxu0 0.0
    %2289 = vmatprep.subr.mxu0 0.0
    %2290 = vmatpush1.msra.mxu0 0.0
    %2291 = vmatprep.subr.mxu0 0.0
    %2292 = vmatpush1.msra.mxu0 0.0
    %2293 = vmatprep.subr.mxu0 0.0
    %2294 = vmatpush1.msra.mxu0 0.0
    %2295 = vmatprep.subr.mxu0 0.0
    %2296 = vmatpush1.msra.mxu0 0.0
    %2297 = vmatprep.mubr.f32.mxu0 0.0
    %v2298 = vand.u32 %v2069, 4294901760
    %v2299 = vsub.f32 %v2069, %v2298
    %2300 = vmatmul.mubr.f32.gmra.mrb[0].mxu0 %v2299
    %v2301 = vpop.f32.mrb[0].mxu0
    %v2302 = vadd.f32 %v2226, %v2301
    %v2303 = vpop.f32.mrb[0].mxu0
    %2304 = vdwg.mxu0
    %2305 = vmatprep.subr.mxu0 0.0
    %v2306 = vand.u32 %v48, 4294901760
    %2307 = vmatpush1.msra.mxu0 %v2306
    %2308 = vmatprep.subr.mxu0 0.0
    %v2309 = vand.u32 %v49, 4294901760
    %2310 = vmatpush1.msra.mxu0 %v2309
    %2311 = vmatprep.subr.mxu0 0.0
    %2312 = vmatpush1.msra.mxu0 0.0
    %2313 = vmatprep.subr.mxu0 0.0
    %2314 = vmatpush1.msra.mxu0 0.0
    %2315 = vmatprep.subr.mxu0 0.0
    %2316 = vmatpush1.msra.mxu0 0.0
    %2317 = vmatprep.subr.mxu0 0.0
    %2318 = vmatpush1.msra.mxu0 0.0
    %2319 = vmatprep.subr.mxu0 0.0
    %2320 = vmatpush1.msra.mxu0 0.0
    %2321 = vmatprep.subr.mxu0 0.0
    %2322 = vmatpush1.msra.mxu0 0.0
    %2323 = vmatprep.subr.mxu0 0.0
    %2324 = vmatpush1.msra.mxu0 0.0
    %2325 = vmatprep.subr.mxu0 0.0
    %2326 = vmatpush1.msra.mxu0 0.0
    %2327 = vmatprep.subr.mxu0 0.0
    %2328 = vmatpush1.msra.mxu0 0.0
    %2329 = vmatprep.subr.mxu0 0.0
    %2330 = vmatpush1.msra.mxu0 0.0
    %2331 = vmatprep.subr.mxu0 0.0
    %2332 = vmatpush1.msra.mxu0 0.0
    %2333 = vmatprep.subr.mxu0 0.0
    %2334 = vmatpush1.msra.mxu0 0.0
    %2335 = vmatprep.subr.mxu0 0.0
    %2336 = vmatpush1.msra.mxu0 0.0
    %2337 = vmatprep.subr.mxu0 0.0
    %2338 = vmatpush1.msra.mxu0 0.0
    %2339 = vmatprep.subr.mxu0 0.0
    %2340 = vmatpush1.msra.mxu0 0.0
    %2341 = vmatprep.subr.mxu0 0.0
    %2342 = vmatpush1.msra.mxu0 0.0
    %2343 = vmatprep.subr.mxu0 0.0
    %2344 = vmatpush1.msra.mxu0 0.0
    %2345 = vmatprep.subr.mxu0 0.0
    %2346 = vmatpush1.msra.mxu0 0.0
    %2347 = vmatprep.subr.mxu0 0.0
    %2348 = vmatpush1.msra.mxu0 0.0
    %2349 = vmatprep.subr.mxu0 0.0
    %2350 = vmatpush1.msra.mxu0 0.0
    %2351 = vmatprep.subr.mxu0 0.0
    %2352 = vmatpush1.msra.mxu0 0.0
    %2353 = vmatprep.subr.mxu0 0.0
    %2354 = vmatpush1.msra.mxu0 0.0
    %2355 = vmatprep.subr.mxu0 0.0
    %2356 = vmatpush1.msra.mxu0 0.0
    %2357 = vmatprep.subr.mxu0 0.0
    %2358 = vmatpush1.msra.mxu0 0.0
    %2359 = vmatprep.subr.mxu0 0.0
    %2360 = vmatpush1.msra.mxu0 0.0
    %2361 = vmatprep.subr.mxu0 0.0
    %2362 = vmatpush1.msra.mxu0 0.0
    %2363 = vmatprep.subr.mxu0 0.0
    %2364 = vmatpush1.msra.mxu0 0.0
    %2365 = vmatprep.subr.mxu0 0.0
    %2366 = vmatpush1.msra.mxu0 0.0
    %2367 = vmatprep.subr.mxu0 0.0
    %2368 = vmatpush1.msra.mxu0 0.0
    %2369 = vmatprep.subr.mxu0 0.0
    %2370 = vmatpush1.msra.mxu0 0.0
    %2371 = vmatprep.mubr.f32.mxu0 0.0
    %v2372 = vand.u32 %v2069, 4294901760
    %v2373 = vsub.f32 %v2069, %v2372
    %v2374 = vand.u32 %v2373, 4294901760
    %2375 = vmatmul.mubr.f32.gmra.mrb[0].mxu0 %v2374
    %v2376 = vpop.f32.mrb[0].mxu0
    %v2377 = vadd.f32 %v2302, %v2376
    %v2378 = vpop.f32.mrb[0].mxu0
    %2379 = vdwg.mxu0
    %2380 = vmatprep.subr.mxu0 0.0
    %v2381 = vand.u32 %v48, 4294901760
    %v2382 = vsub.f32 %v48, %v2381
    %v2383 = vand.u32 %v2382, 4294901760
    %2384 = vmatpush1.msra.mxu0 %v2383
    %2385 = vmatprep.subr.mxu0 0.0
    %v2386 = vand.u32 %v49, 4294901760
    %v2387 = vsub.f32 %v49, %v2386
    %v2388 = vand.u32 %v2387, 4294901760
    %2389 = vmatpush1.msra.mxu0 %v2388
    %2390 = vmatprep.subr.mxu0 0.0
    %2391 = vmatpush1.msra.mxu0 0.0
    %2392 = vmatprep.subr.mxu0 0.0
    %2393 = vmatpush1.msra.mxu0 0.0
    %2394 = vmatprep.subr.mxu0 0.0
    %2395 = vmatpush1.msra.mxu0 0.0
    %2396 = vmatprep.subr.mxu0 0.0
    %2397 = vmatpush1.msra.mxu0 0.0
    %2398 = vmatprep.subr.mxu0 0.0
    %2399 = vmatpush1.msra.mxu0 0.0
    %2400 = vmatprep.subr.mxu0 0.0
    %2401 = vmatpush1.msra.mxu0 0.0
    %2402 = vmatprep.subr.mxu0 0.0
    %2403 = vmatpush1.msra.mxu0 0.0
    %2404 = vmatprep.subr.mxu0 0.0
    %2405 = vmatpush1.msra.mxu0 0.0
    %2406 = vmatprep.subr.mxu0 0.0
    %2407 = vmatpush1.msra.mxu0 0.0
    %2408 = vmatprep.subr.mxu0 0.0
    %2409 = vmatpush1.msra.mxu0 0.0
    %2410 = vmatprep.subr.mxu0 0.0
    %2411 = vmatpush1.msra.mxu0 0.0
    %2412 = vmatprep.subr.mxu0 0.0
    %2413 = vmatpush1.msra.mxu0 0.0
    %2414 = vmatprep.subr.mxu0 0.0
    %2415 = vmatpush1.msra.mxu0 0.0
    %2416 = vmatprep.subr.mxu0 0.0
    %2417 = vmatpush1.msra.mxu0 0.0
    %2418 = vmatprep.subr.mxu0 0.0
    %2419 = vmatpush1.msra.mxu0 0.0
    %2420 = vmatprep.subr.mxu0 0.0
    %2421 = vmatpush1.msra.mxu0 0.0
    %2422 = vmatprep.subr.mxu0 0.0
    %2423 = vmatpush1.msra.mxu0 0.0
    %2424 = vmatprep.subr.mxu0 0.0
    %2425 = vmatpush1.msra.mxu0 0.0
    %2426 = vmatprep.subr.mxu0 0.0
    %2427 = vmatpush1.msra.mxu0 0.0
    %2428 = vmatprep.subr.mxu0 0.0
    %2429 = vmatpush1.msra.mxu0 0.0
    %2430 = vmatprep.subr.mxu0 0.0
    %2431 = vmatpush1.msra.mxu0 0.0
    %2432 = vmatprep.subr.mxu0 0.0
    %2433 = vmatpush1.msra.mxu0 0.0
    %2434 = vmatprep.subr.mxu0 0.0
    %2435 = vmatpush1.msra.mxu0 0.0
    %2436 = vmatprep.subr.mxu0 0.0
    %2437 = vmatpush1.msra.mxu0 0.0
    %2438 = vmatprep.subr.mxu0 0.0
    %2439 = vmatpush1.msra.mxu0 0.0
    %2440 = vmatprep.subr.mxu0 0.0
    %2441 = vmatpush1.msra.mxu0 0.0
    %2442 = vmatprep.subr.mxu0 0.0
    %2443 = vmatpush1.msra.mxu0 0.0
    %2444 = vmatprep.subr.mxu0 0.0
    %2445 = vmatpush1.msra.mxu0 0.0
    %2446 = vmatprep.subr.mxu0 0.0
    %2447 = vmatpush1.msra.mxu0 0.0
    %2448 = vmatprep.subr.mxu0 0.0
    %2449 = vmatpush1.msra.mxu0 0.0
    %2450 = vmatprep.mubr.f32.mxu0 0.0
    %v2451 = vand.u32 %v2069, 4294901760
    %2452 = vmatmul.mubr.f32.gmra.mrb[0].mxu0 %v2451
    %v2453 = vpop.f32.mrb[0].mxu0
    %v2454 = vadd.f32 %v2377, %v2453
    %v2455 = vpop.f32.mrb[0].mxu0
    %2456 = vdwg.mxu0
    %2457 = vmatprep.subr.mxu0 0.0
    %v2458 = vand.u32 %v48, 4294901760
    %2459 = vmatpush1.msra.mxu0 %v2458
    %2460 = vmatprep.subr.mxu0 0.0
    %v2461 = vand.u32 %v49, 4294901760
    %2462 = vmatpush1.msra.mxu0 %v2461
    %2463 = vmatprep.subr.mxu0 0.0
    %2464 = vmatpush1.msra.mxu0 0.0
    %2465 = vmatprep.subr.mxu0 0.0
    %2466 = vmatpush1.msra.mxu0 0.0
    %2467 = vmatprep.subr.mxu0 0.0
    %2468 = vmatpush1.msra.mxu0 0.0
    %2469 = vmatprep.subr.mxu0 0.0
    %2470 = vmatpush1.msra.mxu0 0.0
    %2471 = vmatprep.subr.mxu0 0.0
    %2472 = vmatpush1.msra.mxu0 0.0
    %2473 = vmatprep.subr.mxu0 0.0
    %2474 = vmatpush1.msra.mxu0 0.0
    %2475 = vmatprep.subr.mxu0 0.0
    %2476 = vmatpush1.msra.mxu0 0.0
    %2477 = vmatprep.subr.mxu0 0.0
    %2478 = vmatpush1.msra.mxu0 0.0
    %2479 = vmatprep.subr.mxu0 0.0
    %2480 = vmatpush1.msra.mxu0 0.0
    %2481 = vmatprep.subr.mxu0 0.0
    %2482 = vmatpush1.msra.mxu0 0.0
    %2483 = vmatprep.subr.mxu0 0.0
    %2484 = vmatpush1.msra.mxu0 0.0
    %2485 = vmatprep.subr.mxu0 0.0
    %2486 = vmatpush1.msra.mxu0 0.0
    %2487 = vmatprep.subr.mxu0 0.0
    %2488 = vmatpush1.msra.mxu0 0.0
    %2489 = vmatprep.subr.mxu0 0.0
    %2490 = vmatpush1.msra.mxu0 0.0
    %2491 = vmatprep.subr.mxu0 0.0
    %2492 = vmatpush1.msra.mxu0 0.0
    %2493 = vmatprep.subr.mxu0 0.0
    %2494 = vmatpush1.msra.mxu0 0.0
    %2495 = vmatprep.subr.mxu0 0.0
    %2496 = vmatpush1.msra.mxu0 0.0
    %2497 = vmatprep.subr.mxu0 0.0
    %2498 = vmatpush1.msra.mxu0 0.0
    %2499 = vmatprep.subr.mxu0 0.0
    %2500 = vmatpush1.msra.mxu0 0.0
    %2501 = vmatprep.subr.mxu0 0.0
    %2502 = vmatpush1.msra.mxu0 0.0
    %2503 = vmatprep.subr.mxu0 0.0
    %2504 = vmatpush1.msra.mxu0 0.0
    %2505 = vmatprep.subr.mxu0 0.0
    %2506 = vmatpush1.msra.mxu0 0.0
    %2507 = vmatprep.subr.mxu0 0.0
    %2508 = vmatpush1.msra.mxu0 0.0
    %2509 = vmatprep.subr.mxu0 0.0
    %2510 = vmatpush1.msra.mxu0 0.0
    %2511 = vmatprep.subr.mxu0 0.0
    %2512 = vmatpush1.msra.mxu0 0.0
    %2513 = vmatprep.subr.mxu0 0.0
    %2514 = vmatpush1.msra.mxu0 0.0
    %2515 = vmatprep.subr.mxu0 0.0
    %2516 = vmatpush1.msra.mxu0 0.0
    %2517 = vmatprep.subr.mxu0 0.0
    %2518 = vmatpush1.msra.mxu0 0.0
    %2519 = vmatprep.subr.mxu0 0.0
    %2520 = vmatpush1.msra.mxu0 0.0
    %2521 = vmatprep.subr.mxu0 0.0
    %2522 = vmatpush1.msra.mxu0 0.0
    %2523 = vmatprep.mubr.f32.mxu0 0.0
    %v2524 = vand.u32 %v2069, 4294901760
    %2525 = vmatmul.mubr.f32.gmra.mrb[0].mxu0 %v2524
    %v2526 = vpop.f32.mrb[0].mxu0
    %v2527 = vadd.f32 %v2454, %v2526
    %v2528 = vpop.f32.mrb[0].mxu0
    %2529 = vdwg.mxu0
    %v2530 = vmax.f32 %v2527, 0.0
    %vm2531 = vcmp.ne.f32.partialorder %v2527, %v2527
    %v2532 = vadd.f32 %v2527, 0.0
    %v2533 = vand.u32 2147483647, %v2527
    %v2534 = vsub.f32 0.0, %v2533
    %v2535 = vmul.f32 %v2534, 1.442695
    %v2536 = vpow.pop %v2535
    %v2537 = vadd.f32 %v2536, 1.0
    %v2538 = vlog2.pop %v2537
    %v2539 = vmul.f32 %v2538, 0.6931472
    %v2540 = vmul.f32 -0.5, %v2536
    %v2541 = vadd.f32 %v2540, 1.0
    %v2542 = vmul.f32 %v2541, %v2536
    %v2543 = vand.u32 2147483647, %v2536
    %vm2544 = vcmp.lt.f32.partialorder %v2543, 0.0004427343
    %v2545 = vsel %vm2544, %v2542, %v2539
    %v2546 = vadd.f32 %v2530, %v2545
    %v2547 = vsel %vm2531, %v2532, %v2546
    %2549 = vrot.lane.b32.xlu0 %v2527, 16
    %v2550 = vpop.permute.xlu0 %2549
    %v2552 = vadd.f32 %v2060, %v2550
    %v2553 = vxor.u32 %v2552, 2147483648
    %v2554 = vmul.f32 %v2553, 1.442695
    %v2555 = vpow.pop %v2554
    %v2556 = vadd.f32 %v2555, 1.0
    %v2557 = vrcp.pop %v2556
    %v2558 = vmul.f32 1.0, %v2557
    %2559 = vrot.lane.b32.xlu0 %v2527, 112
    %v2560 = vpop.permute.xlu0 %2559
    %v2562 = vmul.f32 %v2558, %v2560
    %2564 = vrot.lane.b32.xlu0 %v2562, 32
    %v2565 = vpop.permute.xlu0 %2564
    %v2567 = vadd.f32 %v2060, %v2565
    %v2568 = vtanh.pop %v2567
    %v2569 = vsub.f32 1.0, %v2558
    %2571 = vrot.lane.b32.xlu0 %v2568, 112
    %v2572 = vpop.permute.xlu0 %2571
    %v2574 = vmul.f32 %v2569, %v2572
    %2575 = vrot.lane.b32.xlu0 %v2063, 32
    %v2576 = vpop.permute.xlu0 %2575
    %v2578 = vmul.f32 %v2558, %v2576
    %v2579 = vadd.f32 %v2574, %v2578
    %vm2580 = vcmp.lt.f32.partialorder %v2547, 0.005
    %v2581 = vsel %vm2580, 1, 0
    %2582 = vset.pattern.permute.xlu0 48
    %2583 = vperm.xlu0 %2582, %v2581
    %v2584 = vpop.permute.xlu0 %2583
    %vm2585 = vcmp.eq.s32.totalorder %v2584, 1
    %v2586 = vsel %vm2585, %v2579, %v2576
    %2588 = vrot.lane.b32.xlu0 %v2586, 96
    %v2589 = vpop.permute.xlu0 %2588
    %2591 = vmatprep.subr.mxu0 0.0
    %v2592 = vand.u32 %v2589, 4294901760
    %2593 = vmatpush1.msra.mxu0 %v2592
    %2594 = vmatprep.subr.mxu0 0.0
    %2595 = vmatpush1.msra.mxu0 0.0
    %2596 = vmatprep.subr.mxu0 0.0
    %2597 = vmatpush1.msra.mxu0 0.0
    %2598 = vmatprep.subr.mxu0 0.0
    %2599 = vmatpush1.msra.mxu0 0.0
    %2600 = vmatprep.subr.mxu0 0.0
    %2601 = vmatpush1.msra.mxu0 0.0
    %2602 = vmatprep.subr.mxu0 0.0
    %2603 = vmatpush1.msra.mxu0 0.0
    %2604 = vmatprep.subr.mxu0 0.0
    %2605 = vmatpush1.msra.mxu0 0.0
    %2606 = vmatprep.subr.mxu0 0.0
    %2607 = vmatpush1.msra.mxu0 0.0
    %2608 = vmatprep.subr.mxu0 0.0
    %2609 = vmatpush1.msra.mxu0 0.0
    %2610 = vmatprep.subr.mxu0 0.0
    %2611 = vmatpush1.msra.mxu0 0.0
    %2612 = vmatprep.subr.mxu0 0.0
    %2613 = vmatpush1.msra.mxu0 0.0
    %2614 = vmatprep.subr.mxu0 0.0
    %2615 = vmatpush1.msra.mxu0 0.0
    %2616 = vmatprep.subr.mxu0 0.0
    %2617 = vmatpush1.msra.mxu0 0.0
    %2618 = vmatprep.subr.mxu0 0.0
    %2619 = vmatpush1.msra.mxu0 0.0
    %2620 = vmatprep.subr.mxu0 0.0
    %2621 = vmatpush1.msra.mxu0 0.0
    %2622 = vmatprep.subr.mxu0 0.0
    %2623 = vmatpush1.msra.mxu0 0.0
    %2624 = vmatprep.subr.mxu0 0.0
    %2625 = vmatpush1.msra.mxu0 0.0
    %2626 = vmatprep.subr.mxu0 0.0
    %2627 = vmatpush1.msra.mxu0 0.0
    %2628 = vmatprep.subr.mxu0 0.0
    %2629 = vmatpush1.msra.mxu0 0.0
    %2630 = vmatprep.subr.mxu0 0.0
    %2631 = vmatpush1.msra.mxu0 0.0
    %2632 = vmatprep.subr.mxu0 0.0
    %2633 = vmatpush1.msra.mxu0 0.0
    %2634 = vmatprep.subr.mxu0 0.0
    %2635 = vmatpush1.msra.mxu0 0.0
    %2636 = vmatprep.subr.mxu0 0.0
    %2637 = vmatpush1.msra.mxu0 0.0
    %2638 = vmatprep.subr.mxu0 0.0
    %2639 = vmatpush1.msra.mxu0 0.0
    %2640 = vmatprep.subr.mxu0 0.0
    %2641 = vmatpush1.msra.mxu0 0.0
    %2642 = vmatprep.subr.mxu0 0.0
    %2643 = vmatpush1.msra.mxu0 0.0
    %2644 = vmatprep.subr.mxu0 0.0
    %2645 = vmatpush1.msra.mxu0 0.0
    %2646 = vmatprep.subr.mxu0 0.0
    %2647 = vmatpush1.msra.mxu0 0.0
    %2648 = vmatprep.subr.mxu0 0.0
    %2649 = vmatpush1.msra.mxu0 0.0
    %2650 = vmatprep.subr.mxu0 0.0
    %2651 = vmatpush1.msra.mxu0 0.0
    %2652 = vmatprep.subr.mxu0 0.0
    %2653 = vmatpush1.msra.mxu0 0.0
    %2654 = vmatprep.subr.mxu0 0.0
    %2655 = vmatpush1.msra.mxu0 0.0
    %2656 = vmatprep.mubr.f32.mxu0 0.0
    %v2657 = vand.u32 %v507, 4294901760
    %v2658 = vsub.f32 %v507, %v2657
    %v2659 = vand.u32 %v2658, 4294901760
    %v2660 = vsub.f32 %v2658, %v2659
    %v2661 = vand.u32 %v2660, 4294901760
    %2662 = vmatmul.mubr.f32.gmra.mrb[0].mxu0 %v2661
    %v2663 = vpop.f32.mrb[0].mxu0
    %v2664 = vadd.f32 0.0, %v2663
    %v2665 = vpop.f32.mrb[0].mxu0
    %2666 = vmatprep.mubr.f32.mxu0 0.0
    %v2667 = vand.u32 %v510, 4294901760
    %v2668 = vsub.f32 %v510, %v2667
    %v2669 = vand.u32 %v2668, 4294901760
    %v2670 = vsub.f32 %v2668, %v2669
    %v2671 = vand.u32 %v2670, 4294901760
    %2672 = vmatmul.mubr.f32.gmra.mrb[0].mxu0 %v2671
    %v2673 = vpop.f32.mrb[0].mxu0
    %v2674 = vadd.f32 0.0, %v2673
    %v2675 = vpop.f32.mrb[0].mxu0
    %2676 = vmatprep.mubr.f32.mxu0 0.0
    %v2677 = vand.u32 %v513, 4294901760
    %v2678 = vsub.f32 %v513, %v2677
    %v2679 = vand.u32 %v2678, 4294901760
    %v2680 = vsub.f32 %v2678, %v2679
    %v2681 = vand.u32 %v2680, 4294901760
    %2682 = vmatmul.mubr.f32.gmra.mrb[0].mxu0 %v2681
    %v2683 = vpop.f32.mrb[0].mxu0
    %v2684 = vadd.f32 0.0, %v2683
    %v2685 = vpop.f32.mrb[0].mxu0
    %2686 = vmatprep.mubr.f32.mxu0 0.0
    %v2687 = vand.u32 %v516, 4294901760
    %v2688 = vsub.f32 %v516, %v2687
    %v2689 = vand.u32 %v2688, 4294901760
    %v2690 = vsub.f32 %v2688, %v2689
    %v2691 = vand.u32 %v2690, 4294901760
    %2692 = vmatmul.mubr.f32.gmra.mrb[0].mxu0 %v2691
    %v2693 = vpop.f32.mrb[0].mxu0
    %v2694 = vadd.f32 0.0, %v2693
    %v2695 = vpop.f32.mrb[0].mxu0
    %2696 = vdwg.mxu0
    %2697 = vmatprep.subr.mxu0 0.0
    %v2698 = vand.u32 %v2589, 4294901760
    %v2699 = vsub.f32 %v2589, %v2698
    %v2700 = vand.u32 %v2699, 4294901760
    %v2701 = vsub.f32 %v2699, %v2700
    %v2702 = vand.u32 %v2701, 4294901760
    %2703 = vmatpush1.msra.mxu0 %v2702
    %2704 = vmatprep.subr.mxu0 0.0
    %2705 = vmatpush1.msra.mxu0 0.0
    %2706 = vmatprep.subr.mxu0 0.0
    %2707 = vmatpush1.msra.mxu0 0.0
    %2708 = vmatprep.subr.mxu0 0.0
    %2709 = vmatpush1.msra.mxu0 0.0
    %2710 = vmatprep.subr.mxu0 0.0
    %2711 = vmatpush1.msra.mxu0 0.0
    %2712 = vmatprep.subr.mxu0 0.0
    %2713 = vmatpush1.msra.mxu0 0.0
    %2714 = vmatprep.subr.mxu0 0.0
    %2715 = vmatpush1.msra.mxu0 0.0
    %2716 = vmatprep.subr.mxu0 0.0
    %2717 = vmatpush1.msra.mxu0 0.0
    %2718 = vmatprep.subr.mxu0 0.0
    %2719 = vmatpush1.msra.mxu0 0.0
    %2720 = vmatprep.subr.mxu0 0.0
    %2721 = vmatpush1.msra.mxu0 0.0
    %2722 = vmatprep.subr.mxu0 0.0
    %2723 = vmatpush1.msra.mxu0 0.0
    %2724 = vmatprep.subr.mxu0 0.0
    %2725 = vmatpush1.msra.mxu0 0.0
    %2726 = vmatprep.subr.mxu0 0.0
    %2727 = vmatpush1.msra.mxu0 0.0
    %2728 = vmatprep.subr.mxu0 0.0
    %2729 = vmatpush1.msra.mxu0 0.0
    %2730 = vmatprep.subr.mxu0 0.0
    %2731 = vmatpush1.msra.mxu0 0.0
    %2732 = vmatprep.subr.mxu0 0.0
    %2733 = vmatpush1.msra.mxu0 0.0
    %2734 = vmatprep.subr.mxu0 0.0
    %2735 = vmatpush1.msra.mxu0 0.0
    %2736 = vmatprep.subr.mxu0 0.0
    %2737 = vmatpush1.msra.mxu0 0.0
    %2738 = vmatprep.subr.mxu0 0.0
    %2739 = vmatpush1.msra.mxu0 0.0
    %2740 = vmatprep.subr.mxu0 0.0
    %2741 = vmatpush1.msra.mxu0 0.0
    %2742 = vmatprep.subr.mxu0 0.0
    %2743 = vmatpush1.msra.mxu0 0.0
    %2744 = vmatprep.subr.mxu0 0.0
    %2745 = vmatpush1.msra.mxu0 0.0
    %2746 = vmatprep.subr.mxu0 0.0
    %2747 = vmatpush1.msra.mxu0 0.0
    %2748 = vmatprep.subr.mxu0 0.0
    %2749 = vmatpush1.msra.mxu0 0.0
    %2750 = vmatprep.subr.mxu0 0.0
    %2751 = vmatpush1.msra.mxu0 0.0
    %2752 = vmatprep.subr.mxu0 0.0
    %2753 = vmatpush1.msra.mxu0 0.0
    %2754 = vmatprep.subr.mxu0 0.0
    %2755 = vmatpush1.msra.mxu0 0.0
    %2756 = vmatprep.subr.mxu0 0.0
    %2757 = vmatpush1.msra.mxu0 0.0
    %2758 = vmatprep.subr.mxu0 0.0
    %2759 = vmatpush1.msra.mxu0 0.0
    %2760 = vmatprep.subr.mxu0 0.0
    %2761 = vmatpush1.msra.mxu0 0.0
    %2762 = vmatprep.subr.mxu0 0.0
    %2763 = vmatpush1.msra.mxu0 0.0
    %2764 = vmatprep.subr.mxu0 0.0
    %2765 = vmatpush1.msra.mxu0 0.0
    %2766 = vmatprep.mubr.f32.mxu0 0.0
    %v2767 = vand.u32 %v507, 4294901760
    %2768 = vmatmul.mubr.f32.gmra.mrb[0].mxu0 %v2767
    %v2769 = vpop.f32.mrb[0].mxu0
    %v2770 = vadd.f32 %v2664, %v2769
    %v2771 = vpop.f32.mrb[0].mxu0
    %2772 = vmatprep.mubr.f32.mxu0 0.0
    %v2773 = vand.u32 %v510, 4294901760
    %2774 = vmatmul.mubr.f32.gmra.mrb[0].mxu0 %v2773
    %v2775 = vpop.f32.mrb[0].mxu0
    %v2776 = vadd.f32 %v2674, %v2775
    %v2777 = vpop.f32.mrb[0].mxu0
    %2778 = vmatprep.mubr.f32.mxu0 0.0
    %v2779 = vand.u32 %v513, 4294901760
    %2780 = vmatmul.mubr.f32.gmra.mrb[0].mxu0 %v2779
    %v2781 = vpop.f32.mrb[0].mxu0
    %v2782 = vadd.f32 %v2684, %v2781
    %v2783 = vpop.f32.mrb[0].mxu0
    %2784 = vmatprep.mubr.f32.mxu0 0.0
    %v2785 = vand.u32 %v516, 4294901760
    %2786 = vmatmul.mubr.f32.gmra.mrb[0].mxu0 %v2785
    %v2787 = vpop.f32.mrb[0].mxu0
    %v2788 = vadd.f32 %v2694, %v2787
    %v2789 = vpop.f32.mrb[0].mxu0
    %2790 = vdwg.mxu0
    %2791 = vmatprep.subr.mxu0 0.0
    %v2792 = vand.u32 %v2589, 4294901760
    %v2793 = vsub.f32 %v2589, %v2792
    %2794 = vmatpush1.msra.mxu0 %v2793
    %2795 = vmatprep.subr.mxu0 0.0
    %2796 = vmatpush1.msra.mxu0 0.0
    %2797 = vmatprep.subr.mxu0 0.0
    %2798 = vmatpush1.msra.mxu0 0.0
    %2799 = vmatprep.subr.mxu0 0.0
    %2800 = vmatpush1.msra.mxu0 0.0
    %2801 = vmatprep.subr.mxu0 0.0
    %2802 = vmatpush1.msra.mxu0 0.0
    %2803 = vmatprep.subr.mxu0 0.0
    %2804 = vmatpush1.msra.mxu0 0.0
    %2805 = vmatprep.subr.mxu0 0.0
    %2806 = vmatpush1.msra.mxu0 0.0
    %2807 = vmatprep.subr.mxu0 0.0
    %2808 = vmatpush1.msra.mxu0 0.0
    %2809 = vmatprep.subr.mxu0 0.0
    %2810 = vmatpush1.msra.mxu0 0.0
    %2811 = vmatprep.subr.mxu0 0.0
    %2812 = vmatpush1.msra.mxu0 0.0
    %2813 = vmatprep.subr.mxu0 0.0
    %2814 = vmatpush1.msra.mxu0 0.0
    %2815 = vmatprep.subr.mxu0 0.0
    %2816 = vmatpush1.msra.mxu0 0.0
    %2817 = vmatprep.subr.mxu0 0.0
    %2818 = vmatpush1.msra.mxu0 0.0
    %2819 = vmatprep.subr.mxu0 0.0
    %2820 = vmatpush1.msra.mxu0 0.0
    %2821 = vmatprep.subr.mxu0 0.0
    %2822 = vmatpush1.msra.mxu0 0.0
    %2823 = vmatprep.subr.mxu0 0.0
    %2824 = vmatpush1.msra.mxu0 0.0
    %2825 = vmatprep.subr.mxu0 0.0
    %2826 = vmatpush1.msra.mxu0 0.0
    %2827 = vmatprep.subr.mxu0 0.0
    %2828 = vmatpush1.msra.mxu0 0.0
    %2829 = vmatprep.subr.mxu0 0.0
    %2830 = vmatpush1.msra.mxu0 0.0
    %2831 = vmatprep.subr.mxu0 0.0
    %2832 = vmatpush1.msra.mxu0 0.0
    %2833 = vmatprep.subr.mxu0 0.0
    %2834 = vmatpush1.msra.mxu0 0.0
    %2835 = vmatprep.subr.mxu0 0.0
    %2836 = vmatpush1.msra.mxu0 0.0
    %2837 = vmatprep.subr.mxu0 0.0
    %2838 = vmatpush1.msra.mxu0 0.0
    %2839 = vmatprep.subr.mxu0 0.0
    %2840 = vmatpush1.msra.mxu0 0.0
    %2841 = vmatprep.subr.mxu0 0.0
    %2842 = vmatpush1.msra.mxu0 0.0
    %2843 = vmatprep.subr.mxu0 0.0
    %2844 = vmatpush1.msra.mxu0 0.0
    %2845 = vmatprep.subr.mxu0 0.0
    %2846 = vmatpush1.msra.mxu0 0.0
    %2847 = vmatprep.subr.mxu0 0.0
    %2848 = vmatpush1.msra.mxu0 0.0
    %2849 = vmatprep.subr.mxu0 0.0
    %2850 = vmatpush1.msra.mxu0 0.0
    %2851 = vmatprep.subr.mxu0 0.0
    %2852 = vmatpush1.msra.mxu0 0.0
    %2853 = vmatprep.subr.mxu0 0.0
    %2854 = vmatpush1.msra.mxu0 0.0
    %2855 = vmatprep.subr.mxu0 0.0
    %2856 = vmatpush1.msra.mxu0 0.0
    %2857 = vmatprep.mubr.f32.mxu0 0.0
    %v2858 = vand.u32 %v507, 4294901760
    %v2859 = vsub.f32 %v507, %v2858
    %2860 = vmatmul.mubr.f32.gmra.mrb[0].mxu0 %v2859
    %v2861 = vpop.f32.mrb[0].mxu0
    %v2862 = vadd.f32 %v2770, %v2861
    %v2863 = vpop.f32.mrb[0].mxu0
    %2864 = vmatprep.mubr.f32.mxu0 0.0
    %v2865 = vand.u32 %v510, 4294901760
    %v2866 = vsub.f32 %v510, %v2865
    %2867 = vmatmul.mubr.f32.gmra.mrb[0].mxu0 %v2866
    %v2868 = vpop.f32.mrb[0].mxu0
    %v2869 = vadd.f32 %v2776, %v2868
    %v2870 = vpop.f32.mrb[0].mxu0
    %2871 = vmatprep.mubr.f32.mxu0 0.0
    %v2872 = vand.u32 %v513, 4294901760
    %v2873 = vsub.f32 %v513, %v2872
    %2874 = vmatmul.mubr.f32.gmra.mrb[0].mxu0 %v2873
    %v2875 = vpop.f32.mrb[0].mxu0
    %v2876 = vadd.f32 %v2782, %v2875
    %v2877 = vpop.f32.mrb[0].mxu0
    %2878 = vmatprep.mubr.f32.mxu0 0.0
    %v2879 = vand.u32 %v516, 4294901760
    %v2880 = vsub.f32 %v516, %v2879
    %2881 = vmatmul.mubr.f32.gmra.mrb[0].mxu0 %v2880
    %v2882 = vpop.f32.mrb[0].mxu0
    %v2883 = vadd.f32 %v2788, %v2882
    %v2884 = vpop.f32.mrb[0].mxu0
    %2885 = vdwg.mxu0
    %2886 = vmatprep.subr.mxu0 0.0
    %v2887 = vand.u32 %v2589, 4294901760
    %2888 = vmatpush1.msra.mxu0 %v2887
    %2889 = vmatprep.subr.mxu0 0.0
    %2890 = vmatpush1.msra.mxu0 0.0
    %2891 = vmatprep.subr.mxu0 0.0
    %2892 = vmatpush1.msra.mxu0 0.0
    %2893 = vmatprep.subr.mxu0 0.0
    %2894 = vmatpush1.msra.mxu0 0.0
    %2895 = vmatprep.subr.mxu0 0.0
    %2896 = vmatpush1.msra.mxu0 0.0
    %2897 = vmatprep.subr.mxu0 0.0
    %2898 = vmatpush1.msra.mxu0 0.0
    %2899 = vmatprep.subr.mxu0 0.0
    %2900 = vmatpush1.msra.mxu0 0.0
    %2901 = vmatprep.subr.mxu0 0.0
    %2902 = vmatpush1.msra.mxu0 0.0
    %2903 = vmatprep.subr.mxu0 0.0
    %2904 = vmatpush1.msra.mxu0 0.0
    %2905 = vmatprep.subr.mxu0 0.0
    %2906 = vmatpush1.msra.mxu0 0.0
    %2907 = vmatprep.subr.mxu0 0.0
    %2908 = vmatpush1.msra.mxu0 0.0
    %2909 = vmatprep.subr.mxu0 0.0
    %2910 = vmatpush1.msra.mxu0 0.0
    %2911 = vmatprep.subr.mxu0 0.0
    %2912 = vmatpush1.msra.mxu0 0.0
    %2913 = vmatprep.subr.mxu0 0.0
    %2914 = vmatpush1.msra.mxu0 0.0
    %2915 = vmatprep.subr.mxu0 0.0
    %2916 = vmatpush1.msra.mxu0 0.0
    %2917 = vmatprep.subr.mxu0 0.0
    %2918 = vmatpush1.msra.mxu0 0.0
    %2919 = vmatprep.subr.mxu0 0.0
    %2920 = vmatpush1.msra.mxu0 0.0
    %2921 = vmatprep.subr.mxu0 0.0
    %2922 = vmatpush1.msra.mxu0 0.0
    %2923 = vmatprep.subr.mxu0 0.0
    %2924 = vmatpush1.msra.mxu0 0.0
    %2925 = vmatprep.subr.mxu0 0.0
    %2926 = vmatpush1.msra.mxu0 0.0
    %2927 = vmatprep.subr.mxu0 0.0
    %2928 = vmatpush1.msra.mxu0 0.0
    %2929 = vmatprep.subr.mxu0 0.0
    %2930 = vmatpush1.msra.mxu0 0.0
    %2931 = vmatprep.subr.mxu0 0.0
    %2932 = vmatpush1.msra.mxu0 0.0
    %2933 = vmatprep.subr.mxu0 0.0
    %2934 = vmatpush1.msra.mxu0 0.0
    %2935 = vmatprep.subr.mxu0 0.0
    %2936 = vmatpush1.msra.mxu0 0.0
    %2937 = vmatprep.subr.mxu0 0.0
    %2938 = vmatpush1.msra.mxu0 0.0
    %2939 = vmatprep.subr.mxu0 0.0
    %2940 = vmatpush1.msra.mxu0 0.0
    %2941 = vmatprep.subr.mxu0 0.0
    %2942 = vmatpush1.msra.mxu0 0.0
    %2943 = vmatprep.subr.mxu0 0.0
    %2944 = vmatpush1.msra.mxu0 0.0
    %2945 = vmatprep.subr.mxu0 0.0
    %2946 = vmatpush1.msra.mxu0 0.0
    %2947 = vmatprep.subr.mxu0 0.0
    %2948 = vmatpush1.msra.mxu0 0.0
    %2949 = vmatprep.subr.mxu0 0.0
    %2950 = vmatpush1.msra.mxu0 0.0
    %2951 = vmatprep.mubr.f32.mxu0 0.0
    %v2952 = vand.u32 %v507, 4294901760
    %v2953 = vsub.f32 %v507, %v2952
    %v2954 = vand.u32 %v2953, 4294901760
    %2955 = vmatmul.mubr.f32.gmra.mrb[0].mxu0 %v2954
    %v2956 = vpop.f32.mrb[0].mxu0
    %v2957 = vadd.f32 %v2862, %v2956
    %v2958 = vpop.f32.mrb[0].mxu0
    %2959 = vmatprep.mubr.f32.mxu0 0.0
    %v2960 = vand.u32 %v510, 4294901760
    %v2961 = vsub.f32 %v510, %v2960
    %v2962 = vand.u32 %v2961, 4294901760
    %2963 = vmatmul.mubr.f32.gmra.mrb[0].mxu0 %v2962
    %v2964 = vpop.f32.mrb[0].mxu0
    %v2965 = vadd.f32 %v2869, %v2964
    %v2966 = vpop.f32.mrb[0].mxu0
    %2967 = vmatprep.mubr.f32.mxu0 0.0
    %v2968 = vand.u32 %v513, 4294901760
    %v2969 = vsub.f32 %v513, %v2968
    %v2970 = vand.u32 %v2969, 4294901760
    %2971 = vmatmul.mubr.f32.gmra.mrb[0].mxu0 %v2970
    %v2972 = vpop.f32.mrb[0].mxu0
    %v2973 = vadd.f32 %v2876, %v2972
    %v2974 = vpop.f32.mrb[0].mxu0
    %2975 = vmatprep.mubr.f32.mxu0 0.0
    %v2976 = vand.u32 %v516, 4294901760
    %v2977 = vsub.f32 %v516, %v2976
    %v2978 = vand.u32 %v2977, 4294901760
    %2979 = vmatmul.mubr.f32.gmra.mrb[0].mxu0 %v2978
    %v2980 = vpop.f32.mrb[0].mxu0
    %v2981 = vadd.f32 %v2883, %v2980
    %v2982 = vpop.f32.mrb[0].mxu0
    %2983 = vdwg.mxu0
    %2984 = vmatprep.subr.mxu0 0.0
    %v2985 = vand.u32 %v2589, 4294901760
    %v2986 = vsub.f32 %v2589, %v2985
    %v2987 = vand.u32 %v2986, 4294901760
    %2988 = vmatpush1.msra.mxu0 %v2987
    %2989 = vmatprep.subr.mxu0 0.0
    %2990 = vmatpush1.msra.mxu0 0.0
    %2991 = vmatprep.subr.mxu0 0.0
    %2992 = vmatpush1.msra.mxu0 0.0
    %2993 = vmatprep.subr.mxu0 0.0
    %2994 = vmatpush1.msra.mxu0 0.0
    %2995 = vmatprep.subr.mxu0 0.0
    %2996 = vmatpush1.msra.mxu0 0.0
    %2997 = vmatprep.subr.mxu0 0.0
    %2998 = vmatpush1.msra.mxu0 0.0
    %2999 = vmatprep.subr.mxu0 0.0
    %3000 = vmatpush1.msra.mxu0 0.0
    %3001 = vmatprep.subr.mxu0 0.0
    %3002 = vmatpush1.msra.mxu0 0.0
    %3003 = vmatprep.subr.mxu0 0.0
    %3004 = vmatpush1.msra.mxu0 0.0
    %3005 = vmatprep.subr.mxu0 0.0
    %3006 = vmatpush1.msra.mxu0 0.0
    %3007 = vmatprep.subr.mxu0 0.0
    %3008 = vmatpush1.msra.mxu0 0.0
    %3009 = vmatprep.subr.mxu0 0.0
    %3010 = vmatpush1.msra.mxu0 0.0
    %3011 = vmatprep.subr.mxu0 0.0
    %3012 = vmatpush1.msra.mxu0 0.0
    %3013 = vmatprep.subr.mxu0 0.0
    %3014 = vmatpush1.msra.mxu0 0.0
    %3015 = vmatprep.subr.mxu0 0.0
    %3016 = vmatpush1.msra.mxu0 0.0
    %3017 = vmatprep.subr.mxu0 0.0
    %3018 = vmatpush1.msra.mxu0 0.0
    %3019 = vmatprep.subr.mxu0 0.0
    %3020 = vmatpush1.msra.mxu0 0.0
    %3021 = vmatprep.subr.mxu0 0.0
    %3022 = vmatpush1.msra.mxu0 0.0
    %3023 = vmatprep.subr.mxu0 0.0
    %3024 = vmatpush1.msra.mxu0 0.0
    %3025 = vmatprep.subr.mxu0 0.0
    %3026 = vmatpush1.msra.mxu0 0.0
    %3027 = vmatprep.subr.mxu0 0.0
    %3028 = vmatpush1.msra.mxu0 0.0
    %3029 = vmatprep.subr.mxu0 0.0
    %3030 = vmatpush1.msra.mxu0 0.0
    %3031 = vmatprep.subr.mxu0 0.0
    %3032 = vmatpush1.msra.mxu0 0.0
    %3033 = vmatprep.subr.mxu0 0.0
    %3034 = vmatpush1.msra.mxu0 0.0
    %3035 = vmatprep.subr.mxu0 0.0
    %3036 = vmatpush1.msra.mxu0 0.0
    %3037 = vmatprep.subr.mxu0 0.0
    %3038 = vmatpush1.msra.mxu0 0.0
    %3039 = vmatprep.subr.mxu0 0.0
    %3040 = vmatpush1.msra.mxu0 0.0
    %3041 = vmatprep.subr.mxu0 0.0
    %3042 = vmatpush1.msra.mxu0 0.0
    %3043 = vmatprep.subr.mxu0 0.0
    %3044 = vmatpush1.msra.mxu0 0.0
    %3045 = vmatprep.subr.mxu0 0.0
    %3046 = vmatpush1.msra.mxu0 0.0
    %3047 = vmatprep.subr.mxu0 0.0
    %3048 = vmatpush1.msra.mxu0 0.0
    %3049 = vmatprep.subr.mxu0 0.0
    %3050 = vmatpush1.msra.mxu0 0.0
    %3051 = vmatprep.mubr.f32.mxu0 0.0
    %v3052 = vand.u32 %v507, 4294901760
    %3053 = vmatmul.mubr.f32.gmra.mrb[0].mxu0 %v3052
    %v3054 = vpop.f32.mrb[0].mxu0
    %v3055 = vadd.f32 %v2957, %v3054
    %v3056 = vpop.f32.mrb[0].mxu0
    %3057 = vmatprep.mubr.f32.mxu0 0.0
    %v3058 = vand.u32 %v510, 4294901760
    %3059 = vmatmul.mubr.f32.gmra.mrb[0].mxu0 %v3058
    %v3060 = vpop.f32.mrb[0].mxu0
    %v3061 = vadd.f32 %v2965, %v3060
    %v3062 = vpop.f32.mrb[0].mxu0
    %3063 = vmatprep.mubr.f32.mxu0 0.0
    %v3064 = vand.u32 %v513, 4294901760
    %3065 = vmatmul.mubr.f32.gmra.mrb[0].mxu0 %v3064
    %v3066 = vpop.f32.mrb[0].mxu0
    %v3067 = vadd.f32 %v2973, %v3066
    %v3068 = vpop.f32.mrb[0].mxu0
    %3069 = vmatprep.mubr.f32.mxu0 0.0
    %v3070 = vand.u32 %v516, 4294901760
    %3071 = vmatmul.mubr.f32.gmra.mrb[0].mxu0 %v3070
    %v3072 = vpop.f32.mrb[0].mxu0
    %v3073 = vadd.f32 %v2981, %v3072
    %v3074 = vpop.f32.mrb[0].mxu0
    %3075 = vdwg.mxu0
    %3076 = vmatprep.subr.mxu0 0.0
    %v3077 = vand.u32 %v2589, 4294901760
    %3078 = vmatpush1.msra.mxu0 %v3077
    %3079 = vmatprep.subr.mxu0 0.0
    %3080 = vmatpush1.msra.mxu0 0.0
    %3081 = vmatprep.subr.mxu0 0.0
    %3082 = vmatpush1.msra.mxu0 0.0
    %3083 = vmatprep.subr.mxu0 0.0
    %3084 = vmatpush1.msra.mxu0 0.0
    %3085 = vmatprep.subr.mxu0 0.0
    %3086 = vmatpush1.msra.mxu0 0.0
    %3087 = vmatprep.subr.mxu0 0.0
    %3088 = vmatpush1.msra.mxu0 0.0
    %3089 = vmatprep.subr.mxu0 0.0
    %3090 = vmatpush1.msra.mxu0 0.0
    %3091 = vmatprep.subr.mxu0 0.0
    %3092 = vmatpush1.msra.mxu0 0.0
    %3093 = vmatprep.subr.mxu0 0.0
    %3094 = vmatpush1.msra.mxu0 0.0
    %3095 = vmatprep.subr.mxu0 0.0
    %3096 = vmatpush1.msra.mxu0 0.0
    %3097 = vmatprep.subr.mxu0 0.0
    %3098 = vmatpush1.msra.mxu0 0.0
    %3099 = vmatprep.subr.mxu0 0.0
    %3100 = vmatpush1.msra.mxu0 0.0
    %3101 = vmatprep.subr.mxu0 0.0
    %3102 = vmatpush1.msra.mxu0 0.0
    %3103 = vmatprep.subr.mxu0 0.0
    %3104 = vmatpush1.msra.mxu0 0.0
    %3105 = vmatprep.subr.mxu0 0.0
    %3106 = vmatpush1.msra.mxu0 0.0
    %3107 = vmatprep.subr.mxu0 0.0
    %3108 = vmatpush1.msra.mxu0 0.0
    %3109 = vmatprep.subr.mxu0 0.0
    %3110 = vmatpush1.msra.mxu0 0.0
    %3111 = vmatprep.subr.mxu0 0.0
    %3112 = vmatpush1.msra.mxu0 0.0
    %3113 = vmatprep.subr.mxu0 0.0
    %3114 = vmatpush1.msra.mxu0 0.0
    %3115 = vmatprep.subr.mxu0 0.0
    %3116 = vmatpush1.msra.mxu0 0.0
    %3117 = vmatprep.subr.mxu0 0.0
    %3118 = vmatpush1.msra.mxu0 0.0
    %3119 = vmatprep.subr.mxu0 0.0
    %3120 = vmatpush1.msra.mxu0 0.0
    %3121 = vmatprep.subr.mxu0 0.0
    %3122 = vmatpush1.msra.mxu0 0.0
    %3123 = vmatprep.subr.mxu0 0.0
    %3124 = vmatpush1.msra.mxu0 0.0
    %3125 = vmatprep.subr.mxu0 0.0
    %3126 = vmatpush1.msra.mxu0 0.0
    %3127 = vmatprep.subr.mxu0 0.0
    %3128 = vmatpush1.msra.mxu0 0.0
    %3129 = vmatprep.subr.mxu0 0.0
    %3130 = vmatpush1.msra.mxu0 0.0
    %3131 = vmatprep.subr.mxu0 0.0
    %3132 = vmatpush1.msra.mxu0 0.0
    %3133 = vmatprep.subr.mxu0 0.0
    %3134 = vmatpush1.msra.mxu0 0.0
    %3135 = vmatprep.subr.mxu0 0.0
    %3136 = vmatpush1.msra.mxu0 0.0
    %3137 = vmatprep.subr.mxu0 0.0
    %3138 = vmatpush1.msra.mxu0 0.0
    %3139 = vmatprep.subr.mxu0 0.0
    %3140 = vmatpush1.msra.mxu0 0.0
    %3141 = vmatprep.mubr.f32.mxu0 0.0
    %v3142 = vand.u32 %v507, 4294901760
    %3143 = vmatmul.mubr.f32.gmra.mrb[0].mxu0 %v3142
    %v3144 = vpop.f32.mrb[0].mxu0
    %v3145 = vadd.f32 %v3055, %v3144
    %v3146 = vpop.f32.mrb[0].mxu0
    %3147 = vmatprep.mubr.f32.mxu0 0.0
    %v3148 = vand.u32 %v510, 4294901760
    %3149 = vmatmul.mubr.f32.gmra.mrb[0].mxu0 %v3148
    %v3150 = vpop.f32.mrb[0].mxu0
    %v3151 = vadd.f32 %v3061, %v3150
    %v3152 = vpop.f32.mrb[0].mxu0
    %3153 = vmatprep.mubr.f32.mxu0 0.0
    %v3154 = vand.u32 %v513, 4294901760
    %3155 = vmatmul.mubr.f32.gmra.mrb[0].mxu0 %v3154
    %v3156 = vpop.f32.mrb[0].mxu0
    %v3157 = vadd.f32 %v3067, %v3156
    %v3158 = vpop.f32.mrb[0].mxu0
    %3159 = vmatprep.mubr.f32.mxu0 0.0
    %v3160 = vand.u32 %v516, 4294901760
    %3161 = vmatmul.mubr.f32.gmra.mrb[0].mxu0 %v3160
    %v3162 = vpop.f32.mrb[0].mxu0
    %v3163 = vadd.f32 %v3073, %v3162
    %v3164 = vpop.f32.mrb[0].mxu0
    %3165 = vdwg.mxu0
    %v3166 = vsub.f32 %v3145, %v3157
    %v3167 = vsub.f32 %v3151, %v3163
    %v3168 = vand.u32 2147483647, %v3166
    %v3169 = vand.u32 2147483647, %v3167
    %3170 = vmatprep.subr.mxu0 0.0
    %v3171 = vand.u32 %v3168, 4294901760
    %3172 = vmatpush1.msra.mxu0 %v3171
    %3173 = vmatprep.subr.mxu0 0.0
    %v3174 = vand.u32 %v3169, 4294901760
    %3175 = vmatpush1.msra.mxu0 %v3174
    %3176 = vmatprep.subr.mxu0 0.0
    %3177 = vmatpush1.msra.mxu0 0.0
    %3178 = vmatprep.subr.mxu0 0.0
    %3179 = vmatpush1.msra.mxu0 0.0
    %3180 = vmatprep.subr.mxu0 0.0
    %3181 = vmatpush1.msra.mxu0 0.0
    %3182 = vmatprep.subr.mxu0 0.0
    %3183 = vmatpush1.msra.mxu0 0.0
    %3184 = vmatprep.subr.mxu0 0.0
    %3185 = vmatpush1.msra.mxu0 0.0
    %3186 = vmatprep.subr.mxu0 0.0
    %3187 = vmatpush1.msra.mxu0 0.0
    %3188 = vmatprep.subr.mxu0 0.0
    %3189 = vmatpush1.msra.mxu0 0.0
    %3190 = vmatprep.subr.mxu0 0.0
    %3191 = vmatpush1.msra.mxu0 0.0
    %3192 = vmatprep.subr.mxu0 0.0
    %3193 = vmatpush1.msra.mxu0 0.0
    %3194 = vmatprep.subr.mxu0 0.0
    %3195 = vmatpush1.msra.mxu0 0.0
    %3196 = vmatprep.subr.mxu0 0.0
    %3197 = vmatpush1.msra.mxu0 0.0
    %3198 = vmatprep.subr.mxu0 0.0
    %3199 = vmatpush1.msra.mxu0 0.0
    %3200 = vmatprep.subr.mxu0 0.0
    %3201 = vmatpush1.msra.mxu0 0.0
    %3202 = vmatprep.subr.mxu0 0.0
    %3203 = vmatpush1.msra.mxu0 0.0
    %3204 = vmatprep.subr.mxu0 0.0
    %3205 = vmatpush1.msra.mxu0 0.0
    %3206 = vmatprep.subr.mxu0 0.0
    %3207 = vmatpush1.msra.mxu0 0.0
    %3208 = vmatprep.subr.mxu0 0.0
    %3209 = vmatpush1.msra.mxu0 0.0
    %3210 = vmatprep.subr.mxu0 0.0
    %3211 = vmatpush1.msra.mxu0 0.0
    %3212 = vmatprep.subr.mxu0 0.0
    %3213 = vmatpush1.msra.mxu0 0.0
    %3214 = vmatprep.subr.mxu0 0.0
    %3215 = vmatpush1.msra.mxu0 0.0
    %3216 = vmatprep.subr.mxu0 0.0
    %3217 = vmatpush1.msra.mxu0 0.0
    %3218 = vmatprep.subr.mxu0 0.0
    %3219 = vmatpush1.msra.mxu0 0.0
    %3220 = vmatprep.subr.mxu0 0.0
    %3221 = vmatpush1.msra.mxu0 0.0
    %3222 = vmatprep.subr.mxu0 0.0
    %3223 = vmatpush1.msra.mxu0 0.0
    %3224 = vmatprep.subr.mxu0 0.0
    %3225 = vmatpush1.msra.mxu0 0.0
    %3226 = vmatprep.subr.mxu0 0.0
    %3227 = vmatpush1.msra.mxu0 0.0
    %3228 = vmatprep.subr.mxu0 0.0
    %3229 = vmatpush1.msra.mxu0 0.0
    %3230 = vmatprep.subr.mxu0 0.0
    %3231 = vmatpush1.msra.mxu0 0.0
    %3232 = vmatprep.subr.mxu0 0.0
    %3233 = vmatpush1.msra.mxu0 0.0
    %3234 = vmatprep.subr.mxu0 0.0
    %3235 = vmatpush1.msra.mxu0 0.0
    %3236 = vmatprep.mubr.f32.mxu0 0.0
    %v3237 = vand.u32 %v1099, 4294901760
    %v3238 = vsub.f32 %v1099, %v3237
    %v3239 = vand.u32 %v3238, 4294901760
    %v3240 = vsub.f32 %v3238, %v3239
    %v3241 = vand.u32 %v3240, 4294901760
    %3242 = vmatmul.mubr.f32.gmra.mrb[0].mxu0 %v3241
    %v3243 = vpop.f32.mrb[0].mxu0
    %v3244 = vadd.f32 0.0, %v3243
    %v3245 = vpop.f32.mrb[0].mxu0
    %3246 = vdwg.mxu0
    %3247 = vmatprep.subr.mxu0 0.0
    %v3248 = vand.u32 %v3168, 4294901760
    %v3249 = vsub.f32 %v3168, %v3248
    %v3250 = vand.u32 %v3249, 4294901760
    %v3251 = vsub.f32 %v3249, %v3250
    %v3252 = vand.u32 %v3251, 4294901760
    %3253 = vmatpush1.msra.mxu0 %v3252
    %3254 = vmatprep.subr.mxu0 0.0
    %v3255 = vand.u32 %v3169, 4294901760
    %v3256 = vsub.f32 %v3169, %v3255
    %v3257 = vand.u32 %v3256, 4294901760
    %v3258 = vsub.f32 %v3256, %v3257
    %v3259 = vand.u32 %v3258, 4294901760
    %3260 = vmatpush1.msra.mxu0 %v3259
    %3261 = vmatprep.subr.mxu0 0.0
    %3262 = vmatpush1.msra.mxu0 0.0
    %3263 = vmatprep.subr.mxu0 0.0
    %3264 = vmatpush1.msra.mxu0 0.0
    %3265 = vmatprep.subr.mxu0 0.0
    %3266 = vmatpush1.msra.mxu0 0.0
    %3267 = vmatprep.subr.mxu0 0.0
    %3268 = vmatpush1.msra.mxu0 0.0
    %3269 = vmatprep.subr.mxu0 0.0
    %3270 = vmatpush1.msra.mxu0 0.0
    %3271 = vmatprep.subr.mxu0 0.0
    %3272 = vmatpush1.msra.mxu0 0.0
    %3273 = vmatprep.subr.mxu0 0.0
    %3274 = vmatpush1.msra.mxu0 0.0
    %3275 = vmatprep.subr.mxu0 0.0
    %3276 = vmatpush1.msra.mxu0 0.0
    %3277 = vmatprep.subr.mxu0 0.0
    %3278 = vmatpush1.msra.mxu0 0.0
    %3279 = vmatprep.subr.mxu0 0.0
    %3280 = vmatpush1.msra.mxu0 0.0
    %3281 = vmatprep.subr.mxu0 0.0
    %3282 = vmatpush1.msra.mxu0 0.0
    %3283 = vmatprep.subr.mxu0 0.0
    %3284 = vmatpush1.msra.mxu0 0.0
    %3285 = vmatprep.subr.mxu0 0.0
    %3286 = vmatpush1.msra.mxu0 0.0
    %3287 = vmatprep.subr.mxu0 0.0
    %3288 = vmatpush1.msra.mxu0 0.0
    %3289 = vmatprep.subr.mxu0 0.0
    %3290 = vmatpush1.msra.mxu0 0.0
    %3291 = vmatprep.subr.mxu0 0.0
    %3292 = vmatpush1.msra.mxu0 0.0
    %3293 = vmatprep.subr.mxu0 0.0
    %3294 = vmatpush1.msra.mxu0 0.0
    %3295 = vmatprep.subr.mxu0 0.0
    %3296 = vmatpush1.msra.mxu0 0.0
    %3297 = vmatprep.subr.mxu0 0.0
    %3298 = vmatpush1.msra.mxu0 0.0
    %3299 = vmatprep.subr.mxu0 0.0
    %3300 = vmatpush1.msra.mxu0 0.0
    %3301 = vmatprep.subr.mxu0 0.0
    %3302 = vmatpush1.msra.mxu0 0.0
    %3303 = vmatprep.subr.mxu0 0.0
    %3304 = vmatpush1.msra.mxu0 0.0
    %3305 = vmatprep.subr.mxu0 0.0
    %3306 = vmatpush1.msra.mxu0 0.0
    %3307 = vmatprep.subr.mxu0 0.0
    %3308 = vmatpush1.msra.mxu0 0.0
    %3309 = vmatprep.subr.mxu0 0.0
    %3310 = vmatpush1.msra.mxu0 0.0
    %3311 = vmatprep.subr.mxu0 0.0
    %3312 = vmatpush1.msra.mxu0 0.0
    %3313 = vmatprep.subr.mxu0 0.0
    %3314 = vmatpush1.msra.mxu0 0.0
    %3315 = vmatprep.subr.mxu0 0.0
    %3316 = vmatpush1.msra.mxu0 0.0
    %3317 = vmatprep.subr.mxu0 0.0
    %3318 = vmatpush1.msra.mxu0 0.0
    %3319 = vmatprep.subr.mxu0 0.0
    %3320 = vmatpush1.msra.mxu0 0.0
    %3321 = vmatprep.mubr.f32.mxu0 0.0
    %v3322 = vand.u32 %v1099, 4294901760
    %3323 = vmatmul.mubr.f32.gmra.mrb[0].mxu0 %v3322
    %v3324 = vpop.f32.mrb[0].mxu0
    %v3325 = vadd.f32 %v3244, %v3324
    %v3326 = vpop.f32.mrb[0].mxu0
    %3327 = vdwg.mxu0
    %3328 = vmatprep.subr.mxu0 0.0
    %v3329 = vand.u32 %v3168, 4294901760
    %v3330 = vsub.f32 %v3168, %v3329
    %3331 = vmatpush1.msra.mxu0 %v3330
    %3332 = vmatprep.subr.mxu0 0.0
    %v3333 = vand.u32 %v3169, 4294901760
    %v3334 = vsub.f32 %v3169, %v3333
    %3335 = vmatpush1.msra.mxu0 %v3334
    %3336 = vmatprep.subr.mxu0 0.0
    %3337 = vmatpush1.msra.mxu0 0.0
    %3338 = vmatprep.subr.mxu0 0.0
    %3339 = vmatpush1.msra.mxu0 0.0
    %3340 = vmatprep.subr.mxu0 0.0
    %3341 = vmatpush1.msra.mxu0 0.0
    %3342 = vmatprep.subr.mxu0 0.0
    %3343 = vmatpush1.msra.mxu0 0.0
    %3344 = vmatprep.subr.mxu0 0.0
    %3345 = vmatpush1.msra.mxu0 0.0
    %3346 = vmatprep.subr.mxu0 0.0
    %3347 = vmatpush1.msra.mxu0 0.0
    %3348 = vmatprep.subr.mxu0 0.0
    %3349 = vmatpush1.msra.mxu0 0.0
    %3350 = vmatprep.subr.mxu0 0.0
    %3351 = vmatpush1.msra.mxu0 0.0
    %3352 = vmatprep.subr.mxu0 0.0
    %3353 = vmatpush1.msra.mxu0 0.0
    %3354 = vmatprep.subr.mxu0 0.0
    %3355 = vmatpush1.msra.mxu0 0.0
    %3356 = vmatprep.subr.mxu0 0.0
    %3357 = vmatpush1.msra.mxu0 0.0
    %3358 = vmatprep.subr.mxu0 0.0
    %3359 = vmatpush1.msra.mxu0 0.0
    %3360 = vmatprep.subr.mxu0 0.0
    %3361 = vmatpush1.msra.mxu0 0.0
    %3362 = vmatprep.subr.mxu0 0.0
    %3363 = vmatpush1.msra.mxu0 0.0
    %3364 = vmatprep.subr.mxu0 0.0
    %3365 = vmatpush1.msra.mxu0 0.0
    %3366 = vmatprep.subr.mxu0 0.0
    %3367 = vmatpush1.msra.mxu0 0.0
    %3368 = vmatprep.subr.mxu0 0.0
    %3369 = vmatpush1.msra.mxu0 0.0
    %3370 = vmatprep.subr.mxu0 0.0
    %3371 = vmatpush1.msra.mxu0 0.0
    %3372 = vmatprep.subr.mxu0 0.0
    %3373 = vmatpush1.msra.mxu0 0.0
    %3374 = vmatprep.subr.mxu0 0.0
    %3375 = vmatpush1.msra.mxu0 0.0
    %3376 = vmatprep.subr.mxu0 0.0
    %3377 = vmatpush1.msra.mxu0 0.0
    %3378 = vmatprep.subr.mxu0 0.0
    %3379 = vmatpush1.msra.mxu0 0.0
    %3380 = vmatprep.subr.mxu0 0.0
    %3381 = vmatpush1.msra.mxu0 0.0
    %3382 = vmatprep.subr.mxu0 0.0
    %3383 = vmatpush1.msra.mxu0 0.0
    %3384 = vmatprep.subr.mxu0 0.0
    %3385 = vmatpush1.msra.mxu0 0.0
    %3386 = vmatprep.subr.mxu0 0.0
    %3387 = vmatpush1.msra.mxu0 0.0
    %3388 = vmatprep.subr.mxu0 0.0
    %3389 = vmatpush1.msra.mxu0 0.0
    %3390 = vmatprep.subr.mxu0 0.0
    %3391 = vmatpush1.msra.mxu0 0.0
    %3392 = vmatprep.subr.mxu0 0.0
    %3393 = vmatpush1.msra.mxu0 0.0
    %3394 = vmatprep.subr.mxu0 0.0
    %3395 = vmatpush1.msra.mxu0 0.0
    %3396 = vmatprep.mubr.f32.mxu0 0.0
    %v3397 = vand.u32 %v1099, 4294901760
    %v3398 = vsub.f32 %v1099, %v3397
    %3399 = vmatmul.mubr.f32.gmra.mrb[0].mxu0 %v3398
    %v3400 = vpop.f32.mrb[0].mxu0
    %v3401 = vadd.f32 %v3325, %v3400
    %v3402 = vpop.f32.mrb[0].mxu0
    %3403 = vdwg.mxu0
    %3404 = vmatprep.subr.mxu0 0.0
    %v3405 = vand.u32 %v3168, 4294901760
    %3406 = vmatpush1.msra.mxu0 %v3405
    %3407 = vmatprep.subr.mxu0 0.0
    %v3408 = vand.u32 %v3169, 4294901760
    %3409 = vmatpush1.msra.mxu0 %v3408
    %3410 = vmatprep.subr.mxu0 0.0
    %3411 = vmatpush1.msra.mxu0 0.0
    %3412 = vmatprep.subr.mxu0 0.0
    %3413 = vmatpush1.msra.mxu0 0.0
    %3414 = vmatprep.subr.mxu0 0.0
    %3415 = vmatpush1.msra.mxu0 0.0
    %3416 = vmatprep.subr.mxu0 0.0
    %3417 = vmatpush1.msra.mxu0 0.0
    %3418 = vmatprep.subr.mxu0 0.0
    %3419 = vmatpush1.msra.mxu0 0.0
    %3420 = vmatprep.subr.mxu0 0.0
    %3421 = vmatpush1.msra.mxu0 0.0
    %3422 = vmatprep.subr.mxu0 0.0
    %3423 = vmatpush1.msra.mxu0 0.0
    %3424 = vmatprep.subr.mxu0 0.0
    %3425 = vmatpush1.msra.mxu0 0.0
    %3426 = vmatprep.subr.mxu0 0.0
    %3427 = vmatpush1.msra.mxu0 0.0
    %3428 = vmatprep.subr.mxu0 0.0
    %3429 = vmatpush1.msra.mxu0 0.0
    %3430 = vmatprep.subr.mxu0 0.0
    %3431 = vmatpush1.msra.mxu0 0.0
    %3432 = vmatprep.subr.mxu0 0.0
    %3433 = vmatpush1.msra.mxu0 0.0
    %3434 = vmatprep.subr.mxu0 0.0
    %3435 = vmatpush1.msra.mxu0 0.0
    %3436 = vmatprep.subr.mxu0 0.0
    %3437 = vmatpush1.msra.mxu0 0.0
    %3438 = vmatprep.subr.mxu0 0.0
    %3439 = vmatpush1.msra.mxu0 0.0
    %3440 = vmatprep.subr.mxu0 0.0
    %3441 = vmatpush1.msra.mxu0 0.0
    %3442 = vmatprep.subr.mxu0 0.0
    %3443 = vmatpush1.msra.mxu0 0.0
    %3444 = vmatprep.subr.mxu0 0.0
    %3445 = vmatpush1.msra.mxu0 0.0
    %3446 = vmatprep.subr.mxu0 0.0
    %3447 = vmatpush1.msra.mxu0 0.0
    %3448 = vmatprep.subr.mxu0 0.0
    %3449 = vmatpush1.msra.mxu0 0.0
    %3450 = vmatprep.subr.mxu0 0.0
    %3451 = vmatpush1.msra.mxu0 0.0
    %3452 = vmatprep.subr.mxu0 0.0
    %3453 = vmatpush1.msra.mxu0 0.0
    %3454 = vmatprep.subr.mxu0 0.0
    %3455 = vmatpush1.msra.mxu0 0.0
    %3456 = vmatprep.subr.mxu0 0.0
    %3457 = vmatpush1.msra.mxu0 0.0
    %3458 = vmatprep.subr.mxu0 0.0
    %3459 = vmatpush1.msra.mxu0 0.0
    %3460 = vmatprep.subr.mxu0 0.0
    %3461 = vmatpush1.msra.mxu0 0.0
    %3462 = vmatprep.subr.mxu0 0.0
    %3463 = vmatpush1.msra.mxu0 0.0
    %3464 = vmatprep.subr.mxu0 0.0
    %3465 = vmatpush1.msra.mxu0 0.0
    %3466 = vmatprep.subr.mxu0 0.0
    %3467 = vmatpush1.msra.mxu0 0.0
    %3468 = vmatprep.subr.mxu0 0.0
    %3469 = vmatpush1.msra.mxu0 0.0
    %3470 = vmatprep.mubr.f32.mxu0 0.0
    %v3471 = vand.u32 %v1099, 4294901760
    %v3472 = vsub.f32 %v1099, %v3471
    %v3473 = vand.u32 %v3472, 4294901760
    %3474 = vmatmul.mubr.f32.gmra.mrb[0].mxu0 %v3473
    %v3475 = vpop.f32.mrb[0].mxu0
    %v3476 = vadd.f32 %v3401, %v3475
    %v3477 = vpop.f32.mrb[0].mxu0
    %3478 = vdwg.mxu0
    %3479 = vmatprep.subr.mxu0 0.0
    %v3480 = vand.u32 %v3168, 4294901760
    %v3481 = vsub.f32 %v3168, %v3480
    %v3482 = vand.u32 %v3481, 4294901760
    %3483 = vmatpush1.msra.mxu0 %v3482
    %3484 = vmatprep.subr.mxu0 0.0
    %v3485 = vand.u32 %v3169, 4294901760
    %v3486 = vsub.f32 %v3169, %v3485
    %v3487 = vand.u32 %v3486, 4294901760
    %3488 = vmatpush1.msra.mxu0 %v3487
    %3489 = vmatprep.subr.mxu0 0.0
    %3490 = vmatpush1.msra.mxu0 0.0
    %3491 = vmatprep.subr.mxu0 0.0
    %3492 = vmatpush1.msra.mxu0 0.0
    %3493 = vmatprep.subr.mxu0 0.0
    %3494 = vmatpush1.msra.mxu0 0.0
    %3495 = vmatprep.subr.mxu0 0.0
    %3496 = vmatpush1.msra.mxu0 0.0
    %3497 = vmatprep.subr.mxu0 0.0
    %3498 = vmatpush1.msra.mxu0 0.0
    %3499 = vmatprep.subr.mxu0 0.0
    %3500 = vmatpush1.msra.mxu0 0.0
    %3501 = vmatprep.subr.mxu0 0.0
    %3502 = vmatpush1.msra.mxu0 0.0
    %3503 = vmatprep.subr.mxu0 0.0
    %3504 = vmatpush1.msra.mxu0 0.0
    %3505 = vmatprep.subr.mxu0 0.0
    %3506 = vmatpush1.msra.mxu0 0.0
    %3507 = vmatprep.subr.mxu0 0.0
    %3508 = vmatpush1.msra.mxu0 0.0
    %3509 = vmatprep.subr.mxu0 0.0
    %3510 = vmatpush1.msra.mxu0 0.0
    %3511 = vmatprep.subr.mxu0 0.0
    %3512 = vmatpush1.msra.mxu0 0.0
    %3513 = vmatprep.subr.mxu0 0.0
    %3514 = vmatpush1.msra.mxu0 0.0
    %3515 = vmatprep.subr.mxu0 0.0
    %3516 = vmatpush1.msra.mxu0 0.0
    %3517 = vmatprep.subr.mxu0 0.0
    %3518 = vmatpush1.msra.mxu0 0.0
    %3519 = vmatprep.subr.mxu0 0.0
    %3520 = vmatpush1.msra.mxu0 0.0
    %3521 = vmatprep.subr.mxu0 0.0
    %3522 = vmatpush1.msra.mxu0 0.0
    %3523 = vmatprep.subr.mxu0 0.0
    %3524 = vmatpush1.msra.mxu0 0.0
    %3525 = vmatprep.subr.mxu0 0.0
    %3526 = vmatpush1.msra.mxu0 0.0
    %3527 = vmatprep.subr.mxu0 0.0
    %3528 = vmatpush1.msra.mxu0 0.0
    %3529 = vmatprep.subr.mxu0 0.0
    %3530 = vmatpush1.msra.mxu0 0.0
    %3531 = vmatprep.subr.mxu0 0.0
    %3532 = vmatpush1.msra.mxu0 0.0
    %3533 = vmatprep.subr.mxu0 0.0
    %3534 = vmatpush1.msra.mxu0 0.0
    %3535 = vmatprep.subr.mxu0 0.0
    %3536 = vmatpush1.msra.mxu0 0.0
    %3537 = vmatprep.subr.mxu0 0.0
    %3538 = vmatpush1.msra.mxu0 0.0
    %3539 = vmatprep.subr.mxu0 0.0
    %3540 = vmatpush1.msra.mxu0 0.0
    %3541 = vmatprep.subr.mxu0 0.0
    %3542 = vmatpush1.msra.mxu0 0.0
    %3543 = vmatprep.subr.mxu0 0.0
    %3544 = vmatpush1.msra.mxu0 0.0
    %3545 = vmatprep.subr.mxu0 0.0
    %3546 = vmatpush1.msra.mxu0 0.0
    %3547 = vmatprep.subr.mxu0 0.0
    %3548 = vmatpush1.msra.mxu0 0.0
    %3549 = vmatprep.mubr.f32.mxu0 0.0
    %v3550 = vand.u32 %v1099, 4294901760
    %3551 = vmatmul.mubr.f32.gmra.mrb[0].mxu0 %v3550
    %v3552 = vpop.f32.mrb[0].mxu0
    %v3553 = vadd.f32 %v3476, %v3552
    %v3554 = vpop.f32.mrb[0].mxu0
    %3555 = vdwg.mxu0
    %3556 = vmatprep.subr.mxu0 0.0
    %v3557 = vand.u32 %v3168, 4294901760
    %3558 = vmatpush1.msra.mxu0 %v3557
    %3559 = vmatprep.subr.mxu0 0.0
    %v3560 = vand.u32 %v3169, 4294901760
    %3561 = vmatpush1.msra.mxu0 %v3560
    %3562 = vmatprep.subr.mxu0 0.0
    %3563 = vmatpush1.msra.mxu0 0.0
    %3564 = vmatprep.subr.mxu0 0.0
    %3565 = vmatpush1.msra.mxu0 0.0
    %3566 = vmatprep.subr.mxu0 0.0
    %3567 = vmatpush1.msra.mxu0 0.0
    %3568 = vmatprep.subr.mxu0 0.0
    %3569 = vmatpush1.msra.mxu0 0.0
    %3570 = vmatprep.subr.mxu0 0.0
    %3571 = vmatpush1.msra.mxu0 0.0
    %3572 = vmatprep.subr.mxu0 0.0
    %3573 = vmatpush1.msra.mxu0 0.0
    %3574 = vmatprep.subr.mxu0 0.0
    %3575 = vmatpush1.msra.mxu0 0.0
    %3576 = vmatprep.subr.mxu0 0.0
    %3577 = vmatpush1.msra.mxu0 0.0
    %3578 = vmatprep.subr.mxu0 0.0
    %3579 = vmatpush1.msra.mxu0 0.0
    %3580 = vmatprep.subr.mxu0 0.0
    %3581 = vmatpush1.msra.mxu0 0.0
    %3582 = vmatprep.subr.mxu0 0.0
    %3583 = vmatpush1.msra.mxu0 0.0
    %3584 = vmatprep.subr.mxu0 0.0
    %3585 = vmatpush1.msra.mxu0 0.0
    %3586 = vmatprep.subr.mxu0 0.0
    %3587 = vmatpush1.msra.mxu0 0.0
    %3588 = vmatprep.subr.mxu0 0.0
    %3589 = vmatpush1.msra.mxu0 0.0
    %3590 = vmatprep.subr.mxu0 0.0
    %3591 = vmatpush1.msra.mxu0 0.0
    %3592 = vmatprep.subr.mxu0 0.0
    %3593 = vmatpush1.msra.mxu0 0.0
    %3594 = vmatprep.subr.mxu0 0.0
    %3595 = vmatpush1.msra.mxu0 0.0
    %3596 = vmatprep.subr.mxu0 0.0
    %3597 = vmatpush1.msra.mxu0 0.0
    %3598 = vmatprep.subr.mxu0 0.0
    %3599 = vmatpush1.msra.mxu0 0.0
    %3600 = vmatprep.subr.mxu0 0.0
    %3601 = vmatpush1.msra.mxu0 0.0
    %3602 = vmatprep.subr.mxu0 0.0
    %3603 = vmatpush1.msra.mxu0 0.0
    %3604 = vmatprep.subr.mxu0 0.0
    %3605 = vmatpush1.msra.mxu0 0.0
    %3606 = vmatprep.subr.mxu0 0.0
    %3607 = vmatpush1.msra.mxu0 0.0
    %3608 = vmatprep.subr.mxu0 0.0
    %3609 = vmatpush1.msra.mxu0 0.0
    %3610 = vmatprep.subr.mxu0 0.0
    %3611 = vmatpush1.msra.mxu0 0.0
    %3612 = vmatprep.subr.mxu0 0.0
    %3613 = vmatpush1.msra.mxu0 0.0
    %3614 = vmatprep.subr.mxu0 0.0
    %3615 = vmatpush1.msra.mxu0 0.0
    %3616 = vmatprep.subr.mxu0 0.0
    %3617 = vmatpush1.msra.mxu0 0.0
    %3618 = vmatprep.subr.mxu0 0.0
    %3619 = vmatpush1.msra.mxu0 0.0
    %3620 = vmatprep.subr.mxu0 0.0
    %3621 = vmatpush1.msra.mxu0 0.0
    %3622 = vmatprep.mubr.f32.mxu0 0.0
    %v3623 = vand.u32 %v1099, 4294901760
    %3624 = vmatmul.mubr.f32.gmra.mrb[0].mxu0 %v3623
    %v3625 = vpop.f32.mrb[0].mxu0
    %v3626 = vadd.f32 %v3553, %v3625
    %v3627 = vpop.f32.mrb[0].mxu0
    %3628 = vdwg.mxu0
    %v3629 = vld [vmem:[#allocation5 + $0x28] sm:$0xff]
    %v3630 = vld [vmem:[#allocation5 + $0x30] sm:$0xff]
    %v3631 = vld [vmem:[#allocation5 + $0x38] sm:$0xff]
    %v3632 = vld [vmem:[#allocation5 + $0x40] sm:$0xff]
    %v3633 = vld [vmem:[#allocation5 + $0x6a] sm:$0x1]
    %3635 = vrot.lane.b32.xlu0 %v3626, 16
    %v3636 = vpop.permute.xlu0 %3635
    %v3638 = vsel %vm1097, %v2589, %v3636
    %v3639 = vlaneseq
    %v3640 = vshrl.u32 %v3639, 7
    %v3641 = vsub.s32 0, %v3640
    %v3642 = vrot.slane %v3633, %v3641
    %v3644 = vsel %vm1574, %v3638, 0
    %3646 = vmatprep.subr.mxu0 0.0
    %v3647 = vand.u32 %v3629, 4294901760
    %3648 = vmatpush1.msra.mxu0 %v3647
    %3649 = vmatprep.subr.mxu0 0.0
    %v3650 = vand.u32 %v3630, 4294901760
    %3651 = vmatpush1.msra.mxu0 %v3650
    %3652 = vmatprep.subr.mxu0 0.0
    %v3653 = vand.u32 %v3631, 4294901760
    %3654 = vmatpush1.msra.mxu0 %v3653
    %3655 = vmatprep.subr.mxu0 0.0
    %v3656 = vand.u32 %v3632, 4294901760
    %3657 = vmatpush1.msra.mxu0 %v3656
    %3658 = vmatprep.subr.mxu0 0.0
    %3659 = vmatpush1.msra.mxu0 0.0
    %3660 = vmatprep.subr.mxu0 0.0
    %3661 = vmatpush1.msra.mxu0 0.0
    %3662 = vmatprep.subr.mxu0 0.0
    %3663 = vmatpush1.msra.mxu0 0.0
    %3664 = vmatprep.subr.mxu0 0.0
    %3665 = vmatpush1.msra.mxu0 0.0
    %3666 = vmatprep.subr.mxu0 0.0
    %3667 = vmatpush1.msra.mxu0 0.0
    %3668 = vmatprep.subr.mxu0 0.0
    %3669 = vmatpush1.msra.mxu0 0.0
    %3670 = vmatprep.subr.mxu0 0.0
    %3671 = vmatpush1.msra.mxu0 0.0
    %3672 = vmatprep.subr.mxu0 0.0
    %3673 = vmatpush1.msra.mxu0 0.0
    %3674 = vmatprep.subr.mxu0 0.0
    %3675 = vmatpush1.msra.mxu0 0.0
    %3676 = vmatprep.subr.mxu0 0.0
    %3677 = vmatpush1.msra.mxu0 0.0
    %3678 = vmatprep.subr.mxu0 0.0
    %3679 = vmatpush1.msra.mxu0 0.0
    %3680 = vmatprep.subr.mxu0 0.0
    %3681 = vmatpush1.msra.mxu0 0.0
    %3682 = vmatprep.subr.mxu0 0.0
    %3683 = vmatpush1.msra.mxu0 0.0
    %3684 = vmatprep.subr.mxu0 0.0
    %3685 = vmatpush1.msra.mxu0 0.0
    %3686 = vmatprep.subr.mxu0 0.0
    %3687 = vmatpush1.msra.mxu0 0.0
    %3688 = vmatprep.subr.mxu0 0.0
    %3689 = vmatpush1.msra.mxu0 0.0
    %3690 = vmatprep.subr.mxu0 0.0
    %3691 = vmatpush1.msra.mxu0 0.0
    %3692 = vmatprep.subr.mxu0 0.0
    %3693 = vmatpush1.msra.mxu0 0.0
    %3694 = vmatprep.subr.mxu0 0.0
    %3695 = vmatpush1.msra.mxu0 0.0
    %3696 = vmatprep.subr.mxu0 0.0
    %3697 = vmatpush1.msra.mxu0 0.0
    %3698 = vmatprep.subr.mxu0 0.0
    %3699 = vmatpush1.msra.mxu0 0.0
    %3700 = vmatprep.subr.mxu0 0.0
    %3701 = vmatpush1.msra.mxu0 0.0
    %3702 = vmatprep.subr.mxu0 0.0
    %3703 = vmatpush1.msra.mxu0 0.0
    %3704 = vmatprep.subr.mxu0 0.0
    %3705 = vmatpush1.msra.mxu0 0.0
    %3706 = vmatprep.subr.mxu0 0.0
    %3707 = vmatpush1.msra.mxu0 0.0
    %3708 = vmatprep.subr.mxu0 0.0
    %3709 = vmatpush1.msra.mxu0 0.0
    %3710 = vmatprep.subr.mxu0 0.0
    %3711 = vmatpush1.msra.mxu0 0.0
    %3712 = vmatprep.subr.mxu0 0.0
    %3713 = vmatpush1.msra.mxu0 0.0
    %3714 = vmatprep.mubr.f32.mxu0 0.0
    %v3715 = vand.u32 %v3644, 4294901760
    %v3716 = vsub.f32 %v3644, %v3715
    %v3717 = vand.u32 %v3716, 4294901760
    %v3718 = vsub.f32 %v3716, %v3717
    %v3719 = vand.u32 %v3718, 4294901760
    %3720 = vmatmul.mubr.f32.gmra.mrb[0].mxu0 %v3719
    %v3721 = vpop.f32.mrb[0].mxu0
    %v3722 = vadd.f32 %v3642, %v3721
    %v3723 = vpop.f32.mrb[0].mxu0
    %3724 = vdwg.mxu0
    %3725 = vmatprep.subr.mxu0 0.0
    %v3726 = vand.u32 %v3629, 4294901760
    %v3727 = vsub.f32 %v3629, %v3726
    %v3728 = vand.u32 %v3727, 4294901760
    %v3729 = vsub.f32 %v3727, %v3728
    %v3730 = vand.u32 %v3729, 4294901760
    %3731 = vmatpush1.msra.mxu0 %v3730
    %3732 = vmatprep.subr.mxu0 0.0
    %v3733 = vand.u32 %v3630, 4294901760
    %v3734 = vsub.f32 %v3630, %v3733
    %v3735 = vand.u32 %v3734, 4294901760
    %v3736 = vsub.f32 %v3734, %v3735
    %v3737 = vand.u32 %v3736, 4294901760
    %3738 = vmatpush1.msra.mxu0 %v3737
    %3739 = vmatprep.subr.mxu0 0.0
    %v3740 = vand.u32 %v3631, 4294901760
    %v3741 = vsub.f32 %v3631, %v3740
    %v3742 = vand.u32 %v3741, 4294901760
    %v3743 = vsub.f32 %v3741, %v3742
    %v3744 = vand.u32 %v3743, 4294901760
    %3745 = vmatpush1.msra.mxu0 %v3744
    %3746 = vmatprep.subr.mxu0 0.0
    %v3747 = vand.u32 %v3632, 4294901760
    %v3748 = vsub.f32 %v3632, %v3747
    %v3749 = vand.u32 %v3748, 4294901760
    %v3750 = vsub.f32 %v3748, %v3749
    %v3751 = vand.u32 %v3750, 4294901760
    %3752 = vmatpush1.msra.mxu0 %v3751
    %3753 = vmatprep.subr.mxu0 0.0
    %3754 = vmatpush1.msra.mxu0 0.0
    %3755 = vmatprep.subr.mxu0 0.0
    %3756 = vmatpush1.msra.mxu0 0.0
    %3757 = vmatprep.subr.mxu0 0.0
    %3758 = vmatpush1.msra.mxu0 0.0
    %3759 = vmatprep.subr.mxu0 0.0
    %3760 = vmatpush1.msra.mxu0 0.0
    %3761 = vmatprep.subr.mxu0 0.0
    %3762 = vmatpush1.msra.mxu0 0.0
    %3763 = vmatprep.subr.mxu0 0.0
    %3764 = vmatpush1.msra.mxu0 0.0
    %3765 = vmatprep.subr.mxu0 0.0
    %3766 = vmatpush1.msra.mxu0 0.0
    %3767 = vmatprep.subr.mxu0 0.0
    %3768 = vmatpush1.msra.mxu0 0.0
    %3769 = vmatprep.subr.mxu0 0.0
    %3770 = vmatpush1.msra.mxu0 0.0
    %3771 = vmatprep.subr.mxu0 0.0
    %3772 = vmatpush1.msra.mxu0 0.0
    %3773 = vmatprep.subr.mxu0 0.0
    %3774 = vmatpush1.msra.mxu0 0.0
    %3775 = vmatprep.subr.mxu0 0.0
    %3776 = vmatpush1.msra.mxu0 0.0
    %3777 = vmatprep.subr.mxu0 0.0
    %3778 = vmatpush1.msra.mxu0 0.0
    %3779 = vmatprep.subr.mxu0 0.0
    %3780 = vmatpush1.msra.mxu0 0.0
    %3781 = vmatprep.subr.mxu0 0.0
    %3782 = vmatpush1.msra.mxu0 0.0
    %3783 = vmatprep.subr.mxu0 0.0
    %3784 = vmatpush1.msra.mxu0 0.0
    %3785 = vmatprep.subr.mxu0 0.0
    %3786 = vmatpush1.msra.mxu0 0.0
    %3787 = vmatprep.subr.mxu0 0.0
    %3788 = vmatpush1.msra.mxu0 0.0
    %3789 = vmatprep.subr.mxu0 0.0
    %3790 = vmatpush1.msra.mxu0 0.0
    %3791 = vmatprep.subr.mxu0 0.0
    %3792 = vmatpush1.msra.mxu0 0.0
    %3793 = vmatprep.subr.mxu0 0.0
    %3794 = vmatpush1.msra.mxu0 0.0
    %3795 = vmatprep.subr.mxu0 0.0
    %3796 = vmatpush1.msra.mxu0 0.0
    %3797 = vmatprep.subr.mxu0 0.0
    %3798 = vmatpush1.msra.mxu0 0.0
    %3799 = vmatprep.subr.mxu0 0.0
    %3800 = vmatpush1.msra.mxu0 0.0
    %3801 = vmatprep.subr.mxu0 0.0
    %3802 = vmatpush1.msra.mxu0 0.0
    %3803 = vmatprep.subr.mxu0 0.0
    %3804 = vmatpush1.msra.mxu0 0.0
    %3805 = vmatprep.subr.mxu0 0.0
    %3806 = vmatpush1.msra.mxu0 0.0
    %3807 = vmatprep.subr.mxu0 0.0
    %3808 = vmatpush1.msra.mxu0 0.0
    %3809 = vmatprep.mubr.f32.mxu0 0.0
    %v3810 = vand.u32 %v3644, 4294901760
    %3811 = vmatmul.mubr.f32.gmra.mrb[0].mxu0 %v3810
    %v3812 = vpop.f32.mrb[0].mxu0
    %v3813 = vadd.f32 %v3722, %v3812
    %v3814 = vpop.f32.mrb[0].mxu0
    %3815 = vdwg.mxu0
    %3816 = vmatprep.subr.mxu0 0.0
    %v3817 = vand.u32 %v3629, 4294901760
    %v3818 = vsub.f32 %v3629, %v3817
    %3819 = vmatpush1.msra.mxu0 %v3818
    %3820 = vmatprep.subr.mxu0 0.0
    %v3821 = vand.u32 %v3630, 4294901760
    %v3822 = vsub.f32 %v3630, %v3821
    %3823 = vmatpush1.msra.mxu0 %v3822
    %3824 = vmatprep.subr.mxu0 0.0
    %v3825 = vand.u32 %v3631, 4294901760
    %v3826 = vsub.f32 %v3631, %v3825
    %3827 = vmatpush1.msra.mxu0 %v3826
    %3828 = vmatprep.subr.mxu0 0.0
    %v3829 = vand.u32 %v3632, 4294901760
    %v3830 = vsub.f32 %v3632, %v3829
    %3831 = vmatpush1.msra.mxu0 %v3830
    %3832 = vmatprep.subr.mxu0 0.0
    %3833 = vmatpush1.msra.mxu0 0.0
    %3834 = vmatprep.subr.mxu0 0.0
    %3835 = vmatpush1.msra.mxu0 0.0
    %3836 = vmatprep.subr.mxu0 0.0
    %3837 = vmatpush1.msra.mxu0 0.0
    %3838 = vmatprep.subr.mxu0 0.0
    %3839 = vmatpush1.msra.mxu0 0.0
    %3840 = vmatprep.subr.mxu0 0.0
    %3841 = vmatpush1.msra.mxu0 0.0
    %3842 = vmatprep.subr.mxu0 0.0
    %3843 = vmatpush1.msra.mxu0 0.0
    %3844 = vmatprep.subr.mxu0 0.0
    %3845 = vmatpush1.msra.mxu0 0.0
    %3846 = vmatprep.subr.mxu0 0.0
    %3847 = vmatpush1.msra.mxu0 0.0
    %3848 = vmatprep.subr.mxu0 0.0
    %3849 = vmatpush1.msra.mxu0 0.0
    %3850 = vmatprep.subr.mxu0 0.0
    %3851 = vmatpush1.msra.mxu0 0.0
    %3852 = vmatprep.subr.mxu0 0.0
    %3853 = vmatpush1.msra.mxu0 0.0
    %3854 = vmatprep.subr.mxu0 0.0
    %3855 = vmatpush1.msra.mxu0 0.0
    %3856 = vmatprep.subr.mxu0 0.0
    %3857 = vmatpush1.msra.mxu0 0.0
    %3858 = vmatprep.subr.mxu0 0.0
    %3859 = vmatpush1.msra.mxu0 0.0
    %3860 = vmatprep.subr.mxu0 0.0
    %3861 = vmatpush1.msra.mxu0 0.0
    %3862 = vmatprep.subr.mxu0 0.0
    %3863 = vmatpush1.msra.mxu0 0.0
    %3864 = vmatprep.subr.mxu0 0.0
    %3865 = vmatpush1.msra.mxu0 0.0
    %3866 = vmatprep.subr.mxu0 0.0
    %3867 = vmatpush1.msra.mxu0 0.0
    %3868 = vmatprep.subr.mxu0 0.0
    %3869 = vmatpush1.msra.mxu0 0.0
    %3870 = vmatprep.subr.mxu0 0.0
    %3871 = vmatpush1.msra.mxu0 0.0
    %3872 = vmatprep.subr.mxu0 0.0
    %3873 = vmatpush1.msra.mxu0 0.0
    %3874 = vmatprep.subr.mxu0 0.0
    %3875 = vmatpush1.msra.mxu0 0.0
    %3876 = vmatprep.subr.mxu0 0.0
    %3877 = vmatpush1.msra.mxu0 0.0
    %3878 = vmatprep.subr.mxu0 0.0
    %3879 = vmatpush1.msra.mxu0 0.0
    %3880 = vmatprep.subr.mxu0 0.0
    %3881 = vmatpush1.msra.mxu0 0.0
    %3882 = vmatprep.subr.mxu0 0.0
    %3883 = vmatpush1.msra.mxu0 0.0
    %3884 = vmatprep.subr.mxu0 0.0
    %3885 = vmatpush1.msra.mxu0 0.0
    %3886 = vmatprep.subr.mxu0 0.0
    %3887 = vmatpush1.msra.mxu0 0.0
    %3888 = vmatprep.mubr.f32.mxu0 0.0
    %v3889 = vand.u32 %v3644, 4294901760
    %v3890 = vsub.f32 %v3644, %v3889
    %3891 = vmatmul.mubr.f32.gmra.mrb[0].mxu0 %v3890
    %v3892 = vpop.f32.mrb[0].mxu0
    %v3893 = vadd.f32 %v3813, %v3892
    %v3894 = vpop.f32.mrb[0].mxu0
    %3895 = vdwg.mxu0
    %3896 = vmatprep.subr.mxu0 0.0
    %v3897 = vand.u32 %v3629, 4294901760
    %3898 = vmatpush1.msra.mxu0 %v3897
    %3899 = vmatprep.subr.mxu0 0.0
    %v3900 = vand.u32 %v3630, 4294901760
    %3901 = vmatpush1.msra.mxu0 %v3900
    %3902 = vmatprep.subr.mxu0 0.0
    %v3903 = vand.u32 %v3631, 4294901760
    %3904 = vmatpush1.msra.mxu0 %v3903
    %3905 = vmatprep.subr.mxu0 0.0
    %v3906 = vand.u32 %v3632, 4294901760
    %3907 = vmatpush1.msra.mxu0 %v3906
    %3908 = vmatprep.subr.mxu0 0.0
    %3909 = vmatpush1.msra.mxu0 0.0
    %3910 = vmatprep.subr.mxu0 0.0
    %3911 = vmatpush1.msra.mxu0 0.0
    %3912 = vmatprep.subr.mxu0 0.0
    %3913 = vmatpush1.msra.mxu0 0.0
    %3914 = vmatprep.subr.mxu0 0.0
    %3915 = vmatpush1.msra.mxu0 0.0
    %3916 = vmatprep.subr.mxu0 0.0
    %3917 = vmatpush1.msra.mxu0 0.0
    %3918 = vmatprep.subr.mxu0 0.0
    %3919 = vmatpush1.msra.mxu0 0.0
    %3920 = vmatprep.subr.mxu0 0.0
    %3921 = vmatpush1.msra.mxu0 0.0
    %3922 = vmatprep.subr.mxu0 0.0
    %3923 = vmatpush1.msra.mxu0 0.0
    %3924 = vmatprep.subr.mxu0 0.0
    %3925 = vmatpush1.msra.mxu0 0.0
    %3926 = vmatprep.subr.mxu0 0.0
    %3927 = vmatpush1.msra.mxu0 0.0
    %3928 = vmatprep.subr.mxu0 0.0
    %3929 = vmatpush1.msra.mxu0 0.0
    %3930 = vmatprep.subr.mxu0 0.0
    %3931 = vmatpush1.msra.mxu0 0.0
    %3932 = vmatprep.subr.mxu0 0.0
    %3933 = vmatpush1.msra.mxu0 0.0
    %3934 = vmatprep.subr.mxu0 0.0
    %3935 = vmatpush1.msra.mxu0 0.0
    %3936 = vmatprep.subr.mxu0 0.0
    %3937 = vmatpush1.msra.mxu0 0.0
    %3938 = vmatprep.subr.mxu0 0.0
    %3939 = vmatpush1.msra.mxu0 0.0
    %3940 = vmatprep.subr.mxu0 0.0
    %3941 = vmatpush1.msra.mxu0 0.0
    %3942 = vmatprep.subr.mxu0 0.0
    %3943 = vmatpush1.msra.mxu0 0.0
    %3944 = vmatprep.subr.mxu0 0.0
    %3945 = vmatpush1.msra.mxu0 0.0
    %3946 = vmatprep.subr.mxu0 0.0
    %3947 = vmatpush1.msra.mxu0 0.0
    %3948 = vmatprep.subr.mxu0 0.0
    %3949 = vmatpush1.msra.mxu0 0.0
    %3950 = vmatprep.subr.mxu0 0.0
    %3951 = vmatpush1.msra.mxu0 0.0
    %3952 = vmatprep.subr.mxu0 0.0
    %3953 = vmatpush1.msra.mxu0 0.0
    %3954 = vmatprep.subr.mxu0 0.0
    %3955 = vmatpush1.msra.mxu0 0.0
    %3956 = vmatprep.subr.mxu0 0.0
    %3957 = vmatpush1.msra.mxu0 0.0
    %3958 = vmatprep.subr.mxu0 0.0
    %3959 = vmatpush1.msra.mxu0 0.0
    %3960 = vmatprep.subr.mxu0 0.0
    %3961 = vmatpush1.msra.mxu0 0.0
    %3962 = vmatprep.subr.mxu0 0.0
    %3963 = vmatpush1.msra.mxu0 0.0
    %3964 = vmatprep.mubr.f32.mxu0 0.0
    %v3965 = vand.u32 %v3644, 4294901760
    %v3966 = vsub.f32 %v3644, %v3965
    %v3967 = vand.u32 %v3966, 4294901760
    %3968 = vmatmul.mubr.f32.gmra.mrb[0].mxu0 %v3967
    %v3969 = vpop.f32.mrb[0].mxu0
    %v3970 = vadd.f32 %v3893, %v3969
    %v3971 = vpop.f32.mrb[0].mxu0
    %3972 = vdwg.mxu0
    %3973 = vmatprep.subr.mxu0 0.0
    %v3974 = vand.u32 %v3629, 4294901760
    %v3975 = vsub.f32 %v3629, %v3974
    %v3976 = vand.u32 %v3975, 4294901760
    %3977 = vmatpush1.msra.mxu0 %v3976
    %3978 = vmatprep.subr.mxu0 0.0
    %v3979 = vand.u32 %v3630, 4294901760
    %v3980 = vsub.f32 %v3630, %v3979
    %v3981 = vand.u32 %v3980, 4294901760
    %3982 = vmatpush1.msra.mxu0 %v3981
    %3983 = vmatprep.subr.mxu0 0.0
    %v3984 = vand.u32 %v3631, 4294901760
    %v3985 = vsub.f32 %v3631, %v3984
    %v3986 = vand.u32 %v3985, 4294901760
    %3987 = vmatpush1.msra.mxu0 %v3986
    %3988 = vmatprep.subr.mxu0 0.0
    %v3989 = vand.u32 %v3632, 4294901760
    %v3990 = vsub.f32 %v3632, %v3989
    %v3991 = vand.u32 %v3990, 4294901760
    %3992 = vmatpush1.msra.mxu0 %v3991
    %3993 = vmatprep.subr.mxu0 0.0
    %3994 = vmatpush1.msra.mxu0 0.0
    %3995 = vmatprep.subr.mxu0 0.0
    %3996 = vmatpush1.msra.mxu0 0.0
    %3997 = vmatprep.subr.mxu0 0.0
    %3998 = vmatpush1.msra.mxu0 0.0
    %3999 = vmatprep.subr.mxu0 0.0
    %4000 = vmatpush1.msra.mxu0 0.0
    %4001 = vmatprep.subr.mxu0 0.0
    %4002 = vmatpush1.msra.mxu0 0.0
    %4003 = vmatprep.subr.mxu0 0.0
    %4004 = vmatpush1.msra.mxu0 0.0
    %4005 = vmatprep.subr.mxu0 0.0
    %4006 = vmatpush1.msra.mxu0 0.0
    %4007 = vmatprep.subr.mxu0 0.0
    %4008 = vmatpush1.msra.mxu0 0.0
    %4009 = vmatprep.subr.mxu0 0.0
    %4010 = vmatpush1.msra.mxu0 0.0
    %4011 = vmatprep.subr.mxu0 0.0
    %4012 = vmatpush1.msra.mxu0 0.0
    %4013 = vmatprep.subr.mxu0 0.0
    %4014 = vmatpush1.msra.mxu0 0.0
    %4015 = vmatprep.subr.mxu0 0.0
    %4016 = vmatpush1.msra.mxu0 0.0
    %4017 = vmatprep.subr.mxu0 0.0
    %4018 = vmatpush1.msra.mxu0 0.0
    %4019 = vmatprep.subr.mxu0 0.0
    %4020 = vmatpush1.msra.mxu0 0.0
    %4021 = vmatprep.subr.mxu0 0.0
    %4022 = vmatpush1.msra.mxu0 0.0
    %4023 = vmatprep.subr.mxu0 0.0
    %4024 = vmatpush1.msra.mxu0 0.0
    %4025 = vmatprep.subr.mxu0 0.0
    %4026 = vmatpush1.msra.mxu0 0.0
    %4027 = vmatprep.subr.mxu0 0.0
    %4028 = vmatpush1.msra.mxu0 0.0
    %4029 = vmatprep.subr.mxu0 0.0
    %4030 = vmatpush1.msra.mxu0 0.0
    %4031 = vmatprep.subr.mxu0 0.0
    %4032 = vmatpush1.msra.mxu0 0.0
    %4033 = vmatprep.subr.mxu0 0.0
    %4034 = vmatpush1.msra.mxu0 0.0
    %4035 = vmatprep.subr.mxu0 0.0
    %4036 = vmatpush1.msra.mxu0 0.0
    %4037 = vmatprep.subr.mxu0 0.0
    %4038 = vmatpush1.msra.mxu0 0.0
    %4039 = vmatprep.subr.mxu0 0.0
    %4040 = vmatpush1.msra.mxu0 0.0
    %4041 = vmatprep.subr.mxu0 0.0
    %4042 = vmatpush1.msra.mxu0 0.0
    %4043 = vmatprep.subr.mxu0 0.0
    %4044 = vmatpush1.msra.mxu0 0.0
    %4045 = vmatprep.subr.mxu0 0.0
    %4046 = vmatpush1.msra.mxu0 0.0
    %4047 = vmatprep.subr.mxu0 0.0
    %4048 = vmatpush1.msra.mxu0 0.0
    %4049 = vmatprep.mubr.f32.mxu0 0.0
    %v4050 = vand.u32 %v3644, 4294901760
    %4051 = vmatmul.mubr.f32.gmra.mrb[0].mxu0 %v4050
    %v4052 = vpop.f32.mrb[0].mxu0
    %v4053 = vadd.f32 %v3970, %v4052
    %v4054 = vpop.f32.mrb[0].mxu0
    %4055 = vdwg.mxu0
    %4056 = vmatprep.subr.mxu0 0.0
    %v4057 = vand.u32 %v3629, 4294901760
    %4058 = vmatpush1.msra.mxu0 %v4057
    %4059 = vmatprep.subr.mxu0 0.0
    %v4060 = vand.u32 %v3630, 4294901760
    %4061 = vmatpush1.msra.mxu0 %v4060
    %4062 = vmatprep.subr.mxu0 0.0
    %v4063 = vand.u32 %v3631, 4294901760
    %4064 = vmatpush1.msra.mxu0 %v4063
    %4065 = vmatprep.subr.mxu0 0.0
    %v4066 = vand.u32 %v3632, 4294901760
    %4067 = vmatpush1.msra.mxu0 %v4066
    %4068 = vmatprep.subr.mxu0 0.0
    %4069 = vmatpush1.msra.mxu0 0.0
    %4070 = vmatprep.subr.mxu0 0.0
    %4071 = vmatpush1.msra.mxu0 0.0
    %4072 = vmatprep.subr.mxu0 0.0
    %4073 = vmatpush1.msra.mxu0 0.0
    %4074 = vmatprep.subr.mxu0 0.0
    %4075 = vmatpush1.msra.mxu0 0.0
    %4076 = vmatprep.subr.mxu0 0.0
    %4077 = vmatpush1.msra.mxu0 0.0
    %4078 = vmatprep.subr.mxu0 0.0
    %4079 = vmatpush1.msra.mxu0 0.0
    %4080 = vmatprep.subr.mxu0 0.0
    %4081 = vmatpush1.msra.mxu0 0.0
    %4082 = vmatprep.subr.mxu0 0.0
    %4083 = vmatpush1.msra.mxu0 0.0
    %4084 = vmatprep.subr.mxu0 0.0
    %4085 = vmatpush1.msra.mxu0 0.0
    %4086 = vmatprep.subr.mxu0 0.0
    %4087 = vmatpush1.msra.mxu0 0.0
    %4088 = vmatprep.subr.mxu0 0.0
    %4089 = vmatpush1.msra.mxu0 0.0
    %4090 = vmatprep.subr.mxu0 0.0
    %4091 = vmatpush1.msra.mxu0 0.0
    %4092 = vmatprep.subr.mxu0 0.0
    %4093 = vmatpush1.msra.mxu0 0.0
    %4094 = vmatprep.subr.mxu0 0.0
    %4095 = vmatpush1.msra.mxu0 0.0
    %4096 = vmatprep.subr.mxu0 0.0
    %4097 = vmatpush1.msra.mxu0 0.0
    %4098 = vmatprep.subr.mxu0 0.0
    %4099 = vmatpush1.msra.mxu0 0.0
    %4100 = vmatprep.subr.mxu0 0.0
    %4101 = vmatpush1.msra.mxu0 0.0
    %4102 = vmatprep.subr.mxu0 0.0
    %4103 = vmatpush1.msra.mxu0 0.0
    %4104 = vmatprep.subr.mxu0 0.0
    %4105 = vmatpush1.msra.mxu0 0.0
    %4106 = vmatprep.subr.mxu0 0.0
    %4107 = vmatpush1.msra.mxu0 0.0
    %4108 = vmatprep.subr.mxu0 0.0
    %4109 = vmatpush1.msra.mxu0 0.0
    %4110 = vmatprep.subr.mxu0 0.0
    %4111 = vmatpush1.msra.mxu0 0.0
    %4112 = vmatprep.subr.mxu0 0.0
    %4113 = vmatpush1.msra.mxu0 0.0
    %4114 = vmatprep.subr.mxu0 0.0
    %4115 = vmatpush1.msra.mxu0 0.0
    %4116 = vmatprep.subr.mxu0 0.0
    %4117 = vmatpush1.msra.mxu0 0.0
    %4118 = vmatprep.subr.mxu0 0.0
    %4119 = vmatpush1.msra.mxu0 0.0
    %4120 = vmatprep.subr.mxu0 0.0
    %4121 = vmatpush1.msra.mxu0 0.0
    %4122 = vmatprep.subr.mxu0 0.0
    %4123 = vmatpush1.msra.mxu0 0.0
    %4124 = vmatprep.mubr.f32.mxu0 0.0
    %v4125 = vand.u32 %v3644, 4294901760
    %4126 = vmatmul.mubr.f32.gmra.mrb[0].mxu0 %v4125
    %v4127 = vpop.f32.mrb[0].mxu0
    %v4128 = vadd.f32 %v4053, %v4127
    %v4129 = vpop.f32.mrb[0].mxu0
    %4130 = vdwg.mxu0
    %v4131 = vmax.f32 %v4128, 0.0
    %v4133 = vsel %vm1097, %v4131, 0
    %4135 = vmatprep.subr.mxu0 0.0
    %v4136 = vand.u32 %v48, 4294901760
    %4137 = vmatpush1.msra.mxu0 %v4136
    %4138 = vmatprep.subr.mxu0 0.0
    %v4139 = vand.u32 %v49, 4294901760
    %4140 = vmatpush1.msra.mxu0 %v4139
    %4141 = vmatprep.subr.mxu0 0.0
    %4142 = vmatpush1.msra.mxu0 0.0
    %4143 = vmatprep.subr.mxu0 0.0
    %4144 = vmatpush1.msra.mxu0 0.0
    %4145 = vmatprep.subr.mxu0 0.0
    %4146 = vmatpush1.msra.mxu0 0.0
    %4147 = vmatprep.subr.mxu0 0.0
    %4148 = vmatpush1.msra.mxu0 0.0
    %4149 = vmatprep.subr.mxu0 0.0
    %4150 = vmatpush1.msra.mxu0 0.0
    %4151 = vmatprep.subr.mxu0 0.0
    %4152 = vmatpush1.msra.mxu0 0.0
    %4153 = vmatprep.subr.mxu0 0.0
    %4154 = vmatpush1.msra.mxu0 0.0
    %4155 = vmatprep.subr.mxu0 0.0
    %4156 = vmatpush1.msra.mxu0 0.0
    %4157 = vmatprep.subr.mxu0 0.0
    %4158 = vmatpush1.msra.mxu0 0.0
    %4159 = vmatprep.subr.mxu0 0.0
    %4160 = vmatpush1.msra.mxu0 0.0
    %4161 = vmatprep.subr.mxu0 0.0
    %4162 = vmatpush1.msra.mxu0 0.0
    %4163 = vmatprep.subr.mxu0 0.0
    %4164 = vmatpush1.msra.mxu0 0.0
    %4165 = vmatprep.subr.mxu0 0.0
    %4166 = vmatpush1.msra.mxu0 0.0
    %4167 = vmatprep.subr.mxu0 0.0
    %4168 = vmatpush1.msra.mxu0 0.0
    %4169 = vmatprep.subr.mxu0 0.0
    %4170 = vmatpush1.msra.mxu0 0.0
    %4171 = vmatprep.subr.mxu0 0.0
    %4172 = vmatpush1.msra.mxu0 0.0
    %4173 = vmatprep.subr.mxu0 0.0
    %4174 = vmatpush1.msra.mxu0 0.0
    %4175 = vmatprep.subr.mxu0 0.0
    %4176 = vmatpush1.msra.mxu0 0.0
    %4177 = vmatprep.subr.mxu0 0.0
    %4178 = vmatpush1.msra.mxu0 0.0
    %4179 = vmatprep.subr.mxu0 0.0
    %4180 = vmatpush1.msra.mxu0 0.0
    %4181 = vmatprep.subr.mxu0 0.0
    %4182 = vmatpush1.msra.mxu0 0.0
    %4183 = vmatprep.subr.mxu0 0.0
    %4184 = vmatpush1.msra.mxu0 0.0
    %4185 = vmatprep.subr.mxu0 0.0
    %4186 = vmatpush1.msra.mxu0 0.0
    %4187 = vmatprep.subr.mxu0 0.0
    %4188 = vmatpush1.msra.mxu0 0.0
    %4189 = vmatprep.subr.mxu0 0.0
    %4190 = vmatpush1.msra.mxu0 0.0
    %4191 = vmatprep.subr.mxu0 0.0
    %4192 = vmatpush1.msra.mxu0 0.0
    %4193 = vmatprep.subr.mxu0 0.0
    %4194 = vmatpush1.msra.mxu0 0.0
    %4195 = vmatprep.subr.mxu0 0.0
    %4196 = vmatpush1.msra.mxu0 0.0
    %4197 = vmatprep.subr.mxu0 0.0
    %4198 = vmatpush1.msra.mxu0 0.0
    %4199 = vmatprep.subr.mxu0 0.0
    %4200 = vmatpush1.msra.mxu0 0.0
    %4201 = vmatprep.mubr.f32.mxu0 0.0
    %v4202 = vand.u32 %v4133, 4294901760
    %v4203 = vsub.f32 %v4133, %v4202
    %v4204 = vand.u32 %v4203, 4294901760
    %v4205 = vsub.f32 %v4203, %v4204
    %v4206 = vand.u32 %v4205, 4294901760
    %4207 = vmatmul.mubr.f32.gmra.mrb[0].mxu0 %v4206
    %v4208 = vpop.f32.mrb[0].mxu0
    %v4209 = vadd.f32 %v2067, %v4208
    %v4210 = vpop.f32.mrb[0].mxu0
    %4211 = vdwg.mxu0
    %4212 = vmatprep.subr.mxu0 0.0
    %v4213 = vand.u32 %v48, 4294901760
    %v4214 = vsub.f32 %v48, %v4213
    %v4215 = vand.u32 %v4214, 4294901760
    %v4216 = vsub.f32 %v4214, %v4215
    %v4217 = vand.u32 %v4216, 4294901760
    %4218 = vmatpush1.msra.mxu0 %v4217
    %4219 = vmatprep.subr.mxu0 0.0
    %v4220 = vand.u32 %v49, 4294901760
    %v4221 = vsub.f32 %v49, %v4220
    %v4222 = vand.u32 %v4221, 4294901760
    %v4223 = vsub.f32 %v4221, %v4222
    %v4224 = vand.u32 %v4223, 4294901760
    %4225 = vmatpush1.msra.mxu0 %v4224
    %4226 = vmatprep.subr.mxu0 0.0
    %4227 = vmatpush1.msra.mxu0 0.0
    %4228 = vmatprep.subr.mxu0 0.0
    %4229 = vmatpush1.msra.mxu0 0.0
    %4230 = vmatprep.subr.mxu0 0.0
    %4231 = vmatpush1.msra.mxu0 0.0
    %4232 = vmatprep.subr.mxu0 0.0
    %4233 = vmatpush1.msra.mxu0 0.0
    %4234 = vmatprep.subr.mxu0 0.0
    %4235 = vmatpush1.msra.mxu0 0.0
    %4236 = vmatprep.subr.mxu0 0.0
    %4237 = vmatpush1.msra.mxu0 0.0
    %4238 = vmatprep.subr.mxu0 0.0
    %4239 = vmatpush1.msra.mxu0 0.0
    %4240 = vmatprep.subr.mxu0 0.0
    %4241 = vmatpush1.msra.mxu0 0.0
    %4242 = vmatprep.subr.mxu0 0.0
    %4243 = vmatpush1.msra.mxu0 0.0
    %4244 = vmatprep.subr.mxu0 0.0
    %4245 = vmatpush1.msra.mxu0 0.0
    %4246 = vmatprep.subr.mxu0 0.0
    %4247 = vmatpush1.msra.mxu0 0.0
    %4248 = vmatprep.subr.mxu0 0.0
    %4249 = vmatpush1.msra.mxu0 0.0
    %4250 = vmatprep.subr.mxu0 0.0
    %4251 = vmatpush1.msra.mxu0 0.0
    %4252 = vmatprep.subr.mxu0 0.0
    %4253 = vmatpush1.msra.mxu0 0.0
    %4254 = vmatprep.subr.mxu0 0.0
    %4255 = vmatpush1.msra.mxu0 0.0
    %4256 = vmatprep.subr.mxu0 0.0
    %4257 = vmatpush1.msra.mxu0 0.0
    %4258 = vmatprep.subr.mxu0 0.0
    %4259 = vmatpush1.msra.mxu0 0.0
    %4260 = vmatprep.subr.mxu0 0.0
    %4261 = vmatpush1.msra.mxu0 0.0
    %4262 = vmatprep.subr.mxu0 0.0
    %4263 = vmatpush1.msra.mxu0 0.0
    %4264 = vmatprep.subr.mxu0 0.0
    %4265 = vmatpush1.msra.mxu0 0.0
    %4266 = vmatprep.subr.mxu0 0.0
    %4267 = vmatpush1.msra.mxu0 0.0
    %4268 = vmatprep.subr.mxu0 0.0
    %4269 = vmatpush1.msra.mxu0 0.0
    %4270 = vmatprep.subr.mxu0 0.0
    %4271 = vmatpush1.msra.mxu0 0.0
    %4272 = vmatprep.subr.mxu0 0.0
    %4273 = vmatpush1.msra.mxu0 0.0
    %4274 = vmatprep.subr.mxu0 0.0
    %4275 = vmatpush1.msra.mxu0 0.0
    %4276 = vmatprep.subr.mxu0 0.0
    %4277 = vmatpush1.msra.mxu0 0.0
    %4278 = vmatprep.subr.mxu0 0.0
    %4279 = vmatpush1.msra.mxu0 0.0
    %4280 = vmatprep.subr.mxu0 0.0
    %4281 = vmatpush1.msra.mxu0 0.0
    %4282 = vmatprep.subr.mxu0 0.0
    %4283 = vmatpush1.msra.mxu0 0.0
    %4284 = vmatprep.subr.mxu0 0.0
    %4285 = vmatpush1.msra.mxu0 0.0
    %4286 = vmatprep.mubr.f32.mxu0 0.0
    %v4287 = vand.u32 %v4133, 4294901760
    %4288 = vmatmul.mubr.f32.gmra.mrb[0].mxu0 %v4287
    %v4289 = vpop.f32.mrb[0].mxu0
    %v4290 = vadd.f32 %v4209, %v4289
    %v4291 = vpop.f32.mrb[0].mxu0
    %4292 = vdwg.mxu0
    %4293 = vmatprep.subr.mxu0 0.0
    %v4294 = vand.u32 %v48, 4294901760
    %v4295 = vsub.f32 %v48, %v4294
    %4296 = vmatpush1.msra.mxu0 %v4295
    %4297 = vmatprep.subr.mxu0 0.0
    %v4298 = vand.u32 %v49, 4294901760
    %v4299 = vsub.f32 %v49, %v4298
    %4300 = vmatpush1.msra.mxu0 %v4299
    %4301 = vmatprep.subr.mxu0 0.0
    %4302 = vmatpush1.msra.mxu0 0.0
    %4303 = vmatprep.subr.mxu0 0.0
    %4304 = vmatpush1.msra.mxu0 0.0
    %4305 = vmatprep.subr.mxu0 0.0
    %4306 = vmatpush1.msra.mxu0 0.0
    %4307 = vmatprep.subr.mxu0 0.0
    %4308 = vmatpush1.msra.mxu0 0.0
    %4309 = vmatprep.subr.mxu0 0.0
    %4310 = vmatpush1.msra.mxu0 0.0
    %4311 = vmatprep.subr.mxu0 0.0
    %4312 = vmatpush1.msra.mxu0 0.0
    %4313 = vmatprep.subr.mxu0 0.0
    %4314 = vmatpush1.msra.mxu0 0.0
    %4315 = vmatprep.subr.mxu0 0.0
    %4316 = vmatpush1.msra.mxu0 0.0
    %4317 = vmatprep.subr.mxu0 0.0
    %4318 = vmatpush1.msra.mxu0 0.0
    %4319 = vmatprep.subr.mxu0 0.0
    %4320 = vmatpush1.msra.mxu0 0.0
    %4321 = vmatprep.subr.mxu0 0.0
    %4322 = vmatpush1.msra.mxu0 0.0
    %4323 = vmatprep.subr.mxu0 0.0
    %4324 = vmatpush1.msra.mxu0 0.0
    %4325 = vmatprep.subr.mxu0 0.0
    %4326 = vmatpush1.msra.mxu0 0.0
    %4327 = vmatprep.subr.mxu0 0.0
    %4328 = vmatpush1.msra.mxu0 0.0
    %4329 = vmatprep.subr.mxu0 0.0
    %4330 = vmatpush1.msra.mxu0 0.0
    %4331 = vmatprep.subr.mxu0 0.0
    %4332 = vmatpush1.msra.mxu0 0.0
    %4333 = vmatprep.subr.mxu0 0.0
    %4334 = vmatpush1.msra.mxu0 0.0
    %4335 = vmatprep.subr.mxu0 0.0
    %4336 = vmatpush1.msra.mxu0 0.0
    %4337 = vmatprep.subr.mxu0 0.0
    %4338 = vmatpush1.msra.mxu0 0.0
    %4339 = vmatprep.subr.mxu0 0.0
    %4340 = vmatpush1.msra.mxu0 0.0
    %4341 = vmatprep.subr.mxu0 0.0
    %4342 = vmatpush1.msra.mxu0 0.0
    %4343 = vmatprep.subr.mxu0 0.0
    %4344 = vmatpush1.msra.mxu0 0.0
    %4345 = vmatprep.subr.mxu0 0.0
    %4346 = vmatpush1.msra.mxu0 0.0
    %4347 = vmatprep.subr.mxu0 0.0
    %4348 = vmatpush1.msra.mxu0 0.0
    %4349 = vmatprep.subr.mxu0 0.0
    %4350 = vmatpush1.msra.mxu0 0.0
    %4351 = vmatprep.subr.mxu0 0.0
    %4352 = vmatpush1.msra.mxu0 0.0
    %4353 = vmatprep.subr.mxu0 0.0
    %4354 = vmatpush1.msra.mxu0 0.0
    %4355 = vmatprep.subr.mxu0 0.0
    %4356 = vmatpush1.msra.mxu0 0.0
    %4357 = vmatprep.subr.mxu0 0.0
    %4358 = vmatpush1.msra.mxu0 0.0
    %4359 = vmatprep.subr.mxu0 0.0
    %4360 = vmatpush1.msra.mxu0 0.0
    %4361 = vmatprep.mubr.f32.mxu0 0.0
    %v4362 = vand.u32 %v4133, 4294901760
    %v4363 = vsub.f32 %v4133, %v4362
    %4364 = vmatmul.mubr.f32.gmra.mrb[0].mxu0 %v4363
    %v4365 = vpop.f32.mrb[0].mxu0
    %v4366 = vadd.f32 %v4290, %v4365
    %v4367 = vpop.f32.mrb[0].mxu0
    %4368 = vdwg.mxu0
    %4369 = vmatprep.subr.mxu0 0.0
    %v4370 = vand.u32 %v48, 4294901760
    %4371 = vmatpush1.msra.mxu0 %v4370
    %4372 = vmatprep.subr.mxu0 0.0
    %v4373 = vand.u32 %v49, 4294901760
    %4374 = vmatpush1.msra.mxu0 %v4373
    %4375 = vmatprep.subr.mxu0 0.0
    %4376 = vmatpush1.msra.mxu0 0.0
    %4377 = vmatprep.subr.mxu0 0.0
    %4378 = vmatpush1.msra.mxu0 0.0
    %4379 = vmatprep.subr.mxu0 0.0
    %4380 = vmatpush1.msra.mxu0 0.0
    %4381 = vmatprep.subr.mxu0 0.0
    %4382 = vmatpush1.msra.mxu0 0.0
    %4383 = vmatprep.subr.mxu0 0.0
    %4384 = vmatpush1.msra.mxu0 0.0
    %4385 = vmatprep.subr.mxu0 0.0
    %4386 = vmatpush1.msra.mxu0 0.0
    %4387 = vmatprep.subr.mxu0 0.0
    %4388 = vmatpush1.msra.mxu0 0.0
    %4389 = vmatprep.subr.mxu0 0.0
    %4390 = vmatpush1.msra.mxu0 0.0
    %4391 = vmatprep.subr.mxu0 0.0
    %4392 = vmatpush1.msra.mxu0 0.0
    %4393 = vmatprep.subr.mxu0 0.0
    %4394 = vmatpush1.msra.mxu0 0.0
    %4395 = vmatprep.subr.mxu0 0.0
    %4396 = vmatpush1.msra.mxu0 0.0
    %4397 = vmatprep.subr.mxu0 0.0
    %4398 = vmatpush1.msra.mxu0 0.0
    %4399 = vmatprep.subr.mxu0 0.0
    %4400 = vmatpush1.msra.mxu0 0.0
    %4401 = vmatprep.subr.mxu0 0.0
    %4402 = vmatpush1.msra.mxu0 0.0
    %4403 = vmatprep.subr.mxu0 0.0
    %4404 = vmatpush1.msra.mxu0 0.0
    %4405 = vmatprep.subr.mxu0 0.0
    %4406 = vmatpush1.msra.mxu0 0.0
    %4407 = vmatprep.subr.mxu0 0.0
    %4408 = vmatpush1.msra.mxu0 0.0
    %4409 = vmatprep.subr.mxu0 0.0
    %4410 = vmatpush1.msra.mxu0 0.0
    %4411 = vmatprep.subr.mxu0 0.0
    %4412 = vmatpush1.msra.mxu0 0.0
    %4413 = vmatprep.subr.mxu0 0.0
    %4414 = vmatpush1.msra.mxu0 0.0
    %4415 = vmatprep.subr.mxu0 0.0
    %4416 = vmatpush1.msra.mxu0 0.0
    %4417 = vmatprep.subr.mxu0 0.0
    %4418 = vmatpush1.msra.mxu0 0.0
    %4419 = vmatprep.subr.mxu0 0.0
    %4420 = vmatpush1.msra.mxu0 0.0
    %4421 = vmatprep.subr.mxu0 0.0
    %4422 = vmatpush1.msra.mxu0 0.0
    %4423 = vmatprep.subr.mxu0 0.0
    %4424 = vmatpush1.msra.mxu0 0.0
    %4425 = vmatprep.subr.mxu0 0.0
    %4426 = vmatpush1.msra.mxu0 0.0
    %4427 = vmatprep.subr.mxu0 0.0
    %4428 = vmatpush1.msra.mxu0 0.0
    %4429 = vmatprep.subr.mxu0 0.0
    %4430 = vmatpush1.msra.mxu0 0.0
    %4431 = vmatprep.subr.mxu0 0.0
    %4432 = vmatpush1.msra.mxu0 0.0
    %4433 = vmatprep.subr.mxu0 0.0
    %4434 = vmatpush1.msra.mxu0 0.0
    %4435 = vmatprep.mubr.f32.mxu0 0.0
    %v4436 = vand.u32 %v4133, 4294901760
    %v4437 = vsub.f32 %v4133, %v4436
    %v4438 = vand.u32 %v4437, 4294901760
    %4439 = vmatmul.mubr.f32.gmra.mrb[0].mxu0 %v4438
    %v4440 = vpop.f32.mrb[0].mxu0
    %v4441 = vadd.f32 %v4366, %v4440
    %v4442 = vpop.f32.mrb[0].mxu0
    %4443 = vdwg.mxu0
    %4444 = vmatprep.subr.mxu0 0.0
    %v4445 = vand.u32 %v48, 4294901760
    %v4446 = vsub.f32 %v48, %v4445
    %v4447 = vand.u32 %v4446, 4294901760
    %4448 = vmatpush1.msra.mxu0 %v4447
    %4449 = vmatprep.subr.mxu0 0.0
    %v4450 = vand.u32 %v49, 4294901760
    %v4451 = vsub.f32 %v49, %v4450
    %v4452 = vand.u32 %v4451, 4294901760
    %4453 = vmatpush1.msra.mxu0 %v4452
    %4454 = vmatprep.subr.mxu0 0.0
    %4455 = vmatpush1.msra.mxu0 0.0
    %4456 = vmatprep.subr.mxu0 0.0
    %4457 = vmatpush1.msra.mxu0 0.0
    %4458 = vmatprep.subr.mxu0 0.0
    %4459 = vmatpush1.msra.mxu0 0.0
    %4460 = vmatprep.subr.mxu0 0.0
    %4461 = vmatpush1.msra.mxu0 0.0
    %4462 = vmatprep.subr.mxu0 0.0
    %4463 = vmatpush1.msra.mxu0 0.0
    %4464 = vmatprep.subr.mxu0 0.0
    %4465 = vmatpush1.msra.mxu0 0.0
    %4466 = vmatprep.subr.mxu0 0.0
    %4467 = vmatpush1.msra.mxu0 0.0
    %4468 = vmatprep.subr.mxu0 0.0
    %4469 = vmatpush1.msra.mxu0 0.0
    %4470 = vmatprep.subr.mxu0 0.0
    %4471 = vmatpush1.msra.mxu0 0.0
    %4472 = vmatprep.subr.mxu0 0.0
    %4473 = vmatpush1.msra.mxu0 0.0
    %4474 = vmatprep.subr.mxu0 0.0
    %4475 = vmatpush1.msra.mxu0 0.0
    %4476 = vmatprep.subr.mxu0 0.0
    %4477 = vmatpush1.msra.mxu0 0.0
    %4478 = vmatprep.subr.mxu0 0.0
    %4479 = vmatpush1.msra.mxu0 0.0
    %4480 = vmatprep.subr.mxu0 0.0
    %4481 = vmatpush1.msra.mxu0 0.0
    %4482 = vmatprep.subr.mxu0 0.0
    %4483 = vmatpush1.msra.mxu0 0.0
    %4484 = vmatprep.subr.mxu0 0.0
    %4485 = vmatpush1.msra.mxu0 0.0
    %4486 = vmatprep.subr.mxu0 0.0
    %4487 = vmatpush1.msra.mxu0 0.0
    %4488 = vmatprep.subr.mxu0 0.0
    %4489 = vmatpush1.msra.mxu0 0.0
    %4490 = vmatprep.subr.mxu0 0.0
    %4491 = vmatpush1.msra.mxu0 0.0
    %4492 = vmatprep.subr.mxu0 0.0
    %4493 = vmatpush1.msra.mxu0 0.0
    %4494 = vmatprep.subr.mxu0 0.0
    %4495 = vmatpush1.msra.mxu0 0.0
    %4496 = vmatprep.subr.mxu0 0.0
    %4497 = vmatpush1.msra.mxu0 0.0
    %4498 = vmatprep.subr.mxu0 0.0
    %4499 = vmatpush1.msra.mxu0 0.0
    %4500 = vmatprep.subr.mxu0 0.0
    %4501 = vmatpush1.msra.mxu0 0.0
    %4502 = vmatprep.subr.mxu0 0.0
    %4503 = vmatpush1.msra.mxu0 0.0
    %4504 = vmatprep.subr.mxu0 0.0
    %4505 = vmatpush1.msra.mxu0 0.0
    %4506 = vmatprep.subr.mxu0 0.0
    %4507 = vmatpush1.msra.mxu0 0.0
    %4508 = vmatprep.subr.mxu0 0.0
    %4509 = vmatpush1.msra.mxu0 0.0
    %4510 = vmatprep.subr.mxu0 0.0
    %4511 = vmatpush1.msra.mxu0 0.0
    %4512 = vmatprep.subr.mxu0 0.0
    %4513 = vmatpush1.msra.mxu0 0.0
    %4514 = vmatprep.mubr.f32.mxu0 0.0
    %v4515 = vand.u32 %v4133, 4294901760
    %4516 = vmatmul.mubr.f32.gmra.mrb[0].mxu0 %v4515
    %v4517 = vpop.f32.mrb[0].mxu0
    %v4518 = vadd.f32 %v4441, %v4517
    %v4519 = vpop.f32.mrb[0].mxu0
    %4520 = vdwg.mxu0
    %4521 = vmatprep.subr.mxu0 0.0
    %v4522 = vand.u32 %v48, 4294901760
    %4523 = vmatpush1.msra.mxu0 %v4522
    %4524 = vmatprep.subr.mxu0 0.0
    %v4525 = vand.u32 %v49, 4294901760
    %4526 = vmatpush1.msra.mxu0 %v4525
    %4527 = vmatprep.subr.mxu0 0.0
    %4528 = vmatpush1.msra.mxu0 0.0
    %4529 = vmatprep.subr.mxu0 0.0
    %4530 = vmatpush1.msra.mxu0 0.0
    %4531 = vmatprep.subr.mxu0 0.0
    %4532 = vmatpush1.msra.mxu0 0.0
    %4533 = vmatprep.subr.mxu0 0.0
    %4534 = vmatpush1.msra.mxu0 0.0
    %4535 = vmatprep.subr.mxu0 0.0
    %4536 = vmatpush1.msra.mxu0 0.0
    %4537 = vmatprep.subr.mxu0 0.0
    %4538 = vmatpush1.msra.mxu0 0.0
    %4539 = vmatprep.subr.mxu0 0.0
    %4540 = vmatpush1.msra.mxu0 0.0
    %4541 = vmatprep.subr.mxu0 0.0
    %4542 = vmatpush1.msra.mxu0 0.0
    %4543 = vmatprep.subr.mxu0 0.0
    %4544 = vmatpush1.msra.mxu0 0.0
    %4545 = vmatprep.subr.mxu0 0.0
    %4546 = vmatpush1.msra.mxu0 0.0
    %4547 = vmatprep.subr.mxu0 0.0
    %4548 = vmatpush1.msra.mxu0 0.0
    %4549 = vmatprep.subr.mxu0 0.0
    %4550 = vmatpush1.msra.mxu0 0.0
    %4551 = vmatprep.subr.mxu0 0.0
    %4552 = vmatpush1.msra.mxu0 0.0
    %4553 = vmatprep.subr.mxu0 0.0
    %4554 = vmatpush1.msra.mxu0 0.0
    %4555 = vmatprep.subr.mxu0 0.0
    %4556 = vmatpush1.msra.mxu0 0.0
    %4557 = vmatprep.subr.mxu0 0.0
    %4558 = vmatpush1.msra.mxu0 0.0
    %4559 = vmatprep.subr.mxu0 0.0
    %4560 = vmatpush1.msra.mxu0 0.0
    %4561 = vmatprep.subr.mxu0 0.0
    %4562 = vmatpush1.msra.mxu0 0.0
    %4563 = vmatprep.subr.mxu0 0.0
    %4564 = vmatpush1.msra.mxu0 0.0
    %4565 = vmatprep.subr.mxu0 0.0
    %4566 = vmatpush1.msra.mxu0 0.0
    %4567 = vmatprep.subr.mxu0 0.0
    %4568 = vmatpush1.msra.mxu0 0.0
    %4569 = vmatprep.subr.mxu0 0.0
    %4570 = vmatpush1.msra.mxu0 0.0
    %4571 = vmatprep.subr.mxu0 0.0
    %4572 = vmatpush1.msra.mxu0 0.0
    %4573 = vmatprep.subr.mxu0 0.0
    %4574 = vmatpush1.msra.mxu0 0.0
    %4575 = vmatprep.subr.mxu0 0.0
    %4576 = vmatpush1.msra.mxu0 0.0
    %4577 = vmatprep.subr.mxu0 0.0
    %4578 = vmatpush1.msra.mxu0 0.0
    %4579 = vmatprep.subr.mxu0 0.0
    %4580 = vmatpush1.msra.mxu0 0.0
    %4581 = vmatprep.subr.mxu0 0.0
    %4582 = vmatpush1.msra.mxu0 0.0
    %4583 = vmatprep.subr.mxu0 0.0
    %4584 = vmatpush1.msra.mxu0 0.0
    %4585 = vmatprep.subr.mxu0 0.0
    %4586 = vmatpush1.msra.mxu0 0.0
    %4587 = vmatprep.mubr.f32.mxu0 0.0
    %v4588 = vand.u32 %v4133, 4294901760
    %4589 = vmatmul.mubr.f32.gmra.mrb[0].mxu0 %v4588
    %v4590 = vpop.f32.mrb[0].mxu0
    %v4591 = vadd.f32 %v4518, %v4590
    %v4592 = vpop.f32.mrb[0].mxu0
    %4593 = vdwg.mxu0
    %v4594 = vmax.f32 %v4591, 0.0
    %vm4595 = vcmp.ne.f32.partialorder %v4591, %v4591
    %v4596 = vadd.f32 %v4591, 0.0
    %v4597 = vand.u32 2147483647, %v4591
    %v4598 = vsub.f32 0.0, %v4597
    %v4599 = vmul.f32 %v4598, 1.442695
    %v4600 = vpow.pop %v4599
    %v4601 = vadd.f32 %v4600, 1.0
    %v4602 = vlog2.pop %v4601
    %v4603 = vmul.f32 %v4602, 0.6931472
    %v4604 = vmul.f32 -0.5, %v4600
    %v4605 = vadd.f32 %v4604, 1.0
    %v4606 = vmul.f32 %v4605, %v4600
    %v4607 = vand.u32 2147483647, %v4600
    %vm4608 = vcmp.lt.f32.partialorder %v4607, 0.0004427343
    %v4609 = vsel %vm4608, %v4606, %v4603
    %v4610 = vadd.f32 %v4594, %v4609
    %v4611 = vsel %vm4595, %v4596, %v4610
    %4613 = vrot.lane.b32.xlu0 %v4591, 16
    %v4614 = vpop.permute.xlu0 %4613
    %v4616 = vadd.f32 %v4128, %v4614
    %v4617 = vxor.u32 %v4616, 2147483648
    %v4618 = vmul.f32 %v4617, 1.442695
    %v4619 = vpow.pop %v4618
    %v4620 = vadd.f32 %v4619, 1.0
    %v4621 = vrcp.pop %v4620
    %v4622 = vmul.f32 1.0, %v4621
    %4623 = vrot.lane.b32.xlu0 %v4591, 112
    %v4624 = vpop.permute.xlu0 %4623
    %v4626 = vmul.f32 %v4622, %v4624
    %4628 = vrot.lane.b32.xlu0 %v4626, 32
    %v4629 = vpop.permute.xlu0 %4628
    %v4631 = vadd.f32 %v4128, %v4629
    %v4632 = vtanh.pop %v4631
    %v4633 = vsub.f32 1.0, %v4622
    %4635 = vrot.lane.b32.xlu0 %v4632, 112
    %v4636 = vpop.permute.xlu0 %4635
    %v4638 = vmul.f32 %v4633, %v4636
    %4639 = vrot.lane.b32.xlu0 %v4131, 32
    %v4640 = vpop.permute.xlu0 %4639
    %v4642 = vmul.f32 %v4622, %v4640
    %v4643 = vadd.f32 %v4638, %v4642
    %vm4644 = vcmp.lt.f32.partialorder %v4611, 0.005
    %v4645 = vsel %vm4644, 1, 0
    %4646 = vset.pattern.permute.xlu0 48
    %4647 = vperm.xlu0 %4646, %v4645
    %v4648 = vpop.permute.xlu0 %4647
    %vm4649 = vcmp.eq.s32.totalorder %v4648, 1
    %v4650 = vsel %vm4649, %v4643, %v4640
    %v4651 = vld [vmem:[#allocation5 + $0x58] sm:$0xff]
    %v4652 = vld [vmem:[#allocation5 + $0x60] sm:$0xff]
    %v4653 = vld [vmem:[#allocation5 + $0x6c] sm:$0x1]
    %v4654 = vlaneseq
    %v4655 = vshrl.u32 %v4654, 7
    %v4656 = vsub.s32 0, %v4655
    %v4657 = vrot.slane %v4653, %v4656
    %4659 = vrot.lane.b32.xlu0 %v4650, 96
    %v4660 = vpop.permute.xlu0 %4659
    %v4661 = vsel %vm1097, %v4660, 0
    %4663 = vmatprep.subr.mxu0 0.0
    %v4664 = vand.u32 %v4651, 4294901760
    %4665 = vmatpush1.msra.mxu0 %v4664
    %4666 = vmatprep.subr.mxu0 0.0
    %v4667 = vand.u32 %v4652, 4294901760
    %4668 = vmatpush1.msra.mxu0 %v4667
    %4669 = vmatprep.subr.mxu0 0.0
    %4670 = vmatpush1.msra.mxu0 0.0
    %4671 = vmatprep.subr.mxu0 0.0
    %4672 = vmatpush1.msra.mxu0 0.0
    %4673 = vmatprep.subr.mxu0 0.0
    %4674 = vmatpush1.msra.mxu0 0.0
    %4675 = vmatprep.subr.mxu0 0.0
    %4676 = vmatpush1.msra.mxu0 0.0
    %4677 = vmatprep.subr.mxu0 0.0
    %4678 = vmatpush1.msra.mxu0 0.0
    %4679 = vmatprep.subr.mxu0 0.0
    %4680 = vmatpush1.msra.mxu0 0.0
    %4681 = vmatprep.subr.mxu0 0.0
    %4682 = vmatpush1.msra.mxu0 0.0
    %4683 = vmatprep.subr.mxu0 0.0
    %4684 = vmatpush1.msra.mxu0 0.0
    %4685 = vmatprep.subr.mxu0 0.0
    %4686 = vmatpush1.msra.mxu0 0.0
    %4687 = vmatprep.subr.mxu0 0.0
    %4688 = vmatpush1.msra.mxu0 0.0
    %4689 = vmatprep.subr.mxu0 0.0
    %4690 = vmatpush1.msra.mxu0 0.0
    %4691 = vmatprep.subr.mxu0 0.0
    %4692 = vmatpush1.msra.mxu0 0.0
    %4693 = vmatprep.subr.mxu0 0.0
    %4694 = vmatpush1.msra.mxu0 0.0
    %4695 = vmatprep.subr.mxu0 0.0
    %4696 = vmatpush1.msra.mxu0 0.0
    %4697 = vmatprep.subr.mxu0 0.0
    %4698 = vmatpush1.msra.mxu0 0.0
    %4699 = vmatprep.subr.mxu0 0.0
    %4700 = vmatpush1.msra.mxu0 0.0
    %4701 = vmatprep.subr.mxu0 0.0
    %4702 = vmatpush1.msra.mxu0 0.0
    %4703 = vmatprep.subr.mxu0 0.0
    %4704 = vmatpush1.msra.mxu0 0.0
    %4705 = vmatprep.subr.mxu0 0.0
    %4706 = vmatpush1.msra.mxu0 0.0
    %4707 = vmatprep.subr.mxu0 0.0
    %4708 = vmatpush1.msra.mxu0 0.0
    %4709 = vmatprep.subr.mxu0 0.0
    %4710 = vmatpush1.msra.mxu0 0.0
    %4711 = vmatprep.subr.mxu0 0.0
    %4712 = vmatpush1.msra.mxu0 0.0
    %4713 = vmatprep.subr.mxu0 0.0
    %4714 = vmatpush1.msra.mxu0 0.0
    %4715 = vmatprep.subr.mxu0 0.0
    %4716 = vmatpush1.msra.mxu0 0.0
    %4717 = vmatprep.subr.mxu0 0.0
    %4718 = vmatpush1.msra.mxu0 0.0
    %4719 = vmatprep.subr.mxu0 0.0
    %4720 = vmatpush1.msra.mxu0 0.0
    %4721 = vmatprep.subr.mxu0 0.0
    %4722 = vmatpush1.msra.mxu0 0.0
    %4723 = vmatprep.subr.mxu0 0.0
    %4724 = vmatpush1.msra.mxu0 0.0
    %4725 = vmatprep.subr.mxu0 0.0
    %4726 = vmatpush1.msra.mxu0 0.0
    %4727 = vmatprep.subr.mxu0 0.0
    %4728 = vmatpush1.msra.mxu0 0.0
    %4729 = vmatprep.mubr.f32.mxu0 0.0
    %v4730 = vand.u32 %v4661, 4294901760
    %v4731 = vsub.f32 %v4661, %v4730
    %v4732 = vand.u32 %v4731, 4294901760
    %v4733 = vsub.f32 %v4731, %v4732
    %v4734 = vand.u32 %v4733, 4294901760
    %4735 = vmatmul.mubr.f32.gmra.mrb[0].mxu0 %v4734
    %v4736 = vpop.f32.mrb[0].mxu0
    %v4737 = vadd.f32 %v4657, %v4736
    %v4738 = vpop.f32.mrb[0].mxu0
    %4739 = vdwg.mxu0
    %4740 = vmatprep.subr.mxu0 0.0
    %v4741 = vand.u32 %v4651, 4294901760
    %v4742 = vsub.f32 %v4651, %v4741
    %v4743 = vand.u32 %v4742, 4294901760
    %v4744 = vsub.f32 %v4742, %v4743
    %v4745 = vand.u32 %v4744, 4294901760
    %4746 = vmatpush1.msra.mxu0 %v4745
    %4747 = vmatprep.subr.mxu0 0.0
    %v4748 = vand.u32 %v4652, 4294901760
    %v4749 = vsub.f32 %v4652, %v4748
    %v4750 = vand.u32 %v4749, 4294901760
    %v4751 = vsub.f32 %v4749, %v4750
    %v4752 = vand.u32 %v4751, 4294901760
    %4753 = vmatpush1.msra.mxu0 %v4752
    %4754 = vmatprep.subr.mxu0 0.0
    %4755 = vmatpush1.msra.mxu0 0.0
    %4756 = vmatprep.subr.mxu0 0.0
    %4757 = vmatpush1.msra.mxu0 0.0
    %4758 = vmatprep.subr.mxu0 0.0
    %4759 = vmatpush1.msra.mxu0 0.0
    %4760 = vmatprep.subr.mxu0 0.0
    %4761 = vmatpush1.msra.mxu0 0.0
    %4762 = vmatprep.subr.mxu0 0.0
    %4763 = vmatpush1.msra.mxu0 0.0
    %4764 = vmatprep.subr.mxu0 0.0
    %4765 = vmatpush1.msra.mxu0 0.0
    %4766 = vmatprep.subr.mxu0 0.0
    %4767 = vmatpush1.msra.mxu0 0.0
    %4768 = vmatprep.subr.mxu0 0.0
    %4769 = vmatpush1.msra.mxu0 0.0
    %4770 = vmatprep.subr.mxu0 0.0
    %4771 = vmatpush1.msra.mxu0 0.0
    %4772 = vmatprep.subr.mxu0 0.0
    %4773 = vmatpush1.msra.mxu0 0.0
    %4774 = vmatprep.subr.mxu0 0.0
    %4775 = vmatpush1.msra.mxu0 0.0
    %4776 = vmatprep.subr.mxu0 0.0
    %4777 = vmatpush1.msra.mxu0 0.0
    %4778 = vmatprep.subr.mxu0 0.0
    %4779 = vmatpush1.msra.mxu0 0.0
    %4780 = vmatprep.subr.mxu0 0.0
    %4781 = vmatpush1.msra.mxu0 0.0
    %4782 = vmatprep.subr.mxu0 0.0
    %4783 = vmatpush1.msra.mxu0 0.0
    %4784 = vmatprep.subr.mxu0 0.0
    %4785 = vmatpush1.msra.mxu0 0.0
    %4786 = vmatprep.subr.mxu0 0.0
    %4787 = vmatpush1.msra.mxu0 0.0
    %4788 = vmatprep.subr.mxu0 0.0
    %4789 = vmatpush1.msra.mxu0 0.0
    %4790 = vmatprep.subr.mxu0 0.0
    %4791 = vmatpush1.msra.mxu0 0.0
    %4792 = vmatprep.subr.mxu0 0.0
    %4793 = vmatpush1.msra.mxu0 0.0
    %4794 = vmatprep.subr.mxu0 0.0
    %4795 = vmatpush1.msra.mxu0 0.0
    %4796 = vmatprep.subr.mxu0 0.0
    %4797 = vmatpush1.msra.mxu0 0.0
    %4798 = vmatprep.subr.mxu0 0.0
    %4799 = vmatpush1.msra.mxu0 0.0
    %4800 = vmatprep.subr.mxu0 0.0
    %4801 = vmatpush1.msra.mxu0 0.0
    %4802 = vmatprep.subr.mxu0 0.0
    %4803 = vmatpush1.msra.mxu0 0.0
    %4804 = vmatprep.subr.mxu0 0.0
    %4805 = vmatpush1.msra.mxu0 0.0
    %4806 = vmatprep.subr.mxu0 0.0
    %4807 = vmatpush1.msra.mxu0 0.0
    %4808 = vmatprep.subr.mxu0 0.0
    %4809 = vmatpush1.msra.mxu0 0.0
    %4810 = vmatprep.subr.mxu0 0.0
    %4811 = vmatpush1.msra.mxu0 0.0
    %4812 = vmatprep.subr.mxu0 0.0
    %4813 = vmatpush1.msra.mxu0 0.0
    %4814 = vmatprep.mubr.f32.mxu0 0.0
    %v4815 = vand.u32 %v4661, 4294901760
    %4816 = vmatmul.mubr.f32.gmra.mrb[0].mxu0 %v4815
    %v4817 = vpop.f32.mrb[0].mxu0
    %v4818 = vadd.f32 %v4737, %v4817
    %v4819 = vpop.f32.mrb[0].mxu0
    %4820 = vdwg.mxu0
    %4821 = vmatprep.subr.mxu0 0.0
    %v4822 = vand.u32 %v4651, 4294901760
    %v4823 = vsub.f32 %v4651, %v4822
    %4824 = vmatpush1.msra.mxu0 %v4823
    %4825 = vmatprep.subr.mxu0 0.0
    %v4826 = vand.u32 %v4652, 4294901760
    %v4827 = vsub.f32 %v4652, %v4826
    %4828 = vmatpush1.msra.mxu0 %v4827
    %4829 = vmatprep.subr.mxu0 0.0
    %4830 = vmatpush1.msra.mxu0 0.0
    %4831 = vmatprep.subr.mxu0 0.0
    %4832 = vmatpush1.msra.mxu0 0.0
    %4833 = vmatprep.subr.mxu0 0.0
    %4834 = vmatpush1.msra.mxu0 0.0
    %4835 = vmatprep.subr.mxu0 0.0
    %4836 = vmatpush1.msra.mxu0 0.0
    %4837 = vmatprep.subr.mxu0 0.0
    %4838 = vmatpush1.msra.mxu0 0.0
    %4839 = vmatprep.subr.mxu0 0.0
    %4840 = vmatpush1.msra.mxu0 0.0
    %4841 = vmatprep.subr.mxu0 0.0
    %4842 = vmatpush1.msra.mxu0 0.0
    %4843 = vmatprep.subr.mxu0 0.0
    %4844 = vmatpush1.msra.mxu0 0.0
    %4845 = vmatprep.subr.mxu0 0.0
    %4846 = vmatpush1.msra.mxu0 0.0
    %4847 = vmatprep.subr.mxu0 0.0
    %4848 = vmatpush1.msra.mxu0 0.0
    %4849 = vmatprep.subr.mxu0 0.0
    %4850 = vmatpush1.msra.mxu0 0.0
    %4851 = vmatprep.subr.mxu0 0.0
    %4852 = vmatpush1.msra.mxu0 0.0
    %4853 = vmatprep.subr.mxu0 0.0
    %4854 = vmatpush1.msra.mxu0 0.0
    %4855 = vmatprep.subr.mxu0 0.0
    %4856 = vmatpush1.msra.mxu0 0.0
    %4857 = vmatprep.subr.mxu0 0.0
    %4858 = vmatpush1.msra.mxu0 0.0
    %4859 = vmatprep.subr.mxu0 0.0
    %4860 = vmatpush1.msra.mxu0 0.0
    %4861 = vmatprep.subr.mxu0 0.0
    %4862 = vmatpush1.msra.mxu0 0.0
    %4863 = vmatprep.subr.mxu0 0.0
    %4864 = vmatpush1.msra.mxu0 0.0
    %4865 = vmatprep.subr.mxu0 0.0
    %4866 = vmatpush1.msra.mxu0 0.0
    %4867 = vmatprep.subr.mxu0 0.0
    %4868 = vmatpush1.msra.mxu0 0.0
    %4869 = vmatprep.subr.mxu0 0.0
    %4870 = vmatpush1.msra.mxu0 0.0
    %4871 = vmatprep.subr.mxu0 0.0
    %4872 = vmatpush1.msra.mxu0 0.0
    %4873 = vmatprep.subr.mxu0 0.0
    %4874 = vmatpush1.msra.mxu0 0.0
    %4875 = vmatprep.subr.mxu0 0.0
    %4876 = vmatpush1.msra.mxu0 0.0
    %4877 = vmatprep.subr.mxu0 0.0
    %4878 = vmatpush1.msra.mxu0 0.0
    %4879 = vmatprep.subr.mxu0 0.0
    %4880 = vmatpush1.msra.mxu0 0.0
    %4881 = vmatprep.subr.mxu0 0.0
    %4882 = vmatpush1.msra.mxu0 0.0
    %4883 = vmatprep.subr.mxu0 0.0
    %4884 = vmatpush1.msra.mxu0 0.0
    %4885 = vmatprep.subr.mxu0 0.0
    %4886 = vmatpush1.msra.mxu0 0.0
    %4887 = vmatprep.subr.mxu0 0.0
    %4888 = vmatpush1.msra.mxu0 0.0
    %4889 = vmatprep.mubr.f32.mxu0 0.0
    %v4890 = vand.u32 %v4661, 4294901760
    %v4891 = vsub.f32 %v4661, %v4890
    %4892 = vmatmul.mubr.f32.gmra.mrb[0].mxu0 %v4891
    %v4893 = vpop.f32.mrb[0].mxu0
    %v4894 = vadd.f32 %v4818, %v4893
    %v4895 = vpop.f32.mrb[0].mxu0
    %4896 = vdwg.mxu0
    %4897 = vmatprep.subr.mxu0 0.0
    %v4898 = vand.u32 %v4651, 4294901760
    %4899 = vmatpush1.msra.mxu0 %v4898
    %4900 = vmatprep.subr.mxu0 0.0
    %v4901 = vand.u32 %v4652, 4294901760
    %4902 = vmatpush1.msra.mxu0 %v4901
    %4903 = vmatprep.subr.mxu0 0.0
    %4904 = vmatpush1.msra.mxu0 0.0
    %4905 = vmatprep.subr.mxu0 0.0
    %4906 = vmatpush1.msra.mxu0 0.0
    %4907 = vmatprep.subr.mxu0 0.0
    %4908 = vmatpush1.msra.mxu0 0.0
    %4909 = vmatprep.subr.mxu0 0.0
    %4910 = vmatpush1.msra.mxu0 0.0
    %4911 = vmatprep.subr.mxu0 0.0
    %4912 = vmatpush1.msra.mxu0 0.0
    %4913 = vmatprep.subr.mxu0 0.0
    %4914 = vmatpush1.msra.mxu0 0.0
    %4915 = vmatprep.subr.mxu0 0.0
    %4916 = vmatpush1.msra.mxu0 0.0
    %4917 = vmatprep.subr.mxu0 0.0
    %4918 = vmatpush1.msra.mxu0 0.0
    %4919 = vmatprep.subr.mxu0 0.0
    %4920 = vmatpush1.msra.mxu0 0.0
    %4921 = vmatprep.subr.mxu0 0.0
    %4922 = vmatpush1.msra.mxu0 0.0
    %4923 = vmatprep.subr.mxu0 0.0
    %4924 = vmatpush1.msra.mxu0 0.0
    %4925 = vmatprep.subr.mxu0 0.0
    %4926 = vmatpush1.msra.mxu0 0.0
    %4927 = vmatprep.subr.mxu0 0.0
    %4928 = vmatpush1.msra.mxu0 0.0
    %4929 = vmatprep.subr.mxu0 0.0
    %4930 = vmatpush1.msra.mxu0 0.0
    %4931 = vmatprep.subr.mxu0 0.0
    %4932 = vmatpush1.msra.mxu0 0.0
    %4933 = vmatprep.subr.mxu0 0.0
    %4934 = vmatpush1.msra.mxu0 0.0
    %4935 = vmatprep.subr.mxu0 0.0
    %4936 = vmatpush1.msra.mxu0 0.0
    %4937 = vmatprep.subr.mxu0 0.0
    %4938 = vmatpush1.msra.mxu0 0.0
    %4939 = vmatprep.subr.mxu0 0.0
    %4940 = vmatpush1.msra.mxu0 0.0
    %4941 = vmatprep.subr.mxu0 0.0
    %4942 = vmatpush1.msra.mxu0 0.0
    %4943 = vmatprep.subr.mxu0 0.0
    %4944 = vmatpush1.msra.mxu0 0.0
    %4945 = vmatprep.subr.mxu0 0.0
    %4946 = vmatpush1.msra.mxu0 0.0
    %4947 = vmatprep.subr.mxu0 0.0
    %4948 = vmatpush1.msra.mxu0 0.0
    %4949 = vmatprep.subr.mxu0 0.0
    %4950 = vmatpush1.msra.mxu0 0.0
    %4951 = vmatprep.subr.mxu0 0.0
    %4952 = vmatpush1.msra.mxu0 0.0
    %4953 = vmatprep.subr.mxu0 0.0
    %4954 = vmatpush1.msra.mxu0 0.0
    %4955 = vmatprep.subr.mxu0 0.0
    %4956 = vmatpush1.msra.mxu0 0.0
    %4957 = vmatprep.subr.mxu0 0.0
    %4958 = vmatpush1.msra.mxu0 0.0
    %4959 = vmatprep.subr.mxu0 0.0
    %4960 = vmatpush1.msra.mxu0 0.0
    %4961 = vmatprep.subr.mxu0 0.0
    %4962 = vmatpush1.msra.mxu0 0.0
    %4963 = vmatprep.mubr.f32.mxu0 0.0
    %v4964 = vand.u32 %v4661, 4294901760
    %v4965 = vsub.f32 %v4661, %v4964
    %v4966 = vand.u32 %v4965, 4294901760
    %4967 = vmatmul.mubr.f32.gmra.mrb[0].mxu0 %v4966
    %v4968 = vpop.f32.mrb[0].mxu0
    %v4969 = vadd.f32 %v4894, %v4968
    %v4970 = vpop.f32.mrb[0].mxu0
    %4971 = vdwg.mxu0
    %4972 = vmatprep.subr.mxu0 0.0
    %v4973 = vand.u32 %v4651, 4294901760
    %v4974 = vsub.f32 %v4651, %v4973
    %v4975 = vand.u32 %v4974, 4294901760
    %4976 = vmatpush1.msra.mxu0 %v4975
    %4977 = vmatprep.subr.mxu0 0.0
    %v4978 = vand.u32 %v4652, 4294901760
    %v4979 = vsub.f32 %v4652, %v4978
    %v4980 = vand.u32 %v4979, 4294901760
    %4981 = vmatpush1.msra.mxu0 %v4980
    %4982 = vmatprep.subr.mxu0 0.0
    %4983 = vmatpush1.msra.mxu0 0.0
    %4984 = vmatprep.subr.mxu0 0.0
    %4985 = vmatpush1.msra.mxu0 0.0
    %4986 = vmatprep.subr.mxu0 0.0
    %4987 = vmatpush1.msra.mxu0 0.0
    %4988 = vmatprep.subr.mxu0 0.0
    %4989 = vmatpush1.msra.mxu0 0.0
    %4990 = vmatprep.subr.mxu0 0.0
    %4991 = vmatpush1.msra.mxu0 0.0
    %4992 = vmatprep.subr.mxu0 0.0
    %4993 = vmatpush1.msra.mxu0 0.0
    %4994 = vmatprep.subr.mxu0 0.0
    %4995 = vmatpush1.msra.mxu0 0.0
    %4996 = vmatprep.subr.mxu0 0.0
    %4997 = vmatpush1.msra.mxu0 0.0
    %4998 = vmatprep.subr.mxu0 0.0
    %4999 = vmatpush1.msra.mxu0 0.0
    %5000 = vmatprep.subr.mxu0 0.0
    %5001 = vmatpush1.msra.mxu0 0.0
    %5002 = vmatprep.subr.mxu0 0.0
    %5003 = vmatpush1.msra.mxu0 0.0
    %5004 = vmatprep.subr.mxu0 0.0
    %5005 = vmatpush1.msra.mxu0 0.0
    %5006 = vmatprep.subr.mxu0 0.0
    %5007 = vmatpush1.msra.mxu0 0.0
    %5008 = vmatprep.subr.mxu0 0.0
    %5009 = vmatpush1.msra.mxu0 0.0
    %5010 = vmatprep.subr.mxu0 0.0
    %5011 = vmatpush1.msra.mxu0 0.0
    %5012 = vmatprep.subr.mxu0 0.0
    %5013 = vmatpush1.msra.mxu0 0.0
    %5014 = vmatprep.subr.mxu0 0.0
    %5015 = vmatpush1.msra.mxu0 0.0
    %5016 = vmatprep.subr.mxu0 0.0
    %5017 = vmatpush1.msra.mxu0 0.0
    %5018 = vmatprep.subr.mxu0 0.0
    %5019 = vmatpush1.msra.mxu0 0.0
    %5020 = vmatprep.subr.mxu0 0.0
    %5021 = vmatpush1.msra.mxu0 0.0
    %5022 = vmatprep.subr.mxu0 0.0
    %5023 = vmatpush1.msra.mxu0 0.0
    %5024 = vmatprep.subr.mxu0 0.0
    %5025 = vmatpush1.msra.mxu0 0.0
    %5026 = vmatprep.subr.mxu0 0.0
    %5027 = vmatpush1.msra.mxu0 0.0
    %5028 = vmatprep.subr.mxu0 0.0
    %5029 = vmatpush1.msra.mxu0 0.0
    %5030 = vmatprep.subr.mxu0 0.0
    %5031 = vmatpush1.msra.mxu0 0.0
    %5032 = vmatprep.subr.mxu0 0.0
    %5033 = vmatpush1.msra.mxu0 0.0
    %5034 = vmatprep.subr.mxu0 0.0
    %5035 = vmatpush1.msra.mxu0 0.0
    %5036 = vmatprep.subr.mxu0 0.0
    %5037 = vmatpush1.msra.mxu0 0.0
    %5038 = vmatprep.subr.mxu0 0.0
    %5039 = vmatpush1.msra.mxu0 0.0
    %5040 = vmatprep.subr.mxu0 0.0
    %5041 = vmatpush1.msra.mxu0 0.0
    %5042 = vmatprep.mubr.f32.mxu0 0.0
    %v5043 = vand.u32 %v4661, 4294901760
    %5044 = vmatmul.mubr.f32.gmra.mrb[0].mxu0 %v5043
    %v5045 = vpop.f32.mrb[0].mxu0
    %v5046 = vadd.f32 %v4969, %v5045
    %v5047 = vpop.f32.mrb[0].mxu0
    %5048 = vdwg.mxu0
    %5049 = vmatprep.subr.mxu0 0.0
    %v5050 = vand.u32 %v4651, 4294901760
    %5051 = vmatpush1.msra.mxu0 %v5050
    %5052 = vmatprep.subr.mxu0 0.0
    %v5053 = vand.u32 %v4652, 4294901760
    %5054 = vmatpush1.msra.mxu0 %v5053
    %5055 = vmatprep.subr.mxu0 0.0
    %5056 = vmatpush1.msra.mxu0 0.0
    %5057 = vmatprep.subr.mxu0 0.0
    %5058 = vmatpush1.msra.mxu0 0.0
    %5059 = vmatprep.subr.mxu0 0.0
    %5060 = vmatpush1.msra.mxu0 0.0
    %5061 = vmatprep.subr.mxu0 0.0
    %5062 = vmatpush1.msra.mxu0 0.0
    %5063 = vmatprep.subr.mxu0 0.0
    %5064 = vmatpush1.msra.mxu0 0.0
    %5065 = vmatprep.subr.mxu0 0.0
    %5066 = vmatpush1.msra.mxu0 0.0
    %5067 = vmatprep.subr.mxu0 0.0
    %5068 = vmatpush1.msra.mxu0 0.0
    %5069 = vmatprep.subr.mxu0 0.0
    %5070 = vmatpush1.msra.mxu0 0.0
    %5071 = vmatprep.subr.mxu0 0.0
    %5072 = vmatpush1.msra.mxu0 0.0
    %5073 = vmatprep.subr.mxu0 0.0
    %5074 = vmatpush1.msra.mxu0 0.0
    %5075 = vmatprep.subr.mxu0 0.0
    %5076 = vmatpush1.msra.mxu0 0.0
    %5077 = vmatprep.subr.mxu0 0.0
    %5078 = vmatpush1.msra.mxu0 0.0
    %5079 = vmatprep.subr.mxu0 0.0
    %5080 = vmatpush1.msra.mxu0 0.0
    %5081 = vmatprep.subr.mxu0 0.0
    %5082 = vmatpush1.msra.mxu0 0.0
    %5083 = vmatprep.subr.mxu0 0.0
    %5084 = vmatpush1.msra.mxu0 0.0
    %5085 = vmatprep.subr.mxu0 0.0
    %5086 = vmatpush1.msra.mxu0 0.0
    %5087 = vmatprep.subr.mxu0 0.0
    %5088 = vmatpush1.msra.mxu0 0.0
    %5089 = vmatprep.subr.mxu0 0.0
    %5090 = vmatpush1.msra.mxu0 0.0
    %5091 = vmatprep.subr.mxu0 0.0
    %5092 = vmatpush1.msra.mxu0 0.0
    %5093 = vmatprep.subr.mxu0 0.0
    %5094 = vmatpush1.msra.mxu0 0.0
    %5095 = vmatprep.subr.mxu0 0.0
    %5096 = vmatpush1.msra.mxu0 0.0
    %5097 = vmatprep.subr.mxu0 0.0
    %5098 = vmatpush1.msra.mxu0 0.0
    %5099 = vmatprep.subr.mxu0 0.0
    %5100 = vmatpush1.msra.mxu0 0.0
    %5101 = vmatprep.subr.mxu0 0.0
    %5102 = vmatpush1.msra.mxu0 0.0
    %5103 = vmatprep.subr.mxu0 0.0
    %5104 = vmatpush1.msra.mxu0 0.0
    %5105 = vmatprep.subr.mxu0 0.0
    %5106 = vmatpush1.msra.mxu0 0.0
    %5107 = vmatprep.subr.mxu0 0.0
    %5108 = vmatpush1.msra.mxu0 0.0
    %5109 = vmatprep.subr.mxu0 0.0
    %5110 = vmatpush1.msra.mxu0 0.0
    %5111 = vmatprep.subr.mxu0 0.0
    %5112 = vmatpush1.msra.mxu0 0.0
    %5113 = vmatprep.subr.mxu0 0.0
    %5114 = vmatpush1.msra.mxu0 0.0
    %5115 = vmatprep.mubr.f32.mxu0 0.0
    %v5116 = vand.u32 %v4661, 4294901760
    %5117 = vmatmul.mubr.f32.gmra.mrb[0].mxu0 %v5116
    %v5118 = vpop.f32.mrb[0].mxu0
    %v5119 = vadd.f32 %v5046, %v5118
    %v5120 = vpop.f32.mrb[0].mxu0
    %5121 = vdwg.mxu0
    %v5122 = vlaneseq
    %v5123 = vand.u32 %v5122, 127
    %vm5124 = vcmp.eq.s32.totalorder %v5123, 2
    %v5125 = vsel %vm5124, 1, 0
    %vm5126 = vcmp.eq.s32.totalorder %v5125, 1
    %5128 = vset.pattern.permute.xlu0 48
    %5129 = vperm.xlu0 %5128, %v4611
    %v5130 = vpop.permute.xlu0 %5129
    %v5132 = vsel %vm5126, %v5130, 0.0
    %v5133 = vadd.f32 %v5119, %v5132
    %5134 = vst [vmem:[#allocation7] sm:$0xff] %v5133
    // Predicated region
    $region18: #{tpu_custom_call.1} parent=1 // pred_check
      _
    $region19: #{tpu_custom_call.1} parent=1 // pred_check_branch
      %5136 = sbr.rel (0) target = $region21
    $region20: #{tpu_custom_call.1} parent=1 // pred_region
      %s5138 = ssub.s32 128, 128
      %5139 = vsyncadd [#allocation4], %s5138
      %s5141 = sshll.u32 [#allocation7], 4
      %s5142 = int_to_ptr.vmem [resolvable:$true] %s5141
      %5144 = dma.vmem_to_hbm [thread:$0]  %s5142, 128, %s2, [#allocation4]
    $region21: #{tpu_custom_call.1} parent=1 // pred_fallthru
      _
    // Predicated region
    $region22: #{tpu_custom_call.1} parent=1 // pred_check
      _
    $region23: #{tpu_custom_call.1} parent=1 // pred_check_branch
      %5146 = sbr.rel (0) target = $region25
    $region24: #{tpu_custom_call.1} parent=1 // pred_region
      %5147 = dma.done [#allocation4], 128
    $region25: #{tpu_custom_call.1} parent=1 // pred_fallthru
      _
    %5148 = vsyncpa [#allocation3], 1
    %5149 = vsyncpa [#allocation6], 1
    %5150 = vsyncpa [#allocation4], 1

</llo_original>
